<compile_context>
chip_gen: v7x
topology: tpu7x:2x2x1
jax: 0.10.0
libtpu: 0.0.40
codegen_flags: <defaults>
</compile_context>

<pallas_src>
import jax
import jax.numpy as jnp
import numpy as np
from jax import lax
from jax.experimental import pallas as pl
from jax.experimental.pallas import tpu as pltpu

# ---- model dims (num_labels == 4 branch of Lane_classifier) -------------------------
C_IN   = 2048
C_MID  = 32
C_CLS  = 5
H, W   = 8, 16                 # spatial size implied by Linear(160, .): 5*(H//2)*(W//2) == 160
HWO    = H * W                 # 128  -> lane axis inside the kernel
PAD    = 4
DIL    = 4
KH = KW = 3
NTAP   = KH * KW               # 9
FEAT   = C_CLS * (H // 2) * (W // 2)   # 160
HID    = 128
NUM_LABELS = 4
OUT_D  = NUM_LABELS * 5        # 20
BN_EPS = 1e-3


# ---------------------- static conv-tap geometry (rolls + masks) ---------------------
def _conv_tap_geometry():
    """For conv tap t with offsets (dh, dw) = ((kh-1)*DIL, (kw-1)*DIL):
       out[:, m] = p_t[:, m + dh*W + dw]  if (h+dh, w+dw) is inside the image else 0.
    Realized as a lane roll by (-(dh*W+dw)) % HWO followed by a 0/1 validity mask
    (the mask also kills any lanes that wrapped across row / image boundaries)."""
    masks = np.zeros((NTAP, HWO), np.float32)
    shifts = []
    for t in range(NTAP):
        kh, kw = divmod(t, KW)
        dh, dw = (kh - 1) * DIL, (kw - 1) * DIL
        for m in range(HWO):
            h, w = divmod(m, W)
            if 0 <= h + dh < H and 0 <= w + dw < W:
                masks[t, m] = 1.0
        shifts.append((-(dh * W + dw)) % HWO)     # non-negative, circularly equivalent
    return masks, tuple(shifts)


_TAP_MASKS_NP, _TAP_SHIFT = _conv_tap_geometry()
_CENTER_TAP = NTAP // 2                            # dh = dw = 0: no roll, no mask needed


# ------------------------------- fused kernel ----------------------------------------
def _lane_classifier_kernel(x_ref, w1_ref, mask_ref, bnsc_ref, bnsh_ref, w2_ref, b2_ref,
                            wcat_ref, b11_ref, w22_ref, b22_ref, o_ref):
    """B batch elements per grid step.

    x_ref   : (B, C_IN, HWO) f32/bf16  channels on sublanes, flat spatial on lanes
    w1_ref  : (NTAP*C_MID, C_IN) bf16  rows ordered (tap, cout)
    mask_ref: (NTAP, C_MID, HWO) f32   per-tap 0/1 conv-padding validity masks
    wcat_ref: (HWO, C_CLS*HID) f32     Linear(160,128) scattered to pool anchors,
                                       class blocks concatenated on the lane axis
    o_ref   : (B, 1, OUT_D) f32
    """
    nb = x_ref.shape[0]
    for b in range(nb):                       # static unrolled loop over the per-step batch
        # --- dilated 3x3 conv 2048->32: all 9 taps in ONE bf16 matmul (f32 accumulate) ---
        xb = x_ref[b].astype(jnp.bfloat16)                                    # (2048, 128)
        p_all = jnp.dot(w1_ref[...], xb, preferred_element_type=jnp.float32)  # (288, 128)

        # spatial shift + zero-pad per tap: XLU lane roll + VPU mask/add (no MXU work)
        acc = p_all[_CENTER_TAP * C_MID:(_CENTER_TAP + 1) * C_MID, :]         # (32, 128)
        for t in range(NTAP):
            if t == _CENTER_TAP:
                continue
            pt = pltpu.roll(p_all[t * C_MID:(t + 1) * C_MID, :],
                            shift=_TAP_SHIFT[t], axis=1)
            acc = acc + pt * mask_ref[t]

        # --- BatchNorm (inference, folded) + ReLU ------------------------------------
        # TODO(synk): Dropout2d(0.1) is identity in eval mode; stochastic channel drop not implemented.
        y = jnp.maximum(acc * bnsc_ref[...] + bnsh_ref[...], 0.0)             # (32, 128)

        # --- 1x1 conv 32->5 (bias) + softmax over the 5 classes (sublane axis) -------
        z = jnp.dot(w2_ref[...], y, preferred_element_type=jnp.float32) + b2_ref[...]
        z = z - jnp.max(z, axis=0, keepdims=True)
        e = jnp.exp(z)
        p = e * pl.reciprocal(jnp.sum(e, axis=0, keepdims=True), approx=True)  # (5, 128)

        # --- 2x2 max-pool via lane rolls: window max lands on the even (h,w) anchors --
        a = jnp.maximum(p, pltpu.roll(p, shift=HWO - 1, axis=1))   # max(p[m], p[m+1])
        q = jnp.maximum(a, pltpu.roll(a, shift=HWO - W, axis=1))   # + rows m+W, m+W+1

        # --- Linear(160,128): ONE stacked dot, sum the 5 diagonal 128-lane blocks ----
        m_all = jnp.dot(q, wcat_ref[...], preferred_element_type=jnp.float32)  # (5, 640)
        h = b11_ref[...]                                                       # (1, 128)
        for c in range(C_CLS):
            h = h + m_all[c:c + 1, c * HID:(c + 1) * HID]
        h = jnp.maximum(h, 0.0)

        # --- Linear(128,20) ------------------------------------------------------------
        o = jnp.dot(h, w22_ref[...], preferred_element_type=jnp.float32) + b22_ref[...]
        o_ref[b] = o                                                           # (1, 20)


# ------------------------------- wrapper ---------------------------------------------
def lane_classifier_forward(x_nchw, params):
    N = x_nchw.shape[0]
    # NCHW -> (N, C, H*W) is a free, contiguous reshape (no transpose, no pad).
    # bf16 activations are accepted as-is (halves the dominant HBM read on v5e).
    x = x_nchw.reshape(N, C_IN, HWO)
    if x.dtype != jnp.bfloat16:
        x = x.astype(jnp.float32)

    # Batch elements per grid step: keep grid >= 2 for small N (both v7x TCs busy),
    # batch 2 per step for larger even N (bigger DMAs, amortized per-step overhead).
    B = 2 if (N > 2 and N % 2 == 0) else 1

    # ---- parameter plumbing (pure layout work, all tiny) -----------------------------
    w1 = jnp.transpose(params["conv1_w"], (2, 3, 0, 1)).reshape(NTAP * C_MID, C_IN)
    w1 = w1.astype(jnp.bfloat16)                                           # (288, 2048)
    mask = jnp.asarray(np.ascontiguousarray(
        np.broadcast_to(_TAP_MASKS_NP[:, None, :], (NTAP, C_MID, HWO))))   # (9, 32, 128)

    scale = params["bn_gamma"] / jnp.sqrt(params["bn_var"] + BN_EPS)
    shift = params["bn_beta"] - params["bn_mean"] * scale
    bnsc = scale.reshape(C_MID, 1)
    bnsh = shift.reshape(C_MID, 1)
    w2 = params["conv2_w"][:, :, 0, 0]                                     # (5, 32)
    b2 = params["conv2_b"].reshape(C_CLS, 1)

    # Scatter Linear(160,128) rows to the pool-anchor lanes m = 32*ho + 2*wo (NCHW feat
    # order c*32 + ho*8 + wo) and concatenate the 5 class blocks along the lane axis so
    # the kernel can do ONE (5,128)x(128,640) dot.
    m_idx = (2 * W * np.arange(H // 2)[:, None] + 2 * np.arange(W // 2)[None, :]).reshape(-1)
    w11s = jnp.zeros((C_CLS, HWO, HID), jnp.float32).at[:, m_idx, :].set(
        params["lin1_w"].reshape(C_CLS, (H // 2) * (W // 2), HID))
    wcat = jnp.transpose(w11s, (1, 0, 2)).reshape(HWO, C_CLS * HID)        # (128, 640)
    b11 = params["lin1_b"].reshape(1, HID)
    w22 = params["lin2_w"]
    b22 = params["lin2_b"].reshape(1, OUT_D)

    fused = pl.pallas_call(
        _lane_classifier_kernel,
        out_shape=jax.ShapeDtypeStruct((N, 1, OUT_D), jnp.float32),
        grid_spec=pltpu.PrefetchScalarGridSpec(
            num_scalar_prefetch=0,
            grid=(N // B,),
            in_specs=[
                pl.BlockSpec((B, C_IN, HWO), lambda n: (n, 0, 0)),
                pl.BlockSpec((NTAP * C_MID, C_IN), lambda n: (0, 0)),
                pl.BlockSpec((NTAP, C_MID, HWO), lambda n: (0, 0, 0)),
                pl.BlockSpec((C_MID, 1), lambda n: (0, 0)),
                pl.BlockSpec((C_MID, 1), lambda n: (0, 0)),
                pl.BlockSpec((C_CLS, C_MID), lambda n: (0, 0)),
                pl.BlockSpec((C_CLS, 1), lambda n: (0, 0)),
                pl.BlockSpec((HWO, C_CLS * HID), lambda n: (0, 0)),
                pl.BlockSpec((1, HID), lambda n: (0, 0)),
                pl.BlockSpec((HID, OUT_D), lambda n: (0, 0)),
                pl.BlockSpec((1, OUT_D), lambda n: (0, 0)),
            ],
            out_specs=pl.BlockSpec((B, 1, OUT_D), lambda n: (n, 0, 0)),
        ),
        compiler_params=pltpu.CompilerParams(
            dimension_semantics=("parallel",),          # multi-step grids keep both v7x TCs busy
            vmem_limit_bytes=32 * 1024 * 1024,          # footprint ~6-7 MiB; 64 MiB/TC on v7x
        ),
    )
    out = fused(x, w1, mask, bnsc, bnsh, w2, b2, wcat, b11, w22, b22)      # (N, 1, 20)
    return out.reshape(N, C_CLS, NUM_LABELS)                               # output.view(N, 5, 4)


# ------------------------- deterministic parameter init ------------------------------
def init_params(key):
    ks = jax.random.split(key, 10)
    p = {}
    p["conv1_w"] = jax.random.normal(ks[0], (C_MID, C_IN, KH, KW), jnp.float32) / np.sqrt(C_IN * KH * KW)
    p["bn_gamma"] = 1.0 + 0.1 * jax.random.normal(ks[1], (C_MID,), jnp.float32)
    p["bn_beta"]  = 0.1 * jax.random.normal(ks[2], (C_MID,), jnp.float32)
    p["bn_mean"]  = 0.1 * jax.random.normal(ks[3], (C_MID,), jnp.float32)
    p["bn_var"]   = 1.0 + 0.1 * jnp.abs(jax.random.normal(ks[4], (C_MID,), jnp.float32))
    p["conv2_w"]  = jax.random.normal(ks[5], (C_CLS, C_MID, 1, 1), jnp.float32) / np.sqrt(C_MID)
    p["conv2_b"]  = 0.1 * jax.random.normal(ks[6], (C_CLS,), jnp.float32)
    p["lin1_w"]   = jax.random.normal(ks[7], (FEAT, HID), jnp.float32) / np.sqrt(FEAT)
    p["lin1_b"]   = 0.1 * jax.random.normal(ks[8], (HID,), jnp.float32)
    p["lin2_w"]   = jax.random.normal(ks[9], (HID, OUT_D), jnp.float32) / np.sqrt(HID)
    p["lin2_b"]   = jnp.zeros((OUT_D,), jnp.float32)
    return p


# ----------------------------- pure-JAX reference ------------------------------------
def reference_forward(x_nchw, params):
    N = x_nchw.shape[0]
    x = jnp.transpose(x_nchw, (0, 2, 3, 1))                              # NHWC
    w_hwio = jnp.transpose(params["conv1_w"], (2, 3, 1, 0))              # (3,3,2048,32)
    y = lax.conv_general_dilated(
        x, w_hwio, window_strides=(1, 1),
        padding=((PAD, PAD), (PAD, PAD)), rhs_dilation=(DIL, DIL),
        dimension_numbers=("NHWC", "HWIO", "NHWC"),
        precision=lax.Precision.HIGHEST)
    y = (y - params["bn_mean"]) * params["bn_gamma"] / jnp.sqrt(params["bn_var"] + BN_EPS) + params["bn_beta"]
    y = jnp.maximum(y, 0.0)
    z = jnp.einsum("nhwc,co->nhwo", y, params["conv2_w"][:, :, 0, 0].T,
                   precision=lax.Precision.HIGHEST) + params["conv2_b"]
    p = jax.nn.softmax(z, axis=-1)
    p = p.reshape(N, H // 2, 2, W // 2, 2, C_CLS).max(axis=(2, 4))       # (n, ho, wo, c)
    feat = jnp.transpose(p, (0, 3, 1, 2)).reshape(N, FEAT)               # NCHW flatten order
    h = jnp.maximum(feat @ params["lin1_w"] + params["lin1_b"], 0.0)
    o = h @ params["lin2_w"] + params["lin2_b"]
    return o.reshape(N, C_CLS, NUM_LABELS)


if __name__ == "__main__":
    key = jax.random.PRNGKey(0)
    kx, kp = jax.random.split(key)
    N = 2
    x = jax.random.normal(kx, (N, C_IN, H, W), jnp.float32)              # NCHW, as the PyTorch module expects
    params = init_params(kp)

    out = jax.block_until_ready(jax.jit(lane_classifier_forward)(x, params))
    ref = jax.block_until_ready(reference_forward(x, params))

    assert out.shape == (N, C_CLS, NUM_LABELS)
    # Tolerance 1e-2: the 2048-deep conv uses bf16 operands (f32 accumulation) and the
    # softmax uses the approx EUP reciprocal; the f32 reference is exact.
    np.testing.assert_allclose(np.asarray(out), np.asarray(ref), rtol=1e-2, atol=1e-2)
    print("KERNEL_OK")
</pallas_src>

<mosaic_0001>
module attributes {stable_mosaic.version = 11 : i64} {
  func.func @_lane_classifier_kernel(%arg0: i32, %arg1: memref<1x2048x128xf32, #tpu.memory_space<vmem>>, %arg2: memref<288x2048xbf16, #tpu.memory_space<vmem>>, %arg3: memref<9x32x128xf32, #tpu.memory_space<vmem>>, %arg4: memref<32x1xf32, #tpu.memory_space<vmem>>, %arg5: memref<32x1xf32, #tpu.memory_space<vmem>>, %arg6: memref<5x32xf32, #tpu.memory_space<vmem>>, %arg7: memref<5x1xf32, #tpu.memory_space<vmem>>, %arg8: memref<128x640xf32, #tpu.memory_space<vmem>>, %arg9: memref<1x128xf32, #tpu.memory_space<vmem>>, %arg10: memref<128x20xf32, #tpu.memory_space<vmem>>, %arg11: memref<1x20xf32, #tpu.memory_space<vmem>>, %arg12: memref<1x1x20xf32, #tpu.memory_space<vmem>>) attributes {dimension_semantics = [#tpu.dimension_semantics<parallel>], iteration_bounds = array<i64: 2>, scalar_prefetch = 0 : i64, scratch_operands = 0 : i64, tpu.core_type = #tpu.core_type<tc>, window_params = [{transform_indices = @transform_0, window_bounds = array<i64: 1, 2048, 128>}, {pipeline_mode = #tpu.pipeline_mode<synchronous>, transform_indices = @transform_1, window_bounds = array<i64: 288, 2048>}, {pipeline_mode = #tpu.pipeline_mode<synchronous>, transform_indices = @transform_2, window_bounds = array<i64: 9, 32, 128>}, {pipeline_mode = #tpu.pipeline_mode<synchronous>, transform_indices = @transform_3, window_bounds = array<i64: 32, 1>}, {pipeline_mode = #tpu.pipeline_mode<synchronous>, transform_indices = @transform_4, window_bounds = array<i64: 32, 1>}, {pipeline_mode = #tpu.pipeline_mode<synchronous>, transform_indices = @transform_5, window_bounds = array<i64: 5, 32>}, {pipeline_mode = #tpu.pipeline_mode<synchronous>, transform_indices = @transform_6, window_bounds = array<i64: 5, 1>}, {pipeline_mode = #tpu.pipeline_mode<synchronous>, transform_indices = @transform_7, window_bounds = array<i64: 128, 640>}, {pipeline_mode = #tpu.pipeline_mode<synchronous>, transform_indices = @transform_8, window_bounds = array<i64: 1, 128>}, {pipeline_mode = #tpu.pipeline_mode<synchronous>, transform_indices = @transform_9, window_bounds = array<i64: 128, 20>}, {pipeline_mode = #tpu.pipeline_mode<synchronous>, transform_indices = @transform_10, window_bounds = array<i64: 1, 20>}, {transform_indices = @transform_11, window_bounds = array<i64: 1, 1, 20>}]} {
    %c0 = arith.constant 0 : index
    %c0_0 = arith.constant 0 : index
    %c0_1 = arith.constant 0 : index
    %0 = vector.load %arg1[%c0, %c0_0, %c0_1] : memref<1x2048x128xf32, #tpu.memory_space<vmem>>, vector<1x2048x128xf32>
    %1 = vector.shape_cast %0 : vector<1x2048x128xf32> to vector<2048x128xf32>
    %2 = arith.truncf %1 : vector<2048x128xf32> to vector<2048x128xbf16>
    %c0_2 = arith.constant 0 : index
    %c0_3 = arith.constant 0 : index
    %3 = vector.load %arg2[%c0_2, %c0_3] : memref<288x2048xbf16, #tpu.memory_space<vmem>>, vector<288x2048xbf16>
    %cst = arith.constant dense<0.000000e+00> : vector<288x128xf32>
    %4 = tpu.matmul %3, %2, %cst {dimension_numbers = #tpu.dot_dimension_numbers<[1], [0], [0], [1], [0, 0, 1, 1], [], []>} : vector<288x2048xbf16>, vector<2048x128xbf16>, vector<288x128xf32> -> vector<288x128xf32>
    %5 = vector.extract_strided_slice %4 {offsets = [128, 0], sizes = [32, 128], strides = [1, 1]} : vector<288x128xf32> to vector<32x128xf32>
    %6 = vector.extract_strided_slice %4 {offsets = [0, 0], sizes = [32, 128], strides = [1, 1]} : vector<288x128xf32> to vector<32x128xf32>
    %c68_i32 = arith.constant 68 : i32
    %7 = tpu.dynamic_rotate %6 by %c68_i32 dim 1 : vector<32x128xf32>, i32 -> vector<32x128xf32>
    %c0_4 = arith.constant 0 : index
    %c0_5 = arith.constant 0 : index
    %c0_6 = arith.constant 0 : index
    %8 = vector.load %arg3[%c0_4, %c0_5, %c0_6] : memref<9x32x128xf32, #tpu.memory_space<vmem>>, vector<1x32x128xf32>
    %9 = vector.shape_cast %8 : vector<1x32x128xf32> to vector<32x128xf32>
    %10 = arith.mulf %7, %9 : vector<32x128xf32>
    %11 = arith.addf %5, %10 : vector<32x128xf32>
    %12 = vector.extract_strided_slice %4 {offsets = [32, 0], sizes = [32, 128], strides = [1, 1]} : vector<288x128xf32> to vector<32x128xf32>
    %c64_i32 = arith.constant 64 : i32
    %13 = tpu.dynamic_rotate %12 by %c64_i32 dim 1 : vector<32x128xf32>, i32 -> vector<32x128xf32>
    %c1 = arith.constant 1 : index
    %c0_7 = arith.constant 0 : index
    %c0_8 = arith.constant 0 : index
    %14 = vector.load %arg3[%c1, %c0_7, %c0_8] : memref<9x32x128xf32, #tpu.memory_space<vmem>>, vector<1x32x128xf32>
    %15 = vector.shape_cast %14 : vector<1x32x128xf32> to vector<32x128xf32>
    %16 = arith.mulf %13, %15 : vector<32x128xf32>
    %17 = arith.addf %11, %16 : vector<32x128xf32>
    %18 = vector.extract_strided_slice %4 {offsets = [64, 0], sizes = [32, 128], strides = [1, 1]} : vector<288x128xf32> to vector<32x128xf32>
    %c60_i32 = arith.constant 60 : i32
    %19 = tpu.dynamic_rotate %18 by %c60_i32 dim 1 : vector<32x128xf32>, i32 -> vector<32x128xf32>
    %c2 = arith.constant 2 : index
    %c0_9 = arith.constant 0 : index
    %c0_10 = arith.constant 0 : index
    %20 = vector.load %arg3[%c2, %c0_9, %c0_10] : memref<9x32x128xf32, #tpu.memory_space<vmem>>, vector<1x32x128xf32>
    %21 = vector.shape_cast %20 : vector<1x32x128xf32> to vector<32x128xf32>
    %22 = arith.mulf %19, %21 : vector<32x128xf32>
    %23 = arith.addf %17, %22 : vector<32x128xf32>
    %24 = vector.extract_strided_slice %4 {offsets = [96, 0], sizes = [32, 128], strides = [1, 1]} : vector<288x128xf32> to vector<32x128xf32>
    %c4_i32 = arith.constant 4 : i32
    %25 = tpu.dynamic_rotate %24 by %c4_i32 dim 1 : vector<32x128xf32>, i32 -> vector<32x128xf32>
    %c3 = arith.constant 3 : index
    %c0_11 = arith.constant 0 : index
    %c0_12 = arith.constant 0 : index
    %26 = vector.load %arg3[%c3, %c0_11, %c0_12] : memref<9x32x128xf32, #tpu.memory_space<vmem>>, vector<1x32x128xf32>
    %27 = vector.shape_cast %26 : vector<1x32x128xf32> to vector<32x128xf32>
    %28 = arith.mulf %25, %27 : vector<32x128xf32>
    %29 = arith.addf %23, %28 : vector<32x128xf32>
    %30 = vector.extract_strided_slice %4 {offsets = [160, 0], sizes = [32, 128], strides = [1, 1]} : vector<288x128xf32> to vector<32x128xf32>
    %c124_i32 = arith.constant 124 : i32
    %31 = tpu.dynamic_rotate %30 by %c124_i32 dim 1 : vector<32x128xf32>, i32 -> vector<32x128xf32>
    %c5 = arith.constant 5 : index
    %c0_13 = arith.constant 0 : index
    %c0_14 = arith.constant 0 : index
    %32 = vector.load %arg3[%c5, %c0_13, %c0_14] : memref<9x32x128xf32, #tpu.memory_space<vmem>>, vector<1x32x128xf32>
    %33 = vector.shape_cast %32 : vector<1x32x128xf32> to vector<32x128xf32>
    %34 = arith.mulf %31, %33 : vector<32x128xf32>
    %35 = arith.addf %29, %34 : vector<32x128xf32>
    %36 = vector.extract_strided_slice %4 {offsets = [192, 0], sizes = [32, 128], strides = [1, 1]} : vector<288x128xf32> to vector<32x128xf32>
    %c68_i32_15 = arith.constant 68 : i32
    %37 = tpu.dynamic_rotate %36 by %c68_i32_15 dim 1 : vector<32x128xf32>, i32 -> vector<32x128xf32>
    %c6 = arith.constant 6 : index
    %c0_16 = arith.constant 0 : index
    %c0_17 = arith.constant 0 : index
    %38 = vector.load %arg3[%c6, %c0_16, %c0_17] : memref<9x32x128xf32, #tpu.memory_space<vmem>>, vector<1x32x128xf32>
    %39 = vector.shape_cast %38 : vector<1x32x128xf32> to vector<32x128xf32>
    %40 = arith.mulf %37, %39 : vector<32x128xf32>
    %41 = arith.addf %35, %40 : vector<32x128xf32>
    %42 = vector.extract_strided_slice %4 {offsets = [224, 0], sizes = [32, 128], strides = [1, 1]} : vector<288x128xf32> to vector<32x128xf32>
    %c64_i32_18 = arith.constant 64 : i32
    %43 = tpu.dynamic_rotate %42 by %c64_i32_18 dim 1 : vector<32x128xf32>, i32 -> vector<32x128xf32>
    %c7 = arith.constant 7 : index
    %c0_19 = arith.constant 0 : index
    %c0_20 = arith.constant 0 : index
    %44 = vector.load %arg3[%c7, %c0_19, %c0_20] : memref<9x32x128xf32, #tpu.memory_space<vmem>>, vector<1x32x128xf32>
    %45 = vector.shape_cast %44 : vector<1x32x128xf32> to vector<32x128xf32>
    %46 = arith.mulf %43, %45 : vector<32x128xf32>
    %47 = arith.addf %41, %46 : vector<32x128xf32>
    %48 = vector.extract_strided_slice %4 {offsets = [256, 0], sizes = [32, 128], strides = [1, 1]} : vector<288x128xf32> to vector<32x128xf32>
    %c60_i32_21 = arith.constant 60 : i32
    %49 = tpu.dynamic_rotate %48 by %c60_i32_21 dim 1 : vector<32x128xf32>, i32 -> vector<32x128xf32>
    %c8 = arith.constant 8 : index
    %c0_22 = arith.constant 0 : index
    %c0_23 = arith.constant 0 : index
    %50 = vector.load %arg3[%c8, %c0_22, %c0_23] : memref<9x32x128xf32, #tpu.memory_space<vmem>>, vector<1x32x128xf32>
    %51 = vector.shape_cast %50 : vector<1x32x128xf32> to vector<32x128xf32>
    %52 = arith.mulf %49, %51 : vector<32x128xf32>
    %53 = arith.addf %47, %52 : vector<32x128xf32>
    %c0_24 = arith.constant 0 : index
    %c0_25 = arith.constant 0 : index
    %54 = vector.load %arg4[%c0_24, %c0_25] : memref<32x1xf32, #tpu.memory_space<vmem>>, vector<32x1xf32>
    %55 = vector.broadcast %54 : vector<32x1xf32> to vector<32x128xf32>
    %56 = arith.mulf %53, %55 : vector<32x128xf32>
    %c0_26 = arith.constant 0 : index
    %c0_27 = arith.constant 0 : index
    %57 = vector.load %arg5[%c0_26, %c0_27] : memref<32x1xf32, #tpu.memory_space<vmem>>, vector<32x1xf32>
    %58 = vector.broadcast %57 : vector<32x1xf32> to vector<32x128xf32>
    %59 = arith.addf %56, %58 : vector<32x128xf32>
    %cst_28 = arith.constant 0.000000e+00 : f32
    %60 = vector.broadcast %cst_28 : f32 to vector<32x128xf32>
    %61 = arith.maximumf %59, %60 : vector<32x128xf32>
    %c0_29 = arith.constant 0 : index
    %c0_30 = arith.constant 0 : index
    %62 = vector.load %arg6[%c0_29, %c0_30] : memref<5x32xf32, #tpu.memory_space<vmem>>, vector<5x32xf32>
    %cst_31 = arith.constant dense<0.000000e+00> : vector<5x128xf32>
    %63 = tpu.matmul %62, %61, %cst_31 {dimension_numbers = #tpu.dot_dimension_numbers<[1], [0], [0], [1], [0, 0, 1, 1], [], []>} : vector<5x32xf32>, vector<32x128xf32>, vector<5x128xf32> -> vector<5x128xf32>
    %c0_32 = arith.constant 0 : index
    %c0_33 = arith.constant 0 : index
    %64 = vector.load %arg7[%c0_32, %c0_33] : memref<5x1xf32, #tpu.memory_space<vmem>>, vector<5x1xf32>
    %65 = vector.broadcast %64 : vector<5x1xf32> to vector<5x128xf32>
    %66 = arith.addf %63, %65 : vector<5x128xf32>
    %cst_34 = arith.constant dense<0xFF800000> : vector<128xf32>
    %67 = vector.multi_reduction <maximumf>, %66, %cst_34 [0] : vector<5x128xf32> to vector<128xf32>
    %68 = vector.shape_cast %67 : vector<128xf32> to vector<1x128xf32>
    %69 = vector.broadcast %68 : vector<1x128xf32> to vector<5x128xf32>
    %70 = arith.subf %66, %69 : vector<5x128xf32>
    %71 = math.exp %70 : vector<5x128xf32>
    %cst_35 = arith.constant dense<0.000000e+00> : vector<128xf32>
    %72 = vector.multi_reduction <add>, %71, %cst_35 [0] : vector<5x128xf32> to vector<128xf32>
    %73 = vector.shape_cast %72 : vector<128xf32> to vector<1x128xf32>
    %74 = tpu.reciprocal %73 {approx = true} : vector<1x128xf32> -> vector<1x128xf32>
    %75 = vector.broadcast %74 : vector<1x128xf32> to vector<5x128xf32>
    %76 = arith.mulf %71, %75 : vector<5x128xf32>
    %c127_i32 = arith.constant 127 : i32
    %77 = tpu.dynamic_rotate %76 by %c127_i32 dim 1 : vector<5x128xf32>, i32 -> vector<5x128xf32>
    %78 = arith.maximumf %76, %77 : vector<5x128xf32>
    %c112_i32 = arith.constant 112 : i32
    %79 = tpu.dynamic_rotate %78 by %c112_i32 dim 1 : vector<5x128xf32>, i32 -> vector<5x128xf32>
    %80 = arith.maximumf %78, %79 : vector<5x128xf32>
    %c0_36 = arith.constant 0 : index
    %c0_37 = arith.constant 0 : index
    %81 = vector.load %arg8[%c0_36, %c0_37] : memref<128x640xf32, #tpu.memory_space<vmem>>, vector<128x640xf32>
    %cst_38 = arith.constant dense<0.000000e+00> : vector<5x640xf32>
    %82 = tpu.matmul %80, %81, %cst_38 {dimension_numbers = #tpu.dot_dimension_numbers<[1], [0], [0], [1], [0, 0, 1, 1], [], []>} : vector<5x128xf32>, vector<128x640xf32>, vector<5x640xf32> -> vector<5x640xf32>
    %c0_39 = arith.constant 0 : index
    %c0_40 = arith.constant 0 : index
    %83 = vector.load %arg9[%c0_39, %c0_40] : memref<1x128xf32, #tpu.memory_space<vmem>>, vector<1x128xf32>
    %84 = vector.extract_strided_slice %82 {offsets = [0, 0], sizes = [1, 128], strides = [1, 1]} : vector<5x640xf32> to vector<1x128xf32>
    %85 = arith.addf %83, %84 : vector<1x128xf32>
    %86 = vector.extract_strided_slice %82 {offsets = [1, 128], sizes = [1, 128], strides = [1, 1]} : vector<5x640xf32> to vector<1x128xf32>
    %87 = arith.addf %85, %86 : vector<1x128xf32>
    %88 = vector.extract_strided_slice %82 {offsets = [2, 256], sizes = [1, 128], strides = [1, 1]} : vector<5x640xf32> to vector<1x128xf32>
    %89 = arith.addf %87, %88 : vector<1x128xf32>
    %90 = vector.extract_strided_slice %82 {offsets = [3, 384], sizes = [1, 128], strides = [1, 1]} : vector<5x640xf32> to vector<1x128xf32>
    %91 = arith.addf %89, %90 : vector<1x128xf32>
    %92 = vector.extract_strided_slice %82 {offsets = [4, 512], sizes = [1, 128], strides = [1, 1]} : vector<5x640xf32> to vector<1x128xf32>
    %93 = arith.addf %91, %92 : vector<1x128xf32>
    %cst_41 = arith.constant 0.000000e+00 : f32
    %94 = vector.broadcast %cst_41 : f32 to vector<1x128xf32>
    %95 = arith.maximumf %93, %94 : vector<1x128xf32>
    %c0_42 = arith.constant 0 : index
    %c0_43 = arith.constant 0 : index
    %96 = vector.load %arg10[%c0_42, %c0_43] : memref<128x20xf32, #tpu.memory_space<vmem>>, vector<128x20xf32>
    %cst_44 = arith.constant dense<0.000000e+00> : vector<1x20xf32>
    %97 = tpu.matmul %95, %96, %cst_44 {dimension_numbers = #tpu.dot_dimension_numbers<[1], [0], [0], [1], [0, 0, 1, 1], [], []>} : vector<1x128xf32>, vector<128x20xf32>, vector<1x20xf32> -> vector<1x20xf32>
    %c0_45 = arith.constant 0 : index
    %c0_46 = arith.constant 0 : index
    %98 = vector.load %arg11[%c0_45, %c0_46] : memref<1x20xf32, #tpu.memory_space<vmem>>, vector<1x20xf32>
    %99 = arith.addf %97, %98 : vector<1x20xf32>
    %c0_47 = arith.constant 0 : index
    %c0_48 = arith.constant 0 : index
    %c0_49 = arith.constant 0 : index
    %100 = vector.load %arg12[%c0_47, %c0_48, %c0_49] : memref<1x1x20xf32, #tpu.memory_space<vmem>>, vector<1x1x20xf32>
    %101 = vector.shape_cast %100 : vector<1x1x20xf32> to vector<1x20xf32>
    %102 = vector.shape_cast %99 : vector<1x20xf32> to vector<1x1x20xf32>
    tpu.vector_store %arg12[%c0_47, %c0_48, %c0_49], %102 {strides = array<i32>} : memref<1x1x20xf32, #tpu.memory_space<vmem>>, vector<1x1x20xf32>,
    return
  }
  func.func @transform_0(%arg0: i32) -> (i32, i32, i32) {
    %c0_i32 = arith.constant 0 : i32
    %c0_i32_0 = arith.constant 0 : i32
    %c0_i32_1 = arith.constant 0 : i32
    return %arg0, %c0_i32, %c0_i32_0 : i32, i32, i32
  }
  func.func @transform_1(%arg0: i32) -> (i32, i32) {
    %c0_i32 = arith.constant 0 : i32
    %c0_i32_0 = arith.constant 0 : i32
    %c0_i32_1 = arith.constant 0 : i32
    return %c0_i32, %c0_i32_0 : i32, i32
  }
  func.func @transform_2(%arg0: i32) -> (i32, i32, i32) {
    %c0_i32 = arith.constant 0 : i32
    %c0_i32_0 = arith.constant 0 : i32
    %c0_i32_1 = arith.constant 0 : i32
    %c0_i32_2 = arith.constant 0 : i32
    return %c0_i32, %c0_i32_0, %c0_i32_1 : i32, i32, i32
  }
  func.func @transform_3(%arg0: i32) -> (i32, i32) {
    %c0_i32 = arith.constant 0 : i32
    %c0_i32_0 = arith.constant 0 : i32
    %c0_i32_1 = arith.constant 0 : i32
    return %c0_i32, %c0_i32_0 : i32, i32
  }
  func.func @transform_4(%arg0: i32) -> (i32, i32) {
    %c0_i32 = arith.constant 0 : i32
    %c0_i32_0 = arith.constant 0 : i32
    %c0_i32_1 = arith.constant 0 : i32
    return %c0_i32, %c0_i32_0 : i32, i32
  }
  func.func @transform_5(%arg0: i32) -> (i32, i32) {
    %c0_i32 = arith.constant 0 : i32
    %c0_i32_0 = arith.constant 0 : i32
    %c0_i32_1 = arith.constant 0 : i32
    return %c0_i32, %c0_i32_0 : i32, i32
  }
  func.func @transform_6(%arg0: i32) -> (i32, i32) {
    %c0_i32 = arith.constant 0 : i32
    %c0_i32_0 = arith.constant 0 : i32
    %c0_i32_1 = arith.constant 0 : i32
    return %c0_i32, %c0_i32_0 : i32, i32
  }
  func.func @transform_7(%arg0: i32) -> (i32, i32) {
    %c0_i32 = arith.constant 0 : i32
    %c0_i32_0 = arith.constant 0 : i32
    %c0_i32_1 = arith.constant 0 : i32
    return %c0_i32, %c0_i32_0 : i32, i32
  }
  func.func @transform_8(%arg0: i32) -> (i32, i32) {
    %c0_i32 = arith.constant 0 : i32
    %c0_i32_0 = arith.constant 0 : i32
    %c0_i32_1 = arith.constant 0 : i32
    return %c0_i32, %c0_i32_0 : i32, i32
  }
  func.func @transform_9(%arg0: i32) -> (i32, i32) {
    %c0_i32 = arith.constant 0 : i32
    %c0_i32_0 = arith.constant 0 : i32
    %c0_i32_1 = arith.constant 0 : i32
    return %c0_i32, %c0_i32_0 : i32, i32
  }
  func.func @transform_10(%arg0: i32) -> (i32, i32) {
    %c0_i32 = arith.constant 0 : i32
    %c0_i32_0 = arith.constant 0 : i32
    %c0_i32_1 = arith.constant 0 : i32
    return %c0_i32, %c0_i32_0 : i32, i32
  }
  func.func @transform_11(%arg0: i32) -> (i32, i32, i32) {
    %c0_i32 = arith.constant 0 : i32
    %c0_i32_0 = arith.constant 0 : i32
    %c0_i32_1 = arith.constant 0 : i32
    return %arg0, %c0_i32, %c0_i32_0 : i32, i32, i32
  }
}

</mosaic_0001>

<llo_original>
// kernel: lane_classifier_forward.1
$region0: #{lane_classifier_forward.1}
  #allocation0 [shape = 'u32[]', space=smem, size = 0x4, offset = 0x4, fixed_abs, tag = 'smem constant byte address 0x4 - core index']
  #allocation1 [shape = 'u32[144,128]{1,0:T(1,128)}', space=vmem, size = 0x12000, scoped, tag = 'internal scratch']
  %s0 = inlined_call_operand.vmem [shape: f32[2,2048,128], index: 0, kind: input, shape index: {}]
  %s1 = inlined_call_operand.vmem [shape: bf16[288,2048], index: 1, kind: input, shape index: {}]
  %s2 = inlined_call_operand.vmem [shape: f32[9,32,128], index: 2, kind: input, shape index: {}]
  %s3 = inlined_call_operand.vmem [shape: f32[32,1], index: 3, kind: input, shape index: {}]
  %s4 = inlined_call_operand.vmem [shape: f32[32,1], index: 4, kind: input, shape index: {}]
  %s5 = inlined_call_operand.vmem [shape: f32[5,32], index: 5, kind: input, shape index: {}]
  %s6 = inlined_call_operand.vmem [shape: f32[5,1], index: 6, kind: input, shape index: {}]
  %s7 = inlined_call_operand.vmem [shape: f32[128,640], index: 7, kind: input, shape index: {}]
  %s8 = inlined_call_operand.vmem [shape: f32[1,128], index: 8, kind: input, shape index: {}]
  %s9 = inlined_call_operand.vmem [shape: f32[128,20], index: 9, kind: input, shape index: {}]
  %s10 = inlined_call_operand.vmem [shape: f32[1,20], index: 10, kind: input, shape index: {}]
  %s11 = inlined_call_operand.vmem [shape: f32[2,1,20], index: 11, kind: output, shape index: {}]
  %s12 = sld [smem:[#allocation0]]
  $region77: #{lane_classifier_forward.1} parent=0
    _
  %s14 = ssub.s32 1, %s12
  %s15 = scalar_select 0, %s14, %s12
  loop: start=0, step=1, limit=4
  $region2: #{lane_classifier_forward.1} parent=0 // loop_pre_header
    _
  $region3: #{lane_classifier_forward.1} parent=0 // loop_header
    %s17 = sphi 0, %s21
    %p18 = scmp.ge.s32.totalorder %s17, 4
    %s27 = sphi 0, %s29
    %s30 = sphi 0, %s27
    %s31 = sphi 0, %s30
    %s47 = sphi 0, %s31
    %s51 = sphi 0, %s51
    %s53 = sphi 0, %s51
    %s54 = sphi 0, %s53
    %s68 = sphi 0, %s54
    %s72 = sphi 0, %s72
    %s74 = sphi 0, %s72
    %s75 = sphi 0, %s74
    %s89 = sphi 0, %s75
    %s93 = sphi 0, %s93
    %s95 = sphi 0, %s93
    %s96 = sphi 0, %s95
    %s110 = sphi 0, %s96
    %s114 = sphi 0, %s114
    %s116 = sphi 0, %s114
    %s117 = sphi 0, %s116
    %s131 = sphi 0, %s117
    %s135 = sphi 0, %s135
    %s137 = sphi 0, %s135
    %s138 = sphi 0, %s137
    %s152 = sphi 0, %s138
    %s156 = sphi 0, %s156
    %s158 = sphi 0, %s156
    %s159 = sphi 0, %s158
    %s173 = sphi 0, %s159
    %s177 = sphi 0, %s177
    %s179 = sphi 0, %s177
    %s180 = sphi 0, %s179
    %s194 = sphi 0, %s180
    %s198 = sphi 0, %s198
    %s200 = sphi 0, %s198
    %s201 = sphi 0, %s200
    %s215 = sphi 0, %s201
    %s219 = sphi 0, %s219
    %s221 = sphi 0, %s219
    %s222 = sphi 0, %s221
    %s236 = sphi 0, %s222
    %s240 = sphi 0, %s240
    %s242 = sphi 0, %s240
    %s243 = sphi 0, %s242
    %s257 = sphi 0, %s243
    %s263 = sphi 0, %s265
    %s266 = sphi 0, %s263
    %s267 = sphi 0, %s266
    %s283 = sphi 0, %s267
  $region4: #{lane_classifier_forward.1} parent=0 // loop_header_branch
    %20 = sbr.rel (%p18) target = $region8
  $region5: #{lane_classifier_forward.1} parent=0 // loop_body
    %s22 = ssub.s32 %s17, 1
    %s23 = ssub.s32 %s17, 2
    %s24 = sadd.s32 %s17, 1
    %s25 = ssub.s32 %s17, %s24
    %p26 = scmp.eq.s32.totalorder %s25, 0
    %s28 = sadd.s32 %s27, 1
    %s29 = scalar_select %p26, %s27, %s28
    %p32 = pneg %p26
    %p33 = scmp.eq.s32.totalorder %s17, 1
    %p34 = por %p32, %p33
    %p35 = scmp.ne.s32.totalorder %s27, %s30
    %p36 = scmp.eq.s32.totalorder %s17, 0
    %p37 = por %p35, %p36
    %p38 = scmp.ne.s32.totalorder %s27, %s30
    %p39 = scmp.eq.s32.totalorder %s22, 1
    %p40 = por %p38, %p39
    %p41 = scmp.ne.s32.totalorder %s30, %s31
    %p42 = scmp.eq.s32.totalorder %s22, 0
    %p43 = por %p41, %p42
    %p44 = scmp.ne.s32.totalorder %s30, %s31
    %p45 = scmp.eq.s32.totalorder %s23, 1
    %p46 = por %p44, %p45
    %p48 = scmp.ne.s32.totalorder %s31, %s47
    %p49 = scmp.eq.s32.totalorder %s23, 0
    %p50 = por %p48, %p49
    %s52 = sadd.s32 %s51, 1
    %p55 = scmp.eq.s32.totalorder %s17, 1
    %p56 = scmp.ne.s32.totalorder %s51, %s53
    %p57 = scmp.eq.s32.totalorder %s17, 0
    %p58 = por %p56, %p57
    %p59 = scmp.ne.s32.totalorder %s51, %s53
    %p60 = scmp.eq.s32.totalorder %s22, 1
    %p61 = por %p59, %p60
    %p62 = scmp.ne.s32.totalorder %s53, %s54
    %p63 = scmp.eq.s32.totalorder %s22, 0
    %p64 = por %p62, %p63
    %p65 = scmp.ne.s32.totalorder %s53, %s54
    %p66 = scmp.eq.s32.totalorder %s23, 1
    %p67 = por %p65, %p66
    %p69 = scmp.ne.s32.totalorder %s54, %s68
    %p70 = scmp.eq.s32.totalorder %s23, 0
    %p71 = por %p69, %p70
    %s73 = sadd.s32 %s72, 1
    %p76 = scmp.eq.s32.totalorder %s17, 1
    %p77 = scmp.ne.s32.totalorder %s72, %s74
    %p78 = scmp.eq.s32.totalorder %s17, 0
    %p79 = por %p77, %p78
    %p80 = scmp.ne.s32.totalorder %s72, %s74
    %p81 = scmp.eq.s32.totalorder %s22, 1
    %p82 = por %p80, %p81
    %p83 = scmp.ne.s32.totalorder %s74, %s75
    %p84 = scmp.eq.s32.totalorder %s22, 0
    %p85 = por %p83, %p84
    %p86 = scmp.ne.s32.totalorder %s74, %s75
    %p87 = scmp.eq.s32.totalorder %s23, 1
    %p88 = por %p86, %p87
    %p90 = scmp.ne.s32.totalorder %s75, %s89
    %p91 = scmp.eq.s32.totalorder %s23, 0
    %p92 = por %p90, %p91
    %s94 = sadd.s32 %s93, 1
    %p97 = scmp.eq.s32.totalorder %s17, 1
    %p98 = scmp.ne.s32.totalorder %s93, %s95
    %p99 = scmp.eq.s32.totalorder %s17, 0
    %p100 = por %p98, %p99
    %p101 = scmp.ne.s32.totalorder %s93, %s95
    %p102 = scmp.eq.s32.totalorder %s22, 1
    %p103 = por %p101, %p102
    %p104 = scmp.ne.s32.totalorder %s95, %s96
    %p105 = scmp.eq.s32.totalorder %s22, 0
    %p106 = por %p104, %p105
    %p107 = scmp.ne.s32.totalorder %s95, %s96
    %p108 = scmp.eq.s32.totalorder %s23, 1
    %p109 = por %p107, %p108
    %p111 = scmp.ne.s32.totalorder %s96, %s110
    %p112 = scmp.eq.s32.totalorder %s23, 0
    %p113 = por %p111, %p112
    %s115 = sadd.s32 %s114, 1
    %p118 = scmp.eq.s32.totalorder %s17, 1
    %p119 = scmp.ne.s32.totalorder %s114, %s116
    %p120 = scmp.eq.s32.totalorder %s17, 0
    %p121 = por %p119, %p120
    %p122 = scmp.ne.s32.totalorder %s114, %s116
    %p123 = scmp.eq.s32.totalorder %s22, 1
    %p124 = por %p122, %p123
    %p125 = scmp.ne.s32.totalorder %s116, %s117
    %p126 = scmp.eq.s32.totalorder %s22, 0
    %p127 = por %p125, %p126
    %p128 = scmp.ne.s32.totalorder %s116, %s117
    %p129 = scmp.eq.s32.totalorder %s23, 1
    %p130 = por %p128, %p129
    %p132 = scmp.ne.s32.totalorder %s117, %s131
    %p133 = scmp.eq.s32.totalorder %s23, 0
    %p134 = por %p132, %p133
    %s136 = sadd.s32 %s135, 1
    %p139 = scmp.eq.s32.totalorder %s17, 1
    %p140 = scmp.ne.s32.totalorder %s135, %s137
    %p141 = scmp.eq.s32.totalorder %s17, 0
    %p142 = por %p140, %p141
    %p143 = scmp.ne.s32.totalorder %s135, %s137
    %p144 = scmp.eq.s32.totalorder %s22, 1
    %p145 = por %p143, %p144
    %p146 = scmp.ne.s32.totalorder %s137, %s138
    %p147 = scmp.eq.s32.totalorder %s22, 0
    %p148 = por %p146, %p147
    %p149 = scmp.ne.s32.totalorder %s137, %s138
    %p150 = scmp.eq.s32.totalorder %s23, 1
    %p151 = por %p149, %p150
    %p153 = scmp.ne.s32.totalorder %s138, %s152
    %p154 = scmp.eq.s32.totalorder %s23, 0
    %p155 = por %p153, %p154
    %s157 = sadd.s32 %s156, 1
    %p160 = scmp.eq.s32.totalorder %s17, 1
    %p161 = scmp.ne.s32.totalorder %s156, %s158
    %p162 = scmp.eq.s32.totalorder %s17, 0
    %p163 = por %p161, %p162
    %p164 = scmp.ne.s32.totalorder %s156, %s158
    %p165 = scmp.eq.s32.totalorder %s22, 1
    %p166 = por %p164, %p165
    %p167 = scmp.ne.s32.totalorder %s158, %s159
    %p168 = scmp.eq.s32.totalorder %s22, 0
    %p169 = por %p167, %p168
    %p170 = scmp.ne.s32.totalorder %s158, %s159
    %p171 = scmp.eq.s32.totalorder %s23, 1
    %p172 = por %p170, %p171
    %p174 = scmp.ne.s32.totalorder %s159, %s173
    %p175 = scmp.eq.s32.totalorder %s23, 0
    %p176 = por %p174, %p175
    %s178 = sadd.s32 %s177, 1
    %p181 = scmp.eq.s32.totalorder %s17, 1
    %p182 = scmp.ne.s32.totalorder %s177, %s179
    %p183 = scmp.eq.s32.totalorder %s17, 0
    %p184 = por %p182, %p183
    %p185 = scmp.ne.s32.totalorder %s177, %s179
    %p186 = scmp.eq.s32.totalorder %s22, 1
    %p187 = por %p185, %p186
    %p188 = scmp.ne.s32.totalorder %s179, %s180
    %p189 = scmp.eq.s32.totalorder %s22, 0
    %p190 = por %p188, %p189
    %p191 = scmp.ne.s32.totalorder %s179, %s180
    %p192 = scmp.eq.s32.totalorder %s23, 1
    %p193 = por %p191, %p192
    %p195 = scmp.ne.s32.totalorder %s180, %s194
    %p196 = scmp.eq.s32.totalorder %s23, 0
    %p197 = por %p195, %p196
    %s199 = sadd.s32 %s198, 1
    %p202 = scmp.eq.s32.totalorder %s17, 1
    %p203 = scmp.ne.s32.totalorder %s198, %s200
    %p204 = scmp.eq.s32.totalorder %s17, 0
    %p205 = por %p203, %p204
    %p206 = scmp.ne.s32.totalorder %s198, %s200
    %p207 = scmp.eq.s32.totalorder %s22, 1
    %p208 = por %p206, %p207
    %p209 = scmp.ne.s32.totalorder %s200, %s201
    %p210 = scmp.eq.s32.totalorder %s22, 0
    %p211 = por %p209, %p210
    %p212 = scmp.ne.s32.totalorder %s200, %s201
    %p213 = scmp.eq.s32.totalorder %s23, 1
    %p214 = por %p212, %p213
    %p216 = scmp.ne.s32.totalorder %s201, %s215
    %p217 = scmp.eq.s32.totalorder %s23, 0
    %p218 = por %p216, %p217
    %s220 = sadd.s32 %s219, 1
    %p223 = scmp.eq.s32.totalorder %s17, 1
    %p224 = scmp.ne.s32.totalorder %s219, %s221
    %p225 = scmp.eq.s32.totalorder %s17, 0
    %p226 = por %p224, %p225
    %p227 = scmp.ne.s32.totalorder %s219, %s221
    %p228 = scmp.eq.s32.totalorder %s22, 1
    %p229 = por %p227, %p228
    %p230 = scmp.ne.s32.totalorder %s221, %s222
    %p231 = scmp.eq.s32.totalorder %s22, 0
    %p232 = por %p230, %p231
    %p233 = scmp.ne.s32.totalorder %s221, %s222
    %p234 = scmp.eq.s32.totalorder %s23, 1
    %p235 = por %p233, %p234
    %p237 = scmp.ne.s32.totalorder %s222, %s236
    %p238 = scmp.eq.s32.totalorder %s23, 0
    %p239 = por %p237, %p238
    %s241 = sadd.s32 %s240, 1
    %p244 = scmp.eq.s32.totalorder %s17, 1
    %p245 = scmp.ne.s32.totalorder %s240, %s242
    %p246 = scmp.eq.s32.totalorder %s17, 0
    %p247 = por %p245, %p246
    %p248 = scmp.ne.s32.totalorder %s240, %s242
    %p249 = scmp.eq.s32.totalorder %s22, 1
    %p250 = por %p248, %p249
    %p251 = scmp.ne.s32.totalorder %s242, %s243
    %p252 = scmp.eq.s32.totalorder %s22, 0
    %p253 = por %p251, %p252
    %p254 = scmp.ne.s32.totalorder %s242, %s243
    %p255 = scmp.eq.s32.totalorder %s23, 1
    %p256 = por %p254, %p255
    %p258 = scmp.ne.s32.totalorder %s243, %s257
    %p259 = scmp.eq.s32.totalorder %s23, 0
    %p260 = por %p258, %p259
    %s261 = ssub.s32 %s17, %s24
    %p262 = scmp.eq.s32.totalorder %s261, 0
    %s264 = sadd.s32 %s263, 1
    %s265 = scalar_select %p262, %s263, %s264
    %p268 = pneg %p262
    %p269 = scmp.eq.s32.totalorder %s17, 1
    %p270 = por %p268, %p269
    %p271 = scmp.ne.s32.totalorder %s263, %s266
    %p272 = scmp.eq.s32.totalorder %s17, 0
    %p273 = por %p271, %p272
    %p274 = scmp.ne.s32.totalorder %s263, %s266
    %p275 = scmp.eq.s32.totalorder %s22, 1
    %p276 = por %p274, %p275
    %p277 = scmp.ne.s32.totalorder %s266, %s267
    %p278 = scmp.eq.s32.totalorder %s22, 0
    %p279 = por %p277, %p278
    %p280 = scmp.ne.s32.totalorder %s266, %s267
    %p281 = scmp.eq.s32.totalorder %s23, 1
    %p282 = por %p280, %p281
    %p284 = scmp.ne.s32.totalorder %s267, %s283
    %p285 = scmp.eq.s32.totalorder %s23, 0
    %p286 = por %p284, %p285
    %p287 = scmp.le.s32.totalorder 1, %s17
    %p288 = scmp.lt.s32.totalorder %s17, 3
    %p289 = pnand %p287, %p288
    %p290 = pneg %p289
    // Predicated region
    $region9: #{lane_classifier_forward.1} parent=5 // pred_check
      _
    $region10: #{lane_classifier_forward.1} parent=5 // pred_check_branch
      %292 = sbr.rel (%p289) target = $region12
    $region11: #{lane_classifier_forward.1} parent=5 // pred_region
      %s293 = ssub.s32 %s17, 1
      // Predicated region
      $region13: #{lane_classifier_forward.1} parent=11 // pred_check
        %p294 = pneg %p64
      $region14: #{lane_classifier_forward.1} parent=11 // pred_check_branch
        %296 = sbr.rel (%p294) target = $region16
      $region15: #{lane_classifier_forward.1} parent=11 // pred_region
        _
      $region16: #{lane_classifier_forward.1} parent=11 // pred_fallthru
        _
      // Predicated region
      $region17: #{lane_classifier_forward.1} parent=11 // pred_check
        %p297 = pneg %p85
      $region18: #{lane_classifier_forward.1} parent=11 // pred_check_branch
        %299 = sbr.rel (%p297) target = $region20
      $region19: #{lane_classifier_forward.1} parent=11 // pred_region
        _
      $region20: #{lane_classifier_forward.1} parent=11 // pred_fallthru
        _
      // Predicated region
      $region21: #{lane_classifier_forward.1} parent=11 // pred_check
        %p300 = pneg %p106
      $region22: #{lane_classifier_forward.1} parent=11 // pred_check_branch
        %302 = sbr.rel (%p300) target = $region24
      $region23: #{lane_classifier_forward.1} parent=11 // pred_region
        _
      $region24: #{lane_classifier_forward.1} parent=11 // pred_fallthru
        _
      // Predicated region
      $region25: #{lane_classifier_forward.1} parent=11 // pred_check
        %p303 = pneg %p127
      $region26: #{lane_classifier_forward.1} parent=11 // pred_check_branch
        %305 = sbr.rel (%p303) target = $region28
      $region27: #{lane_classifier_forward.1} parent=11 // pred_region
        _
      $region28: #{lane_classifier_forward.1} parent=11 // pred_fallthru
        _
      // Predicated region
      $region29: #{lane_classifier_forward.1} parent=11 // pred_check
        %p306 = pneg %p148
      $region30: #{lane_classifier_forward.1} parent=11 // pred_check_branch
        %308 = sbr.rel (%p306) target = $region32
      $region31: #{lane_classifier_forward.1} parent=11 // pred_region
        _
      $region32: #{lane_classifier_forward.1} parent=11 // pred_fallthru
        _
      // Predicated region
      $region33: #{lane_classifier_forward.1} parent=11 // pred_check
        %p309 = pneg %p169
      $region34: #{lane_classifier_forward.1} parent=11 // pred_check_branch
        %311 = sbr.rel (%p309) target = $region36
      $region35: #{lane_classifier_forward.1} parent=11 // pred_region
        _
      $region36: #{lane_classifier_forward.1} parent=11 // pred_fallthru
        _
      // Predicated region
      $region37: #{lane_classifier_forward.1} parent=11 // pred_check
        %p312 = pneg %p190
      $region38: #{lane_classifier_forward.1} parent=11 // pred_check_branch
        %314 = sbr.rel (%p312) target = $region40
      $region39: #{lane_classifier_forward.1} parent=11 // pred_region
        _
      $region40: #{lane_classifier_forward.1} parent=11 // pred_fallthru
        _
      // Predicated region
      $region41: #{lane_classifier_forward.1} parent=11 // pred_check
        %p315 = pneg %p211
      $region42: #{lane_classifier_forward.1} parent=11 // pred_check_branch
        %317 = sbr.rel (%p315) target = $region44
      $region43: #{lane_classifier_forward.1} parent=11 // pred_region
        _
      $region44: #{lane_classifier_forward.1} parent=11 // pred_fallthru
        _
      // Predicated region
      $region45: #{lane_classifier_forward.1} parent=11 // pred_check
        %p318 = pneg %p232
      $region46: #{lane_classifier_forward.1} parent=11 // pred_check_branch
        %320 = sbr.rel (%p318) target = $region48
      $region47: #{lane_classifier_forward.1} parent=11 // pred_region
        _
      $region48: #{lane_classifier_forward.1} parent=11 // pred_fallthru
        _
      // Predicated region
      $region49: #{lane_classifier_forward.1} parent=11 // pred_check
        %p321 = pneg %p253
      $region50: #{lane_classifier_forward.1} parent=11 // pred_check_branch
        %323 = sbr.rel (%p321) target = $region52
      $region51: #{lane_classifier_forward.1} parent=11 // pred_region
        _
      $region52: #{lane_classifier_forward.1} parent=11 // pred_fallthru
        _
    $region12: #{lane_classifier_forward.1} parent=5 // pred_fallthru
      _
    %p324 = scmp.lt.s32.totalorder %s17, 2
    // Predicated region
    $region53: #{lane_classifier_forward.1} parent=5 // pred_check
      %p325 = pneg %p324
    $region54: #{lane_classifier_forward.1} parent=5 // pred_check_branch
      %327 = sbr.rel (%p325) target = $region56
    $region55: #{lane_classifier_forward.1} parent=5 // pred_region
      // Predicated region
      $region57: #{lane_classifier_forward.1} parent=55 // pred_check
        %p328 = pneg %p37
      $region58: #{lane_classifier_forward.1} parent=55 // pred_check_branch
        %330 = sbr.rel (%p328) target = $region60
      $region59: #{lane_classifier_forward.1} parent=55 // pred_region
        %p331 = scmp.lt.s32.totalorder %s17, 1
        %s332 = scalar_select %p331, %s17, 1
        %s333 = smul.addr %s332, 256
        %s334 = smul.addr %s333, 8
        %s335 = scalar_lea.vmem %s0, %s334
      $region60: #{lane_classifier_forward.1} parent=55 // pred_fallthru
        _
    $region56: #{lane_classifier_forward.1} parent=5 // pred_fallthru
      _
    %p336 = scmp.le.s32.totalorder 1, %s17
    %p337 = scmp.lt.s32.totalorder %s17, 3
    %p338 = pnand %p336, %p337
    %p339 = pneg %p338
    // Predicated region
    $region61: #{lane_classifier_forward.1} parent=5 // pred_check
      _
    $region62: #{lane_classifier_forward.1} parent=5 // pred_check_branch
      %341 = sbr.rel (%p338) target = $region64
    $region63: #{lane_classifier_forward.1} parent=5 // pred_region
      %s342 = ssub.s32 %s17, 1
      %p343 = scmp.lt.s32.totalorder %s22, 1
      %s344 = scalar_select %p343, %s22, 1
      %s345 = smul.addr %s344, 256
      %s346 = smul.addr %s345, 8
      %s347 = scalar_lea.vmem %s0, %s346
      %p348 = pneg %p43
      %p349 = pneg %p40
      %p350 = pneg %p64
      %p351 = pneg %p61
      %p352 = pneg %p85
      %p353 = pneg %p82
      %p354 = pneg %p106
      %p355 = pneg %p103
      %p356 = pneg %p127
      %p357 = pneg %p124
      %p358 = pneg %p148
      %p359 = pneg %p145
      %p360 = pneg %p169
      %p361 = pneg %p166
      %p362 = pneg %p190
      %p363 = pneg %p187
      %p364 = pneg %p211
      %p365 = pneg %p208
      %p366 = pneg %p232
      %p367 = pneg %p229
      %p368 = pneg %p253
      %p369 = pneg %p250
      %p370 = pneg %p279
      %p371 = pneg %p276
      %p372 = scmp.lt.s32.totalorder %s22, 1
      %s373 = scalar_select %p372, %s22, 1
      %s374 = scalar_lea.vmem %s11, %s373
      %p375 = scmp.lt.s32.totalorder %s22, 1
      %s376 = scalar_select %p375, %s22, 1
      %s377 = smul.addr %s376, 256
      %s378 = smul.addr %s377, 8
      %s379 = scalar_lea.vmem %s0, %s378
      %p380 = scmp.lt.s32.totalorder %s22, 1
      %s381 = scalar_select %p380, %s22, 1
      %s382 = scalar_lea.vmem %s11, %s381
      %v384 = vld [vmem:[%s379] sm:$0xff]
      %v385 = vld [vmem:[%s379 + $0x8] sm:$0xff]
      %v386 = vld [vmem:[%s379 + $0x10] sm:$0xff]
      %v387 = vld [vmem:[%s379 + $0x18] sm:$0xff]
      %v388 = vld [vmem:[%s379 + $0x20] sm:$0xff]
      %v389 = vld [vmem:[%s379 + $0x28] sm:$0xff]
      %v390 = vld [vmem:[%s379 + $0x30] sm:$0xff]
      %v391 = vld [vmem:[%s379 + $0x38] sm:$0xff]
      %v392 = vld [vmem:[%s379 + $0x40] sm:$0xff]
      %v393 = vld [vmem:[%s379 + $0x48] sm:$0xff]
      %v394 = vld [vmem:[%s379 + $0x50] sm:$0xff]
      %v395 = vld [vmem:[%s379 + $0x58] sm:$0xff]
      %v396 = vld [vmem:[%s379 + $0x60] sm:$0xff]
      %v397 = vld [vmem:[%s379 + $0x68] sm:$0xff]
      %v398 = vld [vmem:[%s379 + $0x70] sm:$0xff]
      %v399 = vld [vmem:[%s379 + $0x78] sm:$0xff]
      %v400 = vld [vmem:[%s379 + $0x80] sm:$0xff]
      %v401 = vld [vmem:[%s379 + $0x88] sm:$0xff]
      %v402 = vld [vmem:[%s379 + $0x90] sm:$0xff]
      %v403 = vld [vmem:[%s379 + $0x98] sm:$0xff]
      %v404 = vld [vmem:[%s379 + $0xa0] sm:$0xff]
      %v405 = vld [vmem:[%s379 + $0xa8] sm:$0xff]
      %v406 = vld [vmem:[%s379 + $0xb0] sm:$0xff]
      %v407 = vld [vmem:[%s379 + $0xb8] sm:$0xff]
      %v408 = vld [vmem:[%s379 + $0xc0] sm:$0xff]
      %v409 = vld [vmem:[%s379 + $0xc8] sm:$0xff]
      %v410 = vld [vmem:[%s379 + $0xd0] sm:$0xff]
      %v411 = vld [vmem:[%s379 + $0xd8] sm:$0xff]
      %v412 = vld [vmem:[%s379 + $0xe0] sm:$0xff]
      %v413 = vld [vmem:[%s379 + $0xe8] sm:$0xff]
      %v414 = vld [vmem:[%s379 + $0xf0] sm:$0xff]
      %v415 = vld [vmem:[%s379 + $0xf8] sm:$0xff]
      %v416 = vld [vmem:[%s379 + $0x100] sm:$0xff]
      %v417 = vld [vmem:[%s379 + $0x108] sm:$0xff]
      %v418 = vld [vmem:[%s379 + $0x110] sm:$0xff]
      %v419 = vld [vmem:[%s379 + $0x118] sm:$0xff]
      %v420 = vld [vmem:[%s379 + $0x120] sm:$0xff]
      %v421 = vld [vmem:[%s379 + $0x128] sm:$0xff]
      %v422 = vld [vmem:[%s379 + $0x130] sm:$0xff]
      %v423 = vld [vmem:[%s379 + $0x138] sm:$0xff]
      %v424 = vld [vmem:[%s379 + $0x140] sm:$0xff]
      %v425 = vld [vmem:[%s379 + $0x148] sm:$0xff]
      %v426 = vld [vmem:[%s379 + $0x150] sm:$0xff]
      %v427 = vld [vmem:[%s379 + $0x158] sm:$0xff]
      %v428 = vld [vmem:[%s379 + $0x160] sm:$0xff]
      %v429 = vld [vmem:[%s379 + $0x168] sm:$0xff]
      %v430 = vld [vmem:[%s379 + $0x170] sm:$0xff]
      %v431 = vld [vmem:[%s379 + $0x178] sm:$0xff]
      %v432 = vld [vmem:[%s379 + $0x180] sm:$0xff]
      %v433 = vld [vmem:[%s379 + $0x188] sm:$0xff]
      %v434 = vld [vmem:[%s379 + $0x190] sm:$0xff]
      %v435 = vld [vmem:[%s379 + $0x198] sm:$0xff]
      %v436 = vld [vmem:[%s379 + $0x1a0] sm:$0xff]
      %v437 = vld [vmem:[%s379 + $0x1a8] sm:$0xff]
      %v438 = vld [vmem:[%s379 + $0x1b0] sm:$0xff]
      %v439 = vld [vmem:[%s379 + $0x1b8] sm:$0xff]
      %v440 = vld [vmem:[%s379 + $0x1c0] sm:$0xff]
      %v441 = vld [vmem:[%s379 + $0x1c8] sm:$0xff]
      %v442 = vld [vmem:[%s379 + $0x1d0] sm:$0xff]
      %v443 = vld [vmem:[%s379 + $0x1d8] sm:$0xff]
      %v444 = vld [vmem:[%s379 + $0x1e0] sm:$0xff]
      %v445 = vld [vmem:[%s379 + $0x1e8] sm:$0xff]
      %v446 = vld [vmem:[%s379 + $0x1f0] sm:$0xff]
      %v447 = vld [vmem:[%s379 + $0x1f8] sm:$0xff]
      %v448 = vld [vmem:[%s379 + $0x200] sm:$0xff]
      %v449 = vld [vmem:[%s379 + $0x208] sm:$0xff]
      %v450 = vld [vmem:[%s379 + $0x210] sm:$0xff]
      %v451 = vld [vmem:[%s379 + $0x218] sm:$0xff]
      %v452 = vld [vmem:[%s379 + $0x220] sm:$0xff]
      %v453 = vld [vmem:[%s379 + $0x228] sm:$0xff]
      %v454 = vld [vmem:[%s379 + $0x230] sm:$0xff]
      %v455 = vld [vmem:[%s379 + $0x238] sm:$0xff]
      %v456 = vld [vmem:[%s379 + $0x240] sm:$0xff]
      %v457 = vld [vmem:[%s379 + $0x248] sm:$0xff]
      %v458 = vld [vmem:[%s379 + $0x250] sm:$0xff]
      %v459 = vld [vmem:[%s379 + $0x258] sm:$0xff]
      %v460 = vld [vmem:[%s379 + $0x260] sm:$0xff]
      %v461 = vld [vmem:[%s379 + $0x268] sm:$0xff]
      %v462 = vld [vmem:[%s379 + $0x270] sm:$0xff]
      %v463 = vld [vmem:[%s379 + $0x278] sm:$0xff]
      %v464 = vld [vmem:[%s379 + $0x280] sm:$0xff]
      %v465 = vld [vmem:[%s379 + $0x288] sm:$0xff]
      %v466 = vld [vmem:[%s379 + $0x290] sm:$0xff]
      %v467 = vld [vmem:[%s379 + $0x298] sm:$0xff]
      %v468 = vld [vmem:[%s379 + $0x2a0] sm:$0xff]
      %v469 = vld [vmem:[%s379 + $0x2a8] sm:$0xff]
      %v470 = vld [vmem:[%s379 + $0x2b0] sm:$0xff]
      %v471 = vld [vmem:[%s379 + $0x2b8] sm:$0xff]
      %v472 = vld [vmem:[%s379 + $0x2c0] sm:$0xff]
      %v473 = vld [vmem:[%s379 + $0x2c8] sm:$0xff]
      %v474 = vld [vmem:[%s379 + $0x2d0] sm:$0xff]
      %v475 = vld [vmem:[%s379 + $0x2d8] sm:$0xff]
      %v476 = vld [vmem:[%s379 + $0x2e0] sm:$0xff]
      %v477 = vld [vmem:[%s379 + $0x2e8] sm:$0xff]
      %v478 = vld [vmem:[%s379 + $0x2f0] sm:$0xff]
      %v479 = vld [vmem:[%s379 + $0x2f8] sm:$0xff]
      %v480 = vld [vmem:[%s379 + $0x300] sm:$0xff]
      %v481 = vld [vmem:[%s379 + $0x308] sm:$0xff]
      %v482 = vld [vmem:[%s379 + $0x310] sm:$0xff]
      %v483 = vld [vmem:[%s379 + $0x318] sm:$0xff]
      %v484 = vld [vmem:[%s379 + $0x320] sm:$0xff]
      %v485 = vld [vmem:[%s379 + $0x328] sm:$0xff]
      %v486 = vld [vmem:[%s379 + $0x330] sm:$0xff]
      %v487 = vld [vmem:[%s379 + $0x338] sm:$0xff]
      %v488 = vld [vmem:[%s379 + $0x340] sm:$0xff]
      %v489 = vld [vmem:[%s379 + $0x348] sm:$0xff]
      %v490 = vld [vmem:[%s379 + $0x350] sm:$0xff]
      %v491 = vld [vmem:[%s379 + $0x358] sm:$0xff]
      %v492 = vld [vmem:[%s379 + $0x360] sm:$0xff]
      %v493 = vld [vmem:[%s379 + $0x368] sm:$0xff]
      %v494 = vld [vmem:[%s379 + $0x370] sm:$0xff]
      %v495 = vld [vmem:[%s379 + $0x378] sm:$0xff]
      %v496 = vld [vmem:[%s379 + $0x380] sm:$0xff]
      %v497 = vld [vmem:[%s379 + $0x388] sm:$0xff]
      %v498 = vld [vmem:[%s379 + $0x390] sm:$0xff]
      %v499 = vld [vmem:[%s379 + $0x398] sm:$0xff]
      %v500 = vld [vmem:[%s379 + $0x3a0] sm:$0xff]
      %v501 = vld [vmem:[%s379 + $0x3a8] sm:$0xff]
      %v502 = vld [vmem:[%s379 + $0x3b0] sm:$0xff]
      %v503 = vld [vmem:[%s379 + $0x3b8] sm:$0xff]
      %v504 = vld [vmem:[%s379 + $0x3c0] sm:$0xff]
      %v505 = vld [vmem:[%s379 + $0x3c8] sm:$0xff]
      %v506 = vld [vmem:[%s379 + $0x3d0] sm:$0xff]
      %v507 = vld [vmem:[%s379 + $0x3d8] sm:$0xff]
      %v508 = vld [vmem:[%s379 + $0x3e0] sm:$0xff]
      %v509 = vld [vmem:[%s379 + $0x3e8] sm:$0xff]
      %v510 = vld [vmem:[%s379 + $0x3f0] sm:$0xff]
      %v511 = vld [vmem:[%s379 + $0x3f8] sm:$0xff]
      %v512 = vld [vmem:[%s379 + $0x400] sm:$0xff]
      %v513 = vld [vmem:[%s379 + $0x408] sm:$0xff]
      %v514 = vld [vmem:[%s379 + $0x410] sm:$0xff]
      %v515 = vld [vmem:[%s379 + $0x418] sm:$0xff]
      %v516 = vld [vmem:[%s379 + $0x420] sm:$0xff]
      %v517 = vld [vmem:[%s379 + $0x428] sm:$0xff]
      %v518 = vld [vmem:[%s379 + $0x430] sm:$0xff]
      %v519 = vld [vmem:[%s379 + $0x438] sm:$0xff]
      %v520 = vld [vmem:[%s379 + $0x440] sm:$0xff]
      %v521 = vld [vmem:[%s379 + $0x448] sm:$0xff]
      %v522 = vld [vmem:[%s379 + $0x450] sm:$0xff]
      %v523 = vld [vmem:[%s379 + $0x458] sm:$0xff]
      %v524 = vld [vmem:[%s379 + $0x460] sm:$0xff]
      %v525 = vld [vmem:[%s379 + $0x468] sm:$0xff]
      %v526 = vld [vmem:[%s379 + $0x470] sm:$0xff]
      %v527 = vld [vmem:[%s379 + $0x478] sm:$0xff]
      %v528 = vld [vmem:[%s379 + $0x480] sm:$0xff]
      %v529 = vld [vmem:[%s379 + $0x488] sm:$0xff]
      %v530 = vld [vmem:[%s379 + $0x490] sm:$0xff]
      %v531 = vld [vmem:[%s379 + $0x498] sm:$0xff]
      %v532 = vld [vmem:[%s379 + $0x4a0] sm:$0xff]
      %v533 = vld [vmem:[%s379 + $0x4a8] sm:$0xff]
      %v534 = vld [vmem:[%s379 + $0x4b0] sm:$0xff]
      %v535 = vld [vmem:[%s379 + $0x4b8] sm:$0xff]
      %v536 = vld [vmem:[%s379 + $0x4c0] sm:$0xff]
      %v537 = vld [vmem:[%s379 + $0x4c8] sm:$0xff]
      %v538 = vld [vmem:[%s379 + $0x4d0] sm:$0xff]
      %v539 = vld [vmem:[%s379 + $0x4d8] sm:$0xff]
      %v540 = vld [vmem:[%s379 + $0x4e0] sm:$0xff]
      %v541 = vld [vmem:[%s379 + $0x4e8] sm:$0xff]
      %v542 = vld [vmem:[%s379 + $0x4f0] sm:$0xff]
      %v543 = vld [vmem:[%s379 + $0x4f8] sm:$0xff]
      %v544 = vld [vmem:[%s379 + $0x500] sm:$0xff]
      %v545 = vld [vmem:[%s379 + $0x508] sm:$0xff]
      %v546 = vld [vmem:[%s379 + $0x510] sm:$0xff]
      %v547 = vld [vmem:[%s379 + $0x518] sm:$0xff]
      %v548 = vld [vmem:[%s379 + $0x520] sm:$0xff]
      %v549 = vld [vmem:[%s379 + $0x528] sm:$0xff]
      %v550 = vld [vmem:[%s379 + $0x530] sm:$0xff]
      %v551 = vld [vmem:[%s379 + $0x538] sm:$0xff]
      %v552 = vld [vmem:[%s379 + $0x540] sm:$0xff]
      %v553 = vld [vmem:[%s379 + $0x548] sm:$0xff]
      %v554 = vld [vmem:[%s379 + $0x550] sm:$0xff]
      %v555 = vld [vmem:[%s379 + $0x558] sm:$0xff]
      %v556 = vld [vmem:[%s379 + $0x560] sm:$0xff]
      %v557 = vld [vmem:[%s379 + $0x568] sm:$0xff]
      %v558 = vld [vmem:[%s379 + $0x570] sm:$0xff]
      %v559 = vld [vmem:[%s379 + $0x578] sm:$0xff]
      %v560 = vld [vmem:[%s379 + $0x580] sm:$0xff]
      %v561 = vld [vmem:[%s379 + $0x588] sm:$0xff]
      %v562 = vld [vmem:[%s379 + $0x590] sm:$0xff]
      %v563 = vld [vmem:[%s379 + $0x598] sm:$0xff]
      %v564 = vld [vmem:[%s379 + $0x5a0] sm:$0xff]
      %v565 = vld [vmem:[%s379 + $0x5a8] sm:$0xff]
      %v566 = vld [vmem:[%s379 + $0x5b0] sm:$0xff]
      %v567 = vld [vmem:[%s379 + $0x5b8] sm:$0xff]
      %v568 = vld [vmem:[%s379 + $0x5c0] sm:$0xff]
      %v569 = vld [vmem:[%s379 + $0x5c8] sm:$0xff]
      %v570 = vld [vmem:[%s379 + $0x5d0] sm:$0xff]
      %v571 = vld [vmem:[%s379 + $0x5d8] sm:$0xff]
      %v572 = vld [vmem:[%s379 + $0x5e0] sm:$0xff]
      %v573 = vld [vmem:[%s379 + $0x5e8] sm:$0xff]
      %v574 = vld [vmem:[%s379 + $0x5f0] sm:$0xff]
      %v575 = vld [vmem:[%s379 + $0x5f8] sm:$0xff]
      %v576 = vld [vmem:[%s379 + $0x600] sm:$0xff]
      %v577 = vld [vmem:[%s379 + $0x608] sm:$0xff]
      %v578 = vld [vmem:[%s379 + $0x610] sm:$0xff]
      %v579 = vld [vmem:[%s379 + $0x618] sm:$0xff]
      %v580 = vld [vmem:[%s379 + $0x620] sm:$0xff]
      %v581 = vld [vmem:[%s379 + $0x628] sm:$0xff]
      %v582 = vld [vmem:[%s379 + $0x630] sm:$0xff]
      %v583 = vld [vmem:[%s379 + $0x638] sm:$0xff]
      %v584 = vld [vmem:[%s379 + $0x640] sm:$0xff]
      %v585 = vld [vmem:[%s379 + $0x648] sm:$0xff]
      %v586 = vld [vmem:[%s379 + $0x650] sm:$0xff]
      %v587 = vld [vmem:[%s379 + $0x658] sm:$0xff]
      %v588 = vld [vmem:[%s379 + $0x660] sm:$0xff]
      %v589 = vld [vmem:[%s379 + $0x668] sm:$0xff]
      %v590 = vld [vmem:[%s379 + $0x670] sm:$0xff]
      %v591 = vld [vmem:[%s379 + $0x678] sm:$0xff]
      %v592 = vld [vmem:[%s379 + $0x680] sm:$0xff]
      %v593 = vld [vmem:[%s379 + $0x688] sm:$0xff]
      %v594 = vld [vmem:[%s379 + $0x690] sm:$0xff]
      %v595 = vld [vmem:[%s379 + $0x698] sm:$0xff]
      %v596 = vld [vmem:[%s379 + $0x6a0] sm:$0xff]
      %v597 = vld [vmem:[%s379 + $0x6a8] sm:$0xff]
      %v598 = vld [vmem:[%s379 + $0x6b0] sm:$0xff]
      %v599 = vld [vmem:[%s379 + $0x6b8] sm:$0xff]
      %v600 = vld [vmem:[%s379 + $0x6c0] sm:$0xff]
      %v601 = vld [vmem:[%s379 + $0x6c8] sm:$0xff]
      %v602 = vld [vmem:[%s379 + $0x6d0] sm:$0xff]
      %v603 = vld [vmem:[%s379 + $0x6d8] sm:$0xff]
      %v604 = vld [vmem:[%s379 + $0x6e0] sm:$0xff]
      %v605 = vld [vmem:[%s379 + $0x6e8] sm:$0xff]
      %v606 = vld [vmem:[%s379 + $0x6f0] sm:$0xff]
      %v607 = vld [vmem:[%s379 + $0x6f8] sm:$0xff]
      %v608 = vld [vmem:[%s379 + $0x700] sm:$0xff]
      %v609 = vld [vmem:[%s379 + $0x708] sm:$0xff]
      %v610 = vld [vmem:[%s379 + $0x710] sm:$0xff]
      %v611 = vld [vmem:[%s379 + $0x718] sm:$0xff]
      %v612 = vld [vmem:[%s379 + $0x720] sm:$0xff]
      %v613 = vld [vmem:[%s379 + $0x728] sm:$0xff]
      %v614 = vld [vmem:[%s379 + $0x730] sm:$0xff]
      %v615 = vld [vmem:[%s379 + $0x738] sm:$0xff]
      %v616 = vld [vmem:[%s379 + $0x740] sm:$0xff]
      %v617 = vld [vmem:[%s379 + $0x748] sm:$0xff]
      %v618 = vld [vmem:[%s379 + $0x750] sm:$0xff]
      %v619 = vld [vmem:[%s379 + $0x758] sm:$0xff]
      %v620 = vld [vmem:[%s379 + $0x760] sm:$0xff]
      %v621 = vld [vmem:[%s379 + $0x768] sm:$0xff]
      %v622 = vld [vmem:[%s379 + $0x770] sm:$0xff]
      %v623 = vld [vmem:[%s379 + $0x778] sm:$0xff]
      %v624 = vld [vmem:[%s379 + $0x780] sm:$0xff]
      %v625 = vld [vmem:[%s379 + $0x788] sm:$0xff]
      %v626 = vld [vmem:[%s379 + $0x790] sm:$0xff]
      %v627 = vld [vmem:[%s379 + $0x798] sm:$0xff]
      %v628 = vld [vmem:[%s379 + $0x7a0] sm:$0xff]
      %v629 = vld [vmem:[%s379 + $0x7a8] sm:$0xff]
      %v630 = vld [vmem:[%s379 + $0x7b0] sm:$0xff]
      %v631 = vld [vmem:[%s379 + $0x7b8] sm:$0xff]
      %v632 = vld [vmem:[%s379 + $0x7c0] sm:$0xff]
      %v633 = vld [vmem:[%s379 + $0x7c8] sm:$0xff]
      %v634 = vld [vmem:[%s379 + $0x7d0] sm:$0xff]
      %v635 = vld [vmem:[%s379 + $0x7d8] sm:$0xff]
      %v636 = vld [vmem:[%s379 + $0x7e0] sm:$0xff]
      %v637 = vld [vmem:[%s379 + $0x7e8] sm:$0xff]
      %v638 = vld [vmem:[%s379 + $0x7f0] sm:$0xff]
      %v639 = vld [vmem:[%s379 + $0x7f8] sm:$0xff]
      %v640 = vpack.c.bf16 %v385, %v384
      %v641 = vpack.c.bf16 %v387, %v386
      %v642 = vpack.c.bf16 %v389, %v388
      %v643 = vpack.c.bf16 %v391, %v390
      %v644 = vpack.c.bf16 %v393, %v392
      %v645 = vpack.c.bf16 %v395, %v394
      %v646 = vpack.c.bf16 %v397, %v396
      %v647 = vpack.c.bf16 %v399, %v398
      %v648 = vpack.c.bf16 %v401, %v400
      %v649 = vpack.c.bf16 %v403, %v402
      %v650 = vpack.c.bf16 %v405, %v404
      %v651 = vpack.c.bf16 %v407, %v406
      %v652 = vpack.c.bf16 %v409, %v408
      %v653 = vpack.c.bf16 %v411, %v410
      %v654 = vpack.c.bf16 %v413, %v412
      %v655 = vpack.c.bf16 %v415, %v414
      %v656 = vpack.c.bf16 %v417, %v416
      %v657 = vpack.c.bf16 %v419, %v418
      %v658 = vpack.c.bf16 %v421, %v420
      %v659 = vpack.c.bf16 %v423, %v422
      %v660 = vpack.c.bf16 %v425, %v424
      %v661 = vpack.c.bf16 %v427, %v426
      %v662 = vpack.c.bf16 %v429, %v428
      %v663 = vpack.c.bf16 %v431, %v430
      %v664 = vpack.c.bf16 %v433, %v432
      %v665 = vpack.c.bf16 %v435, %v434
      %v666 = vpack.c.bf16 %v437, %v436
      %v667 = vpack.c.bf16 %v439, %v438
      %v668 = vpack.c.bf16 %v441, %v440
      %v669 = vpack.c.bf16 %v443, %v442
      %v670 = vpack.c.bf16 %v445, %v444
      %v671 = vpack.c.bf16 %v447, %v446
      %v672 = vpack.c.bf16 %v449, %v448
      %v673 = vpack.c.bf16 %v451, %v450
      %v674 = vpack.c.bf16 %v453, %v452
      %v675 = vpack.c.bf16 %v455, %v454
      %v676 = vpack.c.bf16 %v457, %v456
      %v677 = vpack.c.bf16 %v459, %v458
      %v678 = vpack.c.bf16 %v461, %v460
      %v679 = vpack.c.bf16 %v463, %v462
      %v680 = vpack.c.bf16 %v465, %v464
      %v681 = vpack.c.bf16 %v467, %v466
      %v682 = vpack.c.bf16 %v469, %v468
      %v683 = vpack.c.bf16 %v471, %v470
      %v684 = vpack.c.bf16 %v473, %v472
      %v685 = vpack.c.bf16 %v475, %v474
      %v686 = vpack.c.bf16 %v477, %v476
      %v687 = vpack.c.bf16 %v479, %v478
      %v688 = vpack.c.bf16 %v481, %v480
      %v689 = vpack.c.bf16 %v483, %v482
      %v690 = vpack.c.bf16 %v485, %v484
      %v691 = vpack.c.bf16 %v487, %v486
      %v692 = vpack.c.bf16 %v489, %v488
      %v693 = vpack.c.bf16 %v491, %v490
      %v694 = vpack.c.bf16 %v493, %v492
      %v695 = vpack.c.bf16 %v495, %v494
      %v696 = vpack.c.bf16 %v497, %v496
      %v697 = vpack.c.bf16 %v499, %v498
      %v698 = vpack.c.bf16 %v501, %v500
      %v699 = vpack.c.bf16 %v503, %v502
      %v700 = vpack.c.bf16 %v505, %v504
      %v701 = vpack.c.bf16 %v507, %v506
      %v702 = vpack.c.bf16 %v509, %v508
      %v703 = vpack.c.bf16 %v511, %v510
      %v704 = vpack.c.bf16 %v513, %v512
      %v705 = vpack.c.bf16 %v515, %v514
      %v706 = vpack.c.bf16 %v517, %v516
      %v707 = vpack.c.bf16 %v519, %v518
      %v708 = vpack.c.bf16 %v521, %v520
      %v709 = vpack.c.bf16 %v523, %v522
      %v710 = vpack.c.bf16 %v525, %v524
      %v711 = vpack.c.bf16 %v527, %v526
      %v712 = vpack.c.bf16 %v529, %v528
      %v713 = vpack.c.bf16 %v531, %v530
      %v714 = vpack.c.bf16 %v533, %v532
      %v715 = vpack.c.bf16 %v535, %v534
      %v716 = vpack.c.bf16 %v537, %v536
      %v717 = vpack.c.bf16 %v539, %v538
      %v718 = vpack.c.bf16 %v541, %v540
      %v719 = vpack.c.bf16 %v543, %v542
      %v720 = vpack.c.bf16 %v545, %v544
      %v721 = vpack.c.bf16 %v547, %v546
      %v722 = vpack.c.bf16 %v549, %v548
      %v723 = vpack.c.bf16 %v551, %v550
      %v724 = vpack.c.bf16 %v553, %v552
      %v725 = vpack.c.bf16 %v555, %v554
      %v726 = vpack.c.bf16 %v557, %v556
      %v727 = vpack.c.bf16 %v559, %v558
      %v728 = vpack.c.bf16 %v561, %v560
      %v729 = vpack.c.bf16 %v563, %v562
      %v730 = vpack.c.bf16 %v565, %v564
      %v731 = vpack.c.bf16 %v567, %v566
      %v732 = vpack.c.bf16 %v569, %v568
      %v733 = vpack.c.bf16 %v571, %v570
      %v734 = vpack.c.bf16 %v573, %v572
      %v735 = vpack.c.bf16 %v575, %v574
      %v736 = vpack.c.bf16 %v577, %v576
      %v737 = vpack.c.bf16 %v579, %v578
      %v738 = vpack.c.bf16 %v581, %v580
      %v739 = vpack.c.bf16 %v583, %v582
      %v740 = vpack.c.bf16 %v585, %v584
      %v741 = vpack.c.bf16 %v587, %v586
      %v742 = vpack.c.bf16 %v589, %v588
      %v743 = vpack.c.bf16 %v591, %v590
      %v744 = vpack.c.bf16 %v593, %v592
      %v745 = vpack.c.bf16 %v595, %v594
      %v746 = vpack.c.bf16 %v597, %v596
      %v747 = vpack.c.bf16 %v599, %v598
      %v748 = vpack.c.bf16 %v601, %v600
      %v749 = vpack.c.bf16 %v603, %v602
      %v750 = vpack.c.bf16 %v605, %v604
      %v751 = vpack.c.bf16 %v607, %v606
      %v752 = vpack.c.bf16 %v609, %v608
      %v753 = vpack.c.bf16 %v611, %v610
      %v754 = vpack.c.bf16 %v613, %v612
      %v755 = vpack.c.bf16 %v615, %v614
      %v756 = vpack.c.bf16 %v617, %v616
      %v757 = vpack.c.bf16 %v619, %v618
      %v758 = vpack.c.bf16 %v621, %v620
      %v759 = vpack.c.bf16 %v623, %v622
      %v760 = vpack.c.bf16 %v625, %v624
      %v761 = vpack.c.bf16 %v627, %v626
      %v762 = vpack.c.bf16 %v629, %v628
      %v763 = vpack.c.bf16 %v631, %v630
      %v764 = vpack.c.bf16 %v633, %v632
      %v765 = vpack.c.bf16 %v635, %v634
      %v766 = vpack.c.bf16 %v637, %v636
      %v767 = vpack.c.bf16 %v639, %v638
      %v768 = vld [vmem:[%s1] sm:$0xff]
      %v769 = vld [vmem:[%s1 + $0x8] sm:$0xff]
      %v770 = vld [vmem:[%s1 + $0x10] sm:$0xff]
      %v771 = vld [vmem:[%s1 + $0x18] sm:$0xff]
      %v772 = vld [vmem:[%s1 + $0x20] sm:$0xff]
      %v773 = vld [vmem:[%s1 + $0x28] sm:$0xff]
      %v774 = vld [vmem:[%s1 + $0x30] sm:$0xff]
      %v775 = vld [vmem:[%s1 + $0x38] sm:$0xff]
      %v776 = vld [vmem:[%s1 + $0x40] sm:$0xff]
      %v777 = vld [vmem:[%s1 + $0x48] sm:$0xff]
      %v778 = vld [vmem:[%s1 + $0x50] sm:$0xff]
      %v779 = vld [vmem:[%s1 + $0x58] sm:$0xff]
      %v780 = vld [vmem:[%s1 + $0x60] sm:$0xff]
      %v781 = vld [vmem:[%s1 + $0x68] sm:$0xff]
      %v782 = vld [vmem:[%s1 + $0x70] sm:$0xff]
      %v783 = vld [vmem:[%s1 + $0x78] sm:$0xff]
      %v784 = vld [vmem:[%s1 + $0x80] sm:$0xff]
      %v785 = vld [vmem:[%s1 + $0x88] sm:$0xff]
      %v786 = vld [vmem:[%s1 + $0x90] sm:$0xff]
      %v787 = vld [vmem:[%s1 + $0x98] sm:$0xff]
      %v788 = vld [vmem:[%s1 + $0xa0] sm:$0xff]
      %v789 = vld [vmem:[%s1 + $0xa8] sm:$0xff]
      %v790 = vld [vmem:[%s1 + $0xb0] sm:$0xff]
      %v791 = vld [vmem:[%s1 + $0xb8] sm:$0xff]
      %v792 = vld [vmem:[%s1 + $0xc0] sm:$0xff]
      %v793 = vld [vmem:[%s1 + $0xc8] sm:$0xff]
      %v794 = vld [vmem:[%s1 + $0xd0] sm:$0xff]
      %v795 = vld [vmem:[%s1 + $0xd8] sm:$0xff]
      %v796 = vld [vmem:[%s1 + $0xe0] sm:$0xff]
      %v797 = vld [vmem:[%s1 + $0xe8] sm:$0xff]
      %v798 = vld [vmem:[%s1 + $0xf0] sm:$0xff]
      %v799 = vld [vmem:[%s1 + $0xf8] sm:$0xff]
      %v800 = vld [vmem:[%s1 + $0x100] sm:$0xff]
      %v801 = vld [vmem:[%s1 + $0x108] sm:$0xff]
      %v802 = vld [vmem:[%s1 + $0x110] sm:$0xff]
      %v803 = vld [vmem:[%s1 + $0x118] sm:$0xff]
      %v804 = vld [vmem:[%s1 + $0x120] sm:$0xff]
      %v805 = vld [vmem:[%s1 + $0x128] sm:$0xff]
      %v806 = vld [vmem:[%s1 + $0x130] sm:$0xff]
      %v807 = vld [vmem:[%s1 + $0x138] sm:$0xff]
      %v808 = vld [vmem:[%s1 + $0x140] sm:$0xff]
      %v809 = vld [vmem:[%s1 + $0x148] sm:$0xff]
      %v810 = vld [vmem:[%s1 + $0x150] sm:$0xff]
      %v811 = vld [vmem:[%s1 + $0x158] sm:$0xff]
      %v812 = vld [vmem:[%s1 + $0x160] sm:$0xff]
      %v813 = vld [vmem:[%s1 + $0x168] sm:$0xff]
      %v814 = vld [vmem:[%s1 + $0x170] sm:$0xff]
      %v815 = vld [vmem:[%s1 + $0x178] sm:$0xff]
      %v816 = vld [vmem:[%s1 + $0x180] sm:$0xff]
      %v817 = vld [vmem:[%s1 + $0x188] sm:$0xff]
      %v818 = vld [vmem:[%s1 + $0x190] sm:$0xff]
      %v819 = vld [vmem:[%s1 + $0x198] sm:$0xff]
      %v820 = vld [vmem:[%s1 + $0x1a0] sm:$0xff]
      %v821 = vld [vmem:[%s1 + $0x1a8] sm:$0xff]
      %v822 = vld [vmem:[%s1 + $0x1b0] sm:$0xff]
      %v823 = vld [vmem:[%s1 + $0x1b8] sm:$0xff]
      %v824 = vld [vmem:[%s1 + $0x1c0] sm:$0xff]
      %v825 = vld [vmem:[%s1 + $0x1c8] sm:$0xff]
      %v826 = vld [vmem:[%s1 + $0x1d0] sm:$0xff]
      %v827 = vld [vmem:[%s1 + $0x1d8] sm:$0xff]
      %v828 = vld [vmem:[%s1 + $0x1e0] sm:$0xff]
      %v829 = vld [vmem:[%s1 + $0x1e8] sm:$0xff]
      %v830 = vld [vmem:[%s1 + $0x1f0] sm:$0xff]
      %v831 = vld [vmem:[%s1 + $0x1f8] sm:$0xff]
      %v832 = vld [vmem:[%s1 + $0x200] sm:$0xff]
      %v833 = vld [vmem:[%s1 + $0x208] sm:$0xff]
      %v834 = vld [vmem:[%s1 + $0x210] sm:$0xff]
      %v835 = vld [vmem:[%s1 + $0x218] sm:$0xff]
      %v836 = vld [vmem:[%s1 + $0x220] sm:$0xff]
      %v837 = vld [vmem:[%s1 + $0x228] sm:$0xff]
      %v838 = vld [vmem:[%s1 + $0x230] sm:$0xff]
      %v839 = vld [vmem:[%s1 + $0x238] sm:$0xff]
      %v840 = vld [vmem:[%s1 + $0x240] sm:$0xff]
      %v841 = vld [vmem:[%s1 + $0x248] sm:$0xff]
      %v842 = vld [vmem:[%s1 + $0x250] sm:$0xff]
      %v843 = vld [vmem:[%s1 + $0x258] sm:$0xff]
      %v844 = vld [vmem:[%s1 + $0x260] sm:$0xff]
      %v845 = vld [vmem:[%s1 + $0x268] sm:$0xff]
      %v846 = vld [vmem:[%s1 + $0x270] sm:$0xff]
      %v847 = vld [vmem:[%s1 + $0x278] sm:$0xff]
      %v848 = vld [vmem:[%s1 + $0x280] sm:$0xff]
      %v849 = vld [vmem:[%s1 + $0x288] sm:$0xff]
      %v850 = vld [vmem:[%s1 + $0x290] sm:$0xff]
      %v851 = vld [vmem:[%s1 + $0x298] sm:$0xff]
      %v852 = vld [vmem:[%s1 + $0x2a0] sm:$0xff]
      %v853 = vld [vmem:[%s1 + $0x2a8] sm:$0xff]
      %v854 = vld [vmem:[%s1 + $0x2b0] sm:$0xff]
      %v855 = vld [vmem:[%s1 + $0x2b8] sm:$0xff]
      %v856 = vld [vmem:[%s1 + $0x2c0] sm:$0xff]
      %v857 = vld [vmem:[%s1 + $0x2c8] sm:$0xff]
      %v858 = vld [vmem:[%s1 + $0x2d0] sm:$0xff]
      %v859 = vld [vmem:[%s1 + $0x2d8] sm:$0xff]
      %v860 = vld [vmem:[%s1 + $0x2e0] sm:$0xff]
      %v861 = vld [vmem:[%s1 + $0x2e8] sm:$0xff]
      %v862 = vld [vmem:[%s1 + $0x2f0] sm:$0xff]
      %v863 = vld [vmem:[%s1 + $0x2f8] sm:$0xff]
      %v864 = vld [vmem:[%s1 + $0x300] sm:$0xff]
      %v865 = vld [vmem:[%s1 + $0x308] sm:$0xff]
      %v866 = vld [vmem:[%s1 + $0x310] sm:$0xff]
      %v867 = vld [vmem:[%s1 + $0x318] sm:$0xff]
      %v868 = vld [vmem:[%s1 + $0x320] sm:$0xff]
      %v869 = vld [vmem:[%s1 + $0x328] sm:$0xff]
      %v870 = vld [vmem:[%s1 + $0x330] sm:$0xff]
      %v871 = vld [vmem:[%s1 + $0x338] sm:$0xff]
      %v872 = vld [vmem:[%s1 + $0x340] sm:$0xff]
      %v873 = vld [vmem:[%s1 + $0x348] sm:$0xff]
      %v874 = vld [vmem:[%s1 + $0x350] sm:$0xff]
      %v875 = vld [vmem:[%s1 + $0x358] sm:$0xff]
      %v876 = vld [vmem:[%s1 + $0x360] sm:$0xff]
      %v877 = vld [vmem:[%s1 + $0x368] sm:$0xff]
      %v878 = vld [vmem:[%s1 + $0x370] sm:$0xff]
      %v879 = vld [vmem:[%s1 + $0x378] sm:$0xff]
      %v880 = vld [vmem:[%s1 + $0x380] sm:$0xff]
      %v881 = vld [vmem:[%s1 + $0x388] sm:$0xff]
      %v882 = vld [vmem:[%s1 + $0x390] sm:$0xff]
      %v883 = vld [vmem:[%s1 + $0x398] sm:$0xff]
      %v884 = vld [vmem:[%s1 + $0x3a0] sm:$0xff]
      %v885 = vld [vmem:[%s1 + $0x3a8] sm:$0xff]
      %v886 = vld [vmem:[%s1 + $0x3b0] sm:$0xff]
      %v887 = vld [vmem:[%s1 + $0x3b8] sm:$0xff]
      %v888 = vld [vmem:[%s1 + $0x3c0] sm:$0xff]
      %v889 = vld [vmem:[%s1 + $0x3c8] sm:$0xff]
      %v890 = vld [vmem:[%s1 + $0x3d0] sm:$0xff]
      %v891 = vld [vmem:[%s1 + $0x3d8] sm:$0xff]
      %v892 = vld [vmem:[%s1 + $0x3e0] sm:$0xff]
      %v893 = vld [vmem:[%s1 + $0x3e8] sm:$0xff]
      %v894 = vld [vmem:[%s1 + $0x3f0] sm:$0xff]
      %v895 = vld [vmem:[%s1 + $0x3f8] sm:$0xff]
      %v896 = vld [vmem:[%s1 + $0x400] sm:$0xff]
      %v897 = vld [vmem:[%s1 + $0x408] sm:$0xff]
      %v898 = vld [vmem:[%s1 + $0x410] sm:$0xff]
      %v899 = vld [vmem:[%s1 + $0x418] sm:$0xff]
      %v900 = vld [vmem:[%s1 + $0x420] sm:$0xff]
      %v901 = vld [vmem:[%s1 + $0x428] sm:$0xff]
      %v902 = vld [vmem:[%s1 + $0x430] sm:$0xff]
      %v903 = vld [vmem:[%s1 + $0x438] sm:$0xff]
      %v904 = vld [vmem:[%s1 + $0x440] sm:$0xff]
      %v905 = vld [vmem:[%s1 + $0x448] sm:$0xff]
      %v906 = vld [vmem:[%s1 + $0x450] sm:$0xff]
      %v907 = vld [vmem:[%s1 + $0x458] sm:$0xff]
      %v908 = vld [vmem:[%s1 + $0x460] sm:$0xff]
      %v909 = vld [vmem:[%s1 + $0x468] sm:$0xff]
      %v910 = vld [vmem:[%s1 + $0x470] sm:$0xff]
      %v911 = vld [vmem:[%s1 + $0x478] sm:$0xff]
      %v912 = vld [vmem:[%s1 + $0x480] sm:$0xff]
      %v913 = vld [vmem:[%s1 + $0x488] sm:$0xff]
      %v914 = vld [vmem:[%s1 + $0x490] sm:$0xff]
      %v915 = vld [vmem:[%s1 + $0x498] sm:$0xff]
      %v916 = vld [vmem:[%s1 + $0x4a0] sm:$0xff]
      %v917 = vld [vmem:[%s1 + $0x4a8] sm:$0xff]
      %v918 = vld [vmem:[%s1 + $0x4b0] sm:$0xff]
      %v919 = vld [vmem:[%s1 + $0x4b8] sm:$0xff]
      %v920 = vld [vmem:[%s1 + $0x4c0] sm:$0xff]
      %v921 = vld [vmem:[%s1 + $0x4c8] sm:$0xff]
      %v922 = vld [vmem:[%s1 + $0x4d0] sm:$0xff]
      %v923 = vld [vmem:[%s1 + $0x4d8] sm:$0xff]
      %v924 = vld [vmem:[%s1 + $0x4e0] sm:$0xff]
      %v925 = vld [vmem:[%s1 + $0x4e8] sm:$0xff]
      %v926 = vld [vmem:[%s1 + $0x4f0] sm:$0xff]
      %v927 = vld [vmem:[%s1 + $0x4f8] sm:$0xff]
      %v928 = vld [vmem:[%s1 + $0x500] sm:$0xff]
      %v929 = vld [vmem:[%s1 + $0x508] sm:$0xff]
      %v930 = vld [vmem:[%s1 + $0x510] sm:$0xff]
      %v931 = vld [vmem:[%s1 + $0x518] sm:$0xff]
      %v932 = vld [vmem:[%s1 + $0x520] sm:$0xff]
      %v933 = vld [vmem:[%s1 + $0x528] sm:$0xff]
      %v934 = vld [vmem:[%s1 + $0x530] sm:$0xff]
      %v935 = vld [vmem:[%s1 + $0x538] sm:$0xff]
      %v936 = vld [vmem:[%s1 + $0x540] sm:$0xff]
      %v937 = vld [vmem:[%s1 + $0x548] sm:$0xff]
      %v938 = vld [vmem:[%s1 + $0x550] sm:$0xff]
      %v939 = vld [vmem:[%s1 + $0x558] sm:$0xff]
      %v940 = vld [vmem:[%s1 + $0x560] sm:$0xff]
      %v941 = vld [vmem:[%s1 + $0x568] sm:$0xff]
      %v942 = vld [vmem:[%s1 + $0x570] sm:$0xff]
      %v943 = vld [vmem:[%s1 + $0x578] sm:$0xff]
      %v944 = vld [vmem:[%s1 + $0x580] sm:$0xff]
      %v945 = vld [vmem:[%s1 + $0x588] sm:$0xff]
      %v946 = vld [vmem:[%s1 + $0x590] sm:$0xff]
      %v947 = vld [vmem:[%s1 + $0x598] sm:$0xff]
      %v948 = vld [vmem:[%s1 + $0x5a0] sm:$0xff]
      %v949 = vld [vmem:[%s1 + $0x5a8] sm:$0xff]
      %v950 = vld [vmem:[%s1 + $0x5b0] sm:$0xff]
      %v951 = vld [vmem:[%s1 + $0x5b8] sm:$0xff]
      %v952 = vld [vmem:[%s1 + $0x5c0] sm:$0xff]
      %v953 = vld [vmem:[%s1 + $0x5c8] sm:$0xff]
      %v954 = vld [vmem:[%s1 + $0x5d0] sm:$0xff]
      %v955 = vld [vmem:[%s1 + $0x5d8] sm:$0xff]
      %v956 = vld [vmem:[%s1 + $0x5e0] sm:$0xff]
      %v957 = vld [vmem:[%s1 + $0x5e8] sm:$0xff]
      %v958 = vld [vmem:[%s1 + $0x5f0] sm:$0xff]
      %v959 = vld [vmem:[%s1 + $0x5f8] sm:$0xff]
      %v960 = vld [vmem:[%s1 + $0x600] sm:$0xff]
      %v961 = vld [vmem:[%s1 + $0x608] sm:$0xff]
      %v962 = vld [vmem:[%s1 + $0x610] sm:$0xff]
      %v963 = vld [vmem:[%s1 + $0x618] sm:$0xff]
      %v964 = vld [vmem:[%s1 + $0x620] sm:$0xff]
      %v965 = vld [vmem:[%s1 + $0x628] sm:$0xff]
      %v966 = vld [vmem:[%s1 + $0x630] sm:$0xff]
      %v967 = vld [vmem:[%s1 + $0x638] sm:$0xff]
      %v968 = vld [vmem:[%s1 + $0x640] sm:$0xff]
      %v969 = vld [vmem:[%s1 + $0x648] sm:$0xff]
      %v970 = vld [vmem:[%s1 + $0x650] sm:$0xff]
      %v971 = vld [vmem:[%s1 + $0x658] sm:$0xff]
      %v972 = vld [vmem:[%s1 + $0x660] sm:$0xff]
      %v973 = vld [vmem:[%s1 + $0x668] sm:$0xff]
      %v974 = vld [vmem:[%s1 + $0x670] sm:$0xff]
      %v975 = vld [vmem:[%s1 + $0x678] sm:$0xff]
      %v976 = vld [vmem:[%s1 + $0x680] sm:$0xff]
      %v977 = vld [vmem:[%s1 + $0x688] sm:$0xff]
      %v978 = vld [vmem:[%s1 + $0x690] sm:$0xff]
      %v979 = vld [vmem:[%s1 + $0x698] sm:$0xff]
      %v980 = vld [vmem:[%s1 + $0x6a0] sm:$0xff]
      %v981 = vld [vmem:[%s1 + $0x6a8] sm:$0xff]
      %v982 = vld [vmem:[%s1 + $0x6b0] sm:$0xff]
      %v983 = vld [vmem:[%s1 + $0x6b8] sm:$0xff]
      %v984 = vld [vmem:[%s1 + $0x6c0] sm:$0xff]
      %v985 = vld [vmem:[%s1 + $0x6c8] sm:$0xff]
      %v986 = vld [vmem:[%s1 + $0x6d0] sm:$0xff]
      %v987 = vld [vmem:[%s1 + $0x6d8] sm:$0xff]
      %v988 = vld [vmem:[%s1 + $0x6e0] sm:$0xff]
      %v989 = vld [vmem:[%s1 + $0x6e8] sm:$0xff]
      %v990 = vld [vmem:[%s1 + $0x6f0] sm:$0xff]
      %v991 = vld [vmem:[%s1 + $0x6f8] sm:$0xff]
      %v992 = vld [vmem:[%s1 + $0x700] sm:$0xff]
      %v993 = vld [vmem:[%s1 + $0x708] sm:$0xff]
      %v994 = vld [vmem:[%s1 + $0x710] sm:$0xff]
      %v995 = vld [vmem:[%s1 + $0x718] sm:$0xff]
      %v996 = vld [vmem:[%s1 + $0x720] sm:$0xff]
      %v997 = vld [vmem:[%s1 + $0x728] sm:$0xff]
      %v998 = vld [vmem:[%s1 + $0x730] sm:$0xff]
      %v999 = vld [vmem:[%s1 + $0x738] sm:$0xff]
      %v1000 = vld [vmem:[%s1 + $0x740] sm:$0xff]
      %v1001 = vld [vmem:[%s1 + $0x748] sm:$0xff]
      %v1002 = vld [vmem:[%s1 + $0x750] sm:$0xff]
      %v1003 = vld [vmem:[%s1 + $0x758] sm:$0xff]
      %v1004 = vld [vmem:[%s1 + $0x760] sm:$0xff]
      %v1005 = vld [vmem:[%s1 + $0x768] sm:$0xff]
      %v1006 = vld [vmem:[%s1 + $0x770] sm:$0xff]
      %v1007 = vld [vmem:[%s1 + $0x778] sm:$0xff]
      %v1008 = vld [vmem:[%s1 + $0x780] sm:$0xff]
      %v1009 = vld [vmem:[%s1 + $0x788] sm:$0xff]
      %v1010 = vld [vmem:[%s1 + $0x790] sm:$0xff]
      %v1011 = vld [vmem:[%s1 + $0x798] sm:$0xff]
      %v1012 = vld [vmem:[%s1 + $0x7a0] sm:$0xff]
      %v1013 = vld [vmem:[%s1 + $0x7a8] sm:$0xff]
      %v1014 = vld [vmem:[%s1 + $0x7b0] sm:$0xff]
      %v1015 = vld [vmem:[%s1 + $0x7b8] sm:$0xff]
      %v1016 = vld [vmem:[%s1 + $0x7c0] sm:$0xff]
      %v1017 = vld [vmem:[%s1 + $0x7c8] sm:$0xff]
      %v1018 = vld [vmem:[%s1 + $0x7d0] sm:$0xff]
      %v1019 = vld [vmem:[%s1 + $0x7d8] sm:$0xff]
      %v1020 = vld [vmem:[%s1 + $0x7e0] sm:$0xff]
      %v1021 = vld [vmem:[%s1 + $0x7e8] sm:$0xff]
      %v1022 = vld [vmem:[%s1 + $0x7f0] sm:$0xff]
      %v1023 = vld [vmem:[%s1 + $0x7f8] sm:$0xff]
      %v1024 = vld [vmem:[%s1 + $0x800] sm:$0xff]
      %v1025 = vld [vmem:[%s1 + $0x808] sm:$0xff]
      %v1026 = vld [vmem:[%s1 + $0x810] sm:$0xff]
      %v1027 = vld [vmem:[%s1 + $0x818] sm:$0xff]
      %v1028 = vld [vmem:[%s1 + $0x820] sm:$0xff]
      %v1029 = vld [vmem:[%s1 + $0x828] sm:$0xff]
      %v1030 = vld [vmem:[%s1 + $0x830] sm:$0xff]
      %v1031 = vld [vmem:[%s1 + $0x838] sm:$0xff]
      %v1032 = vld [vmem:[%s1 + $0x840] sm:$0xff]
      %v1033 = vld [vmem:[%s1 + $0x848] sm:$0xff]
      %v1034 = vld [vmem:[%s1 + $0x850] sm:$0xff]
      %v1035 = vld [vmem:[%s1 + $0x858] sm:$0xff]
      %v1036 = vld [vmem:[%s1 + $0x860] sm:$0xff]
      %v1037 = vld [vmem:[%s1 + $0x868] sm:$0xff]
      %v1038 = vld [vmem:[%s1 + $0x870] sm:$0xff]
      %v1039 = vld [vmem:[%s1 + $0x878] sm:$0xff]
      %v1040 = vld [vmem:[%s1 + $0x880] sm:$0xff]
      %v1041 = vld [vmem:[%s1 + $0x888] sm:$0xff]
      %v1042 = vld [vmem:[%s1 + $0x890] sm:$0xff]
      %v1043 = vld [vmem:[%s1 + $0x898] sm:$0xff]
      %v1044 = vld [vmem:[%s1 + $0x8a0] sm:$0xff]
      %v1045 = vld [vmem:[%s1 + $0x8a8] sm:$0xff]
      %v1046 = vld [vmem:[%s1 + $0x8b0] sm:$0xff]
      %v1047 = vld [vmem:[%s1 + $0x8b8] sm:$0xff]
      %v1048 = vld [vmem:[%s1 + $0x8c0] sm:$0xff]
      %v1049 = vld [vmem:[%s1 + $0x8c8] sm:$0xff]
      %v1050 = vld [vmem:[%s1 + $0x8d0] sm:$0xff]
      %v1051 = vld [vmem:[%s1 + $0x8d8] sm:$0xff]
      %v1052 = vld [vmem:[%s1 + $0x8e0] sm:$0xff]
      %v1053 = vld [vmem:[%s1 + $0x8e8] sm:$0xff]
      %v1054 = vld [vmem:[%s1 + $0x8f0] sm:$0xff]
      %v1055 = vld [vmem:[%s1 + $0x8f8] sm:$0xff]
      %v1344 = vunpack.c.l.b16 %v768
      %v1345 = vunpack.c.h.b16 %v768
      %v1346 = vunpack.c.l.b16 %v769
      %v1347 = vunpack.c.h.b16 %v769
      %v1348 = vunpack.c.l.b16 %v770
      %v1349 = vunpack.c.h.b16 %v770
      %v1350 = vunpack.c.l.b16 %v771
      %v1351 = vunpack.c.h.b16 %v771
      %v1352 = vunpack.c.l.b16 %v772
      %v1353 = vunpack.c.h.b16 %v772
      %v1354 = vunpack.c.l.b16 %v773
      %v1355 = vunpack.c.h.b16 %v773
      %v1356 = vunpack.c.l.b16 %v774
      %v1357 = vunpack.c.h.b16 %v774
      %v1358 = vunpack.c.l.b16 %v775
      %v1359 = vunpack.c.h.b16 %v775
      %v1360 = vunpack.c.l.b16 %v776
      %v1361 = vunpack.c.h.b16 %v776
      %v1362 = vunpack.c.l.b16 %v777
      %v1363 = vunpack.c.h.b16 %v777
      %v1364 = vunpack.c.l.b16 %v778
      %v1365 = vunpack.c.h.b16 %v778
      %v1366 = vunpack.c.l.b16 %v779
      %v1367 = vunpack.c.h.b16 %v779
      %v1368 = vunpack.c.l.b16 %v780
      %v1369 = vunpack.c.h.b16 %v780
      %v1370 = vunpack.c.l.b16 %v781
      %v1371 = vunpack.c.h.b16 %v781
      %v1372 = vunpack.c.l.b16 %v782
      %v1373 = vunpack.c.h.b16 %v782
      %v1374 = vunpack.c.l.b16 %v783
      %v1375 = vunpack.c.h.b16 %v783
      %v1376 = vunpack.c.l.b16 %v784
      %v1377 = vunpack.c.h.b16 %v784
      %v1378 = vunpack.c.l.b16 %v785
      %v1379 = vunpack.c.h.b16 %v785
      %v1380 = vunpack.c.l.b16 %v786
      %v1381 = vunpack.c.h.b16 %v786
      %v1382 = vunpack.c.l.b16 %v787
      %v1383 = vunpack.c.h.b16 %v787
      %v1384 = vunpack.c.l.b16 %v788
      %v1385 = vunpack.c.h.b16 %v788
      %v1386 = vunpack.c.l.b16 %v789
      %v1387 = vunpack.c.h.b16 %v789
      %v1388 = vunpack.c.l.b16 %v790
      %v1389 = vunpack.c.h.b16 %v790
      %v1390 = vunpack.c.l.b16 %v791
      %v1391 = vunpack.c.h.b16 %v791
      %v1392 = vunpack.c.l.b16 %v792
      %v1393 = vunpack.c.h.b16 %v792
      %v1394 = vunpack.c.l.b16 %v793
      %v1395 = vunpack.c.h.b16 %v793
      %v1396 = vunpack.c.l.b16 %v794
      %v1397 = vunpack.c.h.b16 %v794
      %v1398 = vunpack.c.l.b16 %v795
      %v1399 = vunpack.c.h.b16 %v795
      %v1400 = vunpack.c.l.b16 %v796
      %v1401 = vunpack.c.h.b16 %v796
      %v1402 = vunpack.c.l.b16 %v797
      %v1403 = vunpack.c.h.b16 %v797
      %v1404 = vunpack.c.l.b16 %v798
      %v1405 = vunpack.c.h.b16 %v798
      %v1406 = vunpack.c.l.b16 %v799
      %v1407 = vunpack.c.h.b16 %v799
      %v1408 = vunpack.c.l.b16 %v800
      %v1409 = vunpack.c.h.b16 %v800
      %v1410 = vunpack.c.l.b16 %v801
      %v1411 = vunpack.c.h.b16 %v801
      %v1412 = vunpack.c.l.b16 %v802
      %v1413 = vunpack.c.h.b16 %v802
      %v1414 = vunpack.c.l.b16 %v803
      %v1415 = vunpack.c.h.b16 %v803
      %v1416 = vunpack.c.l.b16 %v804
      %v1417 = vunpack.c.h.b16 %v804
      %v1418 = vunpack.c.l.b16 %v805
      %v1419 = vunpack.c.h.b16 %v805
      %v1420 = vunpack.c.l.b16 %v806
      %v1421 = vunpack.c.h.b16 %v806
      %v1422 = vunpack.c.l.b16 %v807
      %v1423 = vunpack.c.h.b16 %v807
      %v1424 = vunpack.c.l.b16 %v808
      %v1425 = vunpack.c.h.b16 %v808
      %v1426 = vunpack.c.l.b16 %v809
      %v1427 = vunpack.c.h.b16 %v809
      %v1428 = vunpack.c.l.b16 %v810
      %v1429 = vunpack.c.h.b16 %v810
      %v1430 = vunpack.c.l.b16 %v811
      %v1431 = vunpack.c.h.b16 %v811
      %v1432 = vunpack.c.l.b16 %v812
      %v1433 = vunpack.c.h.b16 %v812
      %v1434 = vunpack.c.l.b16 %v813
      %v1435 = vunpack.c.h.b16 %v813
      %v1436 = vunpack.c.l.b16 %v814
      %v1437 = vunpack.c.h.b16 %v814
      %v1438 = vunpack.c.l.b16 %v815
      %v1439 = vunpack.c.h.b16 %v815
      %v1440 = vunpack.c.l.b16 %v816
      %v1441 = vunpack.c.h.b16 %v816
      %v1442 = vunpack.c.l.b16 %v817
      %v1443 = vunpack.c.h.b16 %v817
      %v1444 = vunpack.c.l.b16 %v818
      %v1445 = vunpack.c.h.b16 %v818
      %v1446 = vunpack.c.l.b16 %v819
      %v1447 = vunpack.c.h.b16 %v819
      %v1448 = vunpack.c.l.b16 %v820
      %v1449 = vunpack.c.h.b16 %v820
      %v1450 = vunpack.c.l.b16 %v821
      %v1451 = vunpack.c.h.b16 %v821
      %v1452 = vunpack.c.l.b16 %v822
      %v1453 = vunpack.c.h.b16 %v822
      %v1454 = vunpack.c.l.b16 %v823
      %v1455 = vunpack.c.h.b16 %v823
      %v1456 = vunpack.c.l.b16 %v824
      %v1457 = vunpack.c.h.b16 %v824
      %v1458 = vunpack.c.l.b16 %v825
      %v1459 = vunpack.c.h.b16 %v825
      %v1460 = vunpack.c.l.b16 %v826
      %v1461 = vunpack.c.h.b16 %v826
      %v1462 = vunpack.c.l.b16 %v827
      %v1463 = vunpack.c.h.b16 %v827
      %v1464 = vunpack.c.l.b16 %v828
      %v1465 = vunpack.c.h.b16 %v828
      %v1466 = vunpack.c.l.b16 %v829
      %v1467 = vunpack.c.h.b16 %v829
      %v1468 = vunpack.c.l.b16 %v830
      %v1469 = vunpack.c.h.b16 %v830
      %v1470 = vunpack.c.l.b16 %v831
      %v1471 = vunpack.c.h.b16 %v831
      %v1472 = vunpack.c.l.b16 %v832
      %v1473 = vunpack.c.h.b16 %v832
      %v1474 = vunpack.c.l.b16 %v833
      %v1475 = vunpack.c.h.b16 %v833
      %v1476 = vunpack.c.l.b16 %v834
      %v1477 = vunpack.c.h.b16 %v834
      %v1478 = vunpack.c.l.b16 %v835
      %v1479 = vunpack.c.h.b16 %v835
      %v1480 = vunpack.c.l.b16 %v836
      %v1481 = vunpack.c.h.b16 %v836
      %v1482 = vunpack.c.l.b16 %v837
      %v1483 = vunpack.c.h.b16 %v837
      %v1484 = vunpack.c.l.b16 %v838
      %v1485 = vunpack.c.h.b16 %v838
      %v1486 = vunpack.c.l.b16 %v839
      %v1487 = vunpack.c.h.b16 %v839
      %v1488 = vunpack.c.l.b16 %v840
      %v1489 = vunpack.c.h.b16 %v840
      %v1490 = vunpack.c.l.b16 %v841
      %v1491 = vunpack.c.h.b16 %v841
      %v1492 = vunpack.c.l.b16 %v842
      %v1493 = vunpack.c.h.b16 %v842
      %v1494 = vunpack.c.l.b16 %v843
      %v1495 = vunpack.c.h.b16 %v843
      %v1496 = vunpack.c.l.b16 %v844
      %v1497 = vunpack.c.h.b16 %v844
      %v1498 = vunpack.c.l.b16 %v845
      %v1499 = vunpack.c.h.b16 %v845
      %v1500 = vunpack.c.l.b16 %v846
      %v1501 = vunpack.c.h.b16 %v846
      %v1502 = vunpack.c.l.b16 %v847
      %v1503 = vunpack.c.h.b16 %v847
      %v1504 = vunpack.c.l.b16 %v848
      %v1505 = vunpack.c.h.b16 %v848
      %v1506 = vunpack.c.l.b16 %v849
      %v1507 = vunpack.c.h.b16 %v849
      %v1508 = vunpack.c.l.b16 %v850
      %v1509 = vunpack.c.h.b16 %v850
      %v1510 = vunpack.c.l.b16 %v851
      %v1511 = vunpack.c.h.b16 %v851
      %v1512 = vunpack.c.l.b16 %v852
      %v1513 = vunpack.c.h.b16 %v852
      %v1514 = vunpack.c.l.b16 %v853
      %v1515 = vunpack.c.h.b16 %v853
      %v1516 = vunpack.c.l.b16 %v854
      %v1517 = vunpack.c.h.b16 %v854
      %v1518 = vunpack.c.l.b16 %v855
      %v1519 = vunpack.c.h.b16 %v855
      %v1520 = vunpack.c.l.b16 %v856
      %v1521 = vunpack.c.h.b16 %v856
      %v1522 = vunpack.c.l.b16 %v857
      %v1523 = vunpack.c.h.b16 %v857
      %v1524 = vunpack.c.l.b16 %v858
      %v1525 = vunpack.c.h.b16 %v858
      %v1526 = vunpack.c.l.b16 %v859
      %v1527 = vunpack.c.h.b16 %v859
      %v1528 = vunpack.c.l.b16 %v860
      %v1529 = vunpack.c.h.b16 %v860
      %v1530 = vunpack.c.l.b16 %v861
      %v1531 = vunpack.c.h.b16 %v861
      %v1532 = vunpack.c.l.b16 %v862
      %v1533 = vunpack.c.h.b16 %v862
      %v1534 = vunpack.c.l.b16 %v863
      %v1535 = vunpack.c.h.b16 %v863
      %v1536 = vunpack.c.l.b16 %v864
      %v1537 = vunpack.c.h.b16 %v864
      %v1538 = vunpack.c.l.b16 %v865
      %v1539 = vunpack.c.h.b16 %v865
      %v1540 = vunpack.c.l.b16 %v866
      %v1541 = vunpack.c.h.b16 %v866
      %v1542 = vunpack.c.l.b16 %v867
      %v1543 = vunpack.c.h.b16 %v867
      %v1544 = vunpack.c.l.b16 %v868
      %v1545 = vunpack.c.h.b16 %v868
      %v1546 = vunpack.c.l.b16 %v869
      %v1547 = vunpack.c.h.b16 %v869
      %v1548 = vunpack.c.l.b16 %v870
      %v1549 = vunpack.c.h.b16 %v870
      %v1550 = vunpack.c.l.b16 %v871
      %v1551 = vunpack.c.h.b16 %v871
      %v1552 = vunpack.c.l.b16 %v872
      %v1553 = vunpack.c.h.b16 %v872
      %v1554 = vunpack.c.l.b16 %v873
      %v1555 = vunpack.c.h.b16 %v873
      %v1556 = vunpack.c.l.b16 %v874
      %v1557 = vunpack.c.h.b16 %v874
      %v1558 = vunpack.c.l.b16 %v875
      %v1559 = vunpack.c.h.b16 %v875
      %v1560 = vunpack.c.l.b16 %v876
      %v1561 = vunpack.c.h.b16 %v876
      %v1562 = vunpack.c.l.b16 %v877
      %v1563 = vunpack.c.h.b16 %v877
      %v1564 = vunpack.c.l.b16 %v878
      %v1565 = vunpack.c.h.b16 %v878
      %v1566 = vunpack.c.l.b16 %v879
      %v1567 = vunpack.c.h.b16 %v879
      %v1568 = vunpack.c.l.b16 %v880
      %v1569 = vunpack.c.h.b16 %v880
      %v1570 = vunpack.c.l.b16 %v881
      %v1571 = vunpack.c.h.b16 %v881
      %v1572 = vunpack.c.l.b16 %v882
      %v1573 = vunpack.c.h.b16 %v882
      %v1574 = vunpack.c.l.b16 %v883
      %v1575 = vunpack.c.h.b16 %v883
      %v1576 = vunpack.c.l.b16 %v884
      %v1577 = vunpack.c.h.b16 %v884
      %v1578 = vunpack.c.l.b16 %v885
      %v1579 = vunpack.c.h.b16 %v885
      %v1580 = vunpack.c.l.b16 %v886
      %v1581 = vunpack.c.h.b16 %v886
      %v1582 = vunpack.c.l.b16 %v887
      %v1583 = vunpack.c.h.b16 %v887
      %v1584 = vunpack.c.l.b16 %v888
      %v1585 = vunpack.c.h.b16 %v888
      %v1586 = vunpack.c.l.b16 %v889
      %v1587 = vunpack.c.h.b16 %v889
      %v1588 = vunpack.c.l.b16 %v890
      %v1589 = vunpack.c.h.b16 %v890
      %v1590 = vunpack.c.l.b16 %v891
      %v1591 = vunpack.c.h.b16 %v891
      %v1592 = vunpack.c.l.b16 %v892
      %v1593 = vunpack.c.h.b16 %v892
      %v1594 = vunpack.c.l.b16 %v893
      %v1595 = vunpack.c.h.b16 %v893
      %v1596 = vunpack.c.l.b16 %v894
      %v1597 = vunpack.c.h.b16 %v894
      %v1598 = vunpack.c.l.b16 %v895
      %v1599 = vunpack.c.h.b16 %v895
      %v1600 = vunpack.c.l.b16 %v896
      %v1601 = vunpack.c.h.b16 %v896
      %v1602 = vunpack.c.l.b16 %v897
      %v1603 = vunpack.c.h.b16 %v897
      %v1604 = vunpack.c.l.b16 %v898
      %v1605 = vunpack.c.h.b16 %v898
      %v1606 = vunpack.c.l.b16 %v899
      %v1607 = vunpack.c.h.b16 %v899
      %v1608 = vunpack.c.l.b16 %v900
      %v1609 = vunpack.c.h.b16 %v900
      %v1610 = vunpack.c.l.b16 %v901
      %v1611 = vunpack.c.h.b16 %v901
      %v1612 = vunpack.c.l.b16 %v902
      %v1613 = vunpack.c.h.b16 %v902
      %v1614 = vunpack.c.l.b16 %v903
      %v1615 = vunpack.c.h.b16 %v903
      %v1616 = vunpack.c.l.b16 %v904
      %v1617 = vunpack.c.h.b16 %v904
      %v1618 = vunpack.c.l.b16 %v905
      %v1619 = vunpack.c.h.b16 %v905
      %v1620 = vunpack.c.l.b16 %v906
      %v1621 = vunpack.c.h.b16 %v906
      %v1622 = vunpack.c.l.b16 %v907
      %v1623 = vunpack.c.h.b16 %v907
      %v1624 = vunpack.c.l.b16 %v908
      %v1625 = vunpack.c.h.b16 %v908
      %v1626 = vunpack.c.l.b16 %v909
      %v1627 = vunpack.c.h.b16 %v909
      %v1628 = vunpack.c.l.b16 %v910
      %v1629 = vunpack.c.h.b16 %v910
      %v1630 = vunpack.c.l.b16 %v911
      %v1631 = vunpack.c.h.b16 %v911
      %v1632 = vunpack.c.l.b16 %v912
      %v1633 = vunpack.c.h.b16 %v912
      %v1634 = vunpack.c.l.b16 %v913
      %v1635 = vunpack.c.h.b16 %v913
      %v1636 = vunpack.c.l.b16 %v914
      %v1637 = vunpack.c.h.b16 %v914
      %v1638 = vunpack.c.l.b16 %v915
      %v1639 = vunpack.c.h.b16 %v915
      %v1640 = vunpack.c.l.b16 %v916
      %v1641 = vunpack.c.h.b16 %v916
      %v1642 = vunpack.c.l.b16 %v917
      %v1643 = vunpack.c.h.b16 %v917
      %v1644 = vunpack.c.l.b16 %v918
      %v1645 = vunpack.c.h.b16 %v918
      %v1646 = vunpack.c.l.b16 %v919
      %v1647 = vunpack.c.h.b16 %v919
      %v1648 = vunpack.c.l.b16 %v920
      %v1649 = vunpack.c.h.b16 %v920
      %v1650 = vunpack.c.l.b16 %v921
      %v1651 = vunpack.c.h.b16 %v921
      %v1652 = vunpack.c.l.b16 %v922
      %v1653 = vunpack.c.h.b16 %v922
      %v1654 = vunpack.c.l.b16 %v923
      %v1655 = vunpack.c.h.b16 %v923
      %v1656 = vunpack.c.l.b16 %v924
      %v1657 = vunpack.c.h.b16 %v924
      %v1658 = vunpack.c.l.b16 %v925
      %v1659 = vunpack.c.h.b16 %v925
      %v1660 = vunpack.c.l.b16 %v926
      %v1661 = vunpack.c.h.b16 %v926
      %v1662 = vunpack.c.l.b16 %v927
      %v1663 = vunpack.c.h.b16 %v927
      %v1664 = vunpack.c.l.b16 %v928
      %v1665 = vunpack.c.h.b16 %v928
      %v1666 = vunpack.c.l.b16 %v929
      %v1667 = vunpack.c.h.b16 %v929
      %v1668 = vunpack.c.l.b16 %v930
      %v1669 = vunpack.c.h.b16 %v930
      %v1670 = vunpack.c.l.b16 %v931
      %v1671 = vunpack.c.h.b16 %v931
      %v1672 = vunpack.c.l.b16 %v932
      %v1673 = vunpack.c.h.b16 %v932
      %v1674 = vunpack.c.l.b16 %v933
      %v1675 = vunpack.c.h.b16 %v933
      %v1676 = vunpack.c.l.b16 %v934
      %v1677 = vunpack.c.h.b16 %v934
      %v1678 = vunpack.c.l.b16 %v935
      %v1679 = vunpack.c.h.b16 %v935
      %v1680 = vunpack.c.l.b16 %v936
      %v1681 = vunpack.c.h.b16 %v936
      %v1682 = vunpack.c.l.b16 %v937
      %v1683 = vunpack.c.h.b16 %v937
      %v1684 = vunpack.c.l.b16 %v938
      %v1685 = vunpack.c.h.b16 %v938
      %v1686 = vunpack.c.l.b16 %v939
      %v1687 = vunpack.c.h.b16 %v939
      %v1688 = vunpack.c.l.b16 %v940
      %v1689 = vunpack.c.h.b16 %v940
      %v1690 = vunpack.c.l.b16 %v941
      %v1691 = vunpack.c.h.b16 %v941
      %v1692 = vunpack.c.l.b16 %v942
      %v1693 = vunpack.c.h.b16 %v942
      %v1694 = vunpack.c.l.b16 %v943
      %v1695 = vunpack.c.h.b16 %v943
      %v1696 = vunpack.c.l.b16 %v944
      %v1697 = vunpack.c.h.b16 %v944
      %v1698 = vunpack.c.l.b16 %v945
      %v1699 = vunpack.c.h.b16 %v945
      %v1700 = vunpack.c.l.b16 %v946
      %v1701 = vunpack.c.h.b16 %v946
      %v1702 = vunpack.c.l.b16 %v947
      %v1703 = vunpack.c.h.b16 %v947
      %v1704 = vunpack.c.l.b16 %v948
      %v1705 = vunpack.c.h.b16 %v948
      %v1706 = vunpack.c.l.b16 %v949
      %v1707 = vunpack.c.h.b16 %v949
      %v1708 = vunpack.c.l.b16 %v950
      %v1709 = vunpack.c.h.b16 %v950
      %v1710 = vunpack.c.l.b16 %v951
      %v1711 = vunpack.c.h.b16 %v951
      %v1712 = vunpack.c.l.b16 %v952
      %v1713 = vunpack.c.h.b16 %v952
      %v1714 = vunpack.c.l.b16 %v953
      %v1715 = vunpack.c.h.b16 %v953
      %v1716 = vunpack.c.l.b16 %v954
      %v1717 = vunpack.c.h.b16 %v954
      %v1718 = vunpack.c.l.b16 %v955
      %v1719 = vunpack.c.h.b16 %v955
      %v1720 = vunpack.c.l.b16 %v956
      %v1721 = vunpack.c.h.b16 %v956
      %v1722 = vunpack.c.l.b16 %v957
      %v1723 = vunpack.c.h.b16 %v957
      %v1724 = vunpack.c.l.b16 %v958
      %v1725 = vunpack.c.h.b16 %v958
      %v1726 = vunpack.c.l.b16 %v959
      %v1727 = vunpack.c.h.b16 %v959
      %v1728 = vunpack.c.l.b16 %v960
      %v1729 = vunpack.c.h.b16 %v960
      %v1730 = vunpack.c.l.b16 %v961
      %v1731 = vunpack.c.h.b16 %v961
      %v1732 = vunpack.c.l.b16 %v962
      %v1733 = vunpack.c.h.b16 %v962
      %v1734 = vunpack.c.l.b16 %v963
      %v1735 = vunpack.c.h.b16 %v963
      %v1736 = vunpack.c.l.b16 %v964
      %v1737 = vunpack.c.h.b16 %v964
      %v1738 = vunpack.c.l.b16 %v965
      %v1739 = vunpack.c.h.b16 %v965
      %v1740 = vunpack.c.l.b16 %v966
      %v1741 = vunpack.c.h.b16 %v966
      %v1742 = vunpack.c.l.b16 %v967
      %v1743 = vunpack.c.h.b16 %v967
      %v1744 = vunpack.c.l.b16 %v968
      %v1745 = vunpack.c.h.b16 %v968
      %v1746 = vunpack.c.l.b16 %v969
      %v1747 = vunpack.c.h.b16 %v969
      %v1748 = vunpack.c.l.b16 %v970
      %v1749 = vunpack.c.h.b16 %v970
      %v1750 = vunpack.c.l.b16 %v971
      %v1751 = vunpack.c.h.b16 %v971
      %v1752 = vunpack.c.l.b16 %v972
      %v1753 = vunpack.c.h.b16 %v972
      %v1754 = vunpack.c.l.b16 %v973
      %v1755 = vunpack.c.h.b16 %v973
      %v1756 = vunpack.c.l.b16 %v974
      %v1757 = vunpack.c.h.b16 %v974
      %v1758 = vunpack.c.l.b16 %v975
      %v1759 = vunpack.c.h.b16 %v975
      %v1760 = vunpack.c.l.b16 %v976
      %v1761 = vunpack.c.h.b16 %v976
      %v1762 = vunpack.c.l.b16 %v977
      %v1763 = vunpack.c.h.b16 %v977
      %v1764 = vunpack.c.l.b16 %v978
      %v1765 = vunpack.c.h.b16 %v978
      %v1766 = vunpack.c.l.b16 %v979
      %v1767 = vunpack.c.h.b16 %v979
      %v1768 = vunpack.c.l.b16 %v980
      %v1769 = vunpack.c.h.b16 %v980
      %v1770 = vunpack.c.l.b16 %v981
      %v1771 = vunpack.c.h.b16 %v981
      %v1772 = vunpack.c.l.b16 %v982
      %v1773 = vunpack.c.h.b16 %v982
      %v1774 = vunpack.c.l.b16 %v983
      %v1775 = vunpack.c.h.b16 %v983
      %v1776 = vunpack.c.l.b16 %v984
      %v1777 = vunpack.c.h.b16 %v984
      %v1778 = vunpack.c.l.b16 %v985
      %v1779 = vunpack.c.h.b16 %v985
      %v1780 = vunpack.c.l.b16 %v986
      %v1781 = vunpack.c.h.b16 %v986
      %v1782 = vunpack.c.l.b16 %v987
      %v1783 = vunpack.c.h.b16 %v987
      %v1784 = vunpack.c.l.b16 %v988
      %v1785 = vunpack.c.h.b16 %v988
      %v1786 = vunpack.c.l.b16 %v989
      %v1787 = vunpack.c.h.b16 %v989
      %v1788 = vunpack.c.l.b16 %v990
      %v1789 = vunpack.c.h.b16 %v990
      %v1790 = vunpack.c.l.b16 %v991
      %v1791 = vunpack.c.h.b16 %v991
      %v1792 = vunpack.c.l.b16 %v992
      %v1793 = vunpack.c.h.b16 %v992
      %v1794 = vunpack.c.l.b16 %v993
      %v1795 = vunpack.c.h.b16 %v993
      %v1796 = vunpack.c.l.b16 %v994
      %v1797 = vunpack.c.h.b16 %v994
      %v1798 = vunpack.c.l.b16 %v995
      %v1799 = vunpack.c.h.b16 %v995
      %v1800 = vunpack.c.l.b16 %v996
      %v1801 = vunpack.c.h.b16 %v996
      %v1802 = vunpack.c.l.b16 %v997
      %v1803 = vunpack.c.h.b16 %v997
      %v1804 = vunpack.c.l.b16 %v998
      %v1805 = vunpack.c.h.b16 %v998
      %v1806 = vunpack.c.l.b16 %v999
      %v1807 = vunpack.c.h.b16 %v999
      %v1808 = vunpack.c.l.b16 %v1000
      %v1809 = vunpack.c.h.b16 %v1000
      %v1810 = vunpack.c.l.b16 %v1001
      %v1811 = vunpack.c.h.b16 %v1001
      %v1812 = vunpack.c.l.b16 %v1002
      %v1813 = vunpack.c.h.b16 %v1002
      %v1814 = vunpack.c.l.b16 %v1003
      %v1815 = vunpack.c.h.b16 %v1003
      %v1816 = vunpack.c.l.b16 %v1004
      %v1817 = vunpack.c.h.b16 %v1004
      %v1818 = vunpack.c.l.b16 %v1005
      %v1819 = vunpack.c.h.b16 %v1005
      %v1820 = vunpack.c.l.b16 %v1006
      %v1821 = vunpack.c.h.b16 %v1006
      %v1822 = vunpack.c.l.b16 %v1007
      %v1823 = vunpack.c.h.b16 %v1007
      %v1824 = vunpack.c.l.b16 %v1008
      %v1825 = vunpack.c.h.b16 %v1008
      %v1826 = vunpack.c.l.b16 %v1009
      %v1827 = vunpack.c.h.b16 %v1009
      %v1828 = vunpack.c.l.b16 %v1010
      %v1829 = vunpack.c.h.b16 %v1010
      %v1830 = vunpack.c.l.b16 %v1011
      %v1831 = vunpack.c.h.b16 %v1011
      %v1832 = vunpack.c.l.b16 %v1012
      %v1833 = vunpack.c.h.b16 %v1012
      %v1834 = vunpack.c.l.b16 %v1013
      %v1835 = vunpack.c.h.b16 %v1013
      %v1836 = vunpack.c.l.b16 %v1014
      %v1837 = vunpack.c.h.b16 %v1014
      %v1838 = vunpack.c.l.b16 %v1015
      %v1839 = vunpack.c.h.b16 %v1015
      %v1840 = vunpack.c.l.b16 %v1016
      %v1841 = vunpack.c.h.b16 %v1016
      %v1842 = vunpack.c.l.b16 %v1017
      %v1843 = vunpack.c.h.b16 %v1017
      %v1844 = vunpack.c.l.b16 %v1018
      %v1845 = vunpack.c.h.b16 %v1018
      %v1846 = vunpack.c.l.b16 %v1019
      %v1847 = vunpack.c.h.b16 %v1019
      %v1848 = vunpack.c.l.b16 %v1020
      %v1849 = vunpack.c.h.b16 %v1020
      %v1850 = vunpack.c.l.b16 %v1021
      %v1851 = vunpack.c.h.b16 %v1021
      %v1852 = vunpack.c.l.b16 %v1022
      %v1853 = vunpack.c.h.b16 %v1022
      %v1854 = vunpack.c.l.b16 %v1023
      %v1855 = vunpack.c.h.b16 %v1023
      %v1856 = vunpack.c.l.b16 %v1024
      %v1857 = vunpack.c.h.b16 %v1024
      %v1858 = vunpack.c.l.b16 %v1025
      %v1859 = vunpack.c.h.b16 %v1025
      %v1860 = vunpack.c.l.b16 %v1026
      %v1861 = vunpack.c.h.b16 %v1026
      %v1862 = vunpack.c.l.b16 %v1027
      %v1863 = vunpack.c.h.b16 %v1027
      %v1864 = vunpack.c.l.b16 %v1028
      %v1865 = vunpack.c.h.b16 %v1028
      %v1866 = vunpack.c.l.b16 %v1029
      %v1867 = vunpack.c.h.b16 %v1029
      %v1868 = vunpack.c.l.b16 %v1030
      %v1869 = vunpack.c.h.b16 %v1030
      %v1870 = vunpack.c.l.b16 %v1031
      %v1871 = vunpack.c.h.b16 %v1031
      %v1872 = vunpack.c.l.b16 %v1032
      %v1873 = vunpack.c.h.b16 %v1032
      %v1874 = vunpack.c.l.b16 %v1033
      %v1875 = vunpack.c.h.b16 %v1033
      %v1876 = vunpack.c.l.b16 %v1034
      %v1877 = vunpack.c.h.b16 %v1034
      %v1878 = vunpack.c.l.b16 %v1035
      %v1879 = vunpack.c.h.b16 %v1035
      %v1880 = vunpack.c.l.b16 %v1036
      %v1881 = vunpack.c.h.b16 %v1036
      %v1882 = vunpack.c.l.b16 %v1037
      %v1883 = vunpack.c.h.b16 %v1037
      %v1884 = vunpack.c.l.b16 %v1038
      %v1885 = vunpack.c.h.b16 %v1038
      %v1886 = vunpack.c.l.b16 %v1039
      %v1887 = vunpack.c.h.b16 %v1039
      %v1888 = vunpack.c.l.b16 %v1040
      %v1889 = vunpack.c.h.b16 %v1040
      %v1890 = vunpack.c.l.b16 %v1041
      %v1891 = vunpack.c.h.b16 %v1041
      %v1892 = vunpack.c.l.b16 %v1042
      %v1893 = vunpack.c.h.b16 %v1042
      %v1894 = vunpack.c.l.b16 %v1043
      %v1895 = vunpack.c.h.b16 %v1043
      %v1896 = vunpack.c.l.b16 %v1044
      %v1897 = vunpack.c.h.b16 %v1044
      %v1898 = vunpack.c.l.b16 %v1045
      %v1899 = vunpack.c.h.b16 %v1045
      %v1900 = vunpack.c.l.b16 %v1046
      %v1901 = vunpack.c.h.b16 %v1046
      %v1902 = vunpack.c.l.b16 %v1047
      %v1903 = vunpack.c.h.b16 %v1047
      %v1904 = vunpack.c.l.b16 %v1048
      %v1905 = vunpack.c.h.b16 %v1048
      %v1906 = vunpack.c.l.b16 %v1049
      %v1907 = vunpack.c.h.b16 %v1049
      %v1908 = vunpack.c.l.b16 %v1050
      %v1909 = vunpack.c.h.b16 %v1050
      %v1910 = vunpack.c.l.b16 %v1051
      %v1911 = vunpack.c.h.b16 %v1051
      %v1912 = vunpack.c.l.b16 %v1052
      %v1913 = vunpack.c.h.b16 %v1052
      %v1914 = vunpack.c.l.b16 %v1053
      %v1915 = vunpack.c.h.b16 %v1053
      %v1916 = vunpack.c.l.b16 %v1054
      %v1917 = vunpack.c.h.b16 %v1054
      %v1918 = vunpack.c.l.b16 %v1055
      %v1919 = vunpack.c.h.b16 %v1055
      %v1920 = vpack.c.b16 %v1360, %v1344
      %v1921 = vpack.c.b16 %v1361, %v1345
      %v1922 = vpack.c.b16 %v1362, %v1346
      %v1923 = vpack.c.b16 %v1363, %v1347
      %v1924 = vpack.c.b16 %v1364, %v1348
      %v1925 = vpack.c.b16 %v1365, %v1349
      %v1926 = vpack.c.b16 %v1366, %v1350
      %v1927 = vpack.c.b16 %v1367, %v1351
      %v1928 = vpack.c.b16 %v1368, %v1352
      %v1929 = vpack.c.b16 %v1369, %v1353
      %v1930 = vpack.c.b16 %v1370, %v1354
      %v1931 = vpack.c.b16 %v1371, %v1355
      %v1932 = vpack.c.b16 %v1372, %v1356
      %v1933 = vpack.c.b16 %v1373, %v1357
      %v1934 = vpack.c.b16 %v1374, %v1358
      %v1935 = vpack.c.b16 %v1375, %v1359
      %v1936 = vpack.c.b16 %v1392, %v1376
      %v1937 = vpack.c.b16 %v1393, %v1377
      %v1938 = vpack.c.b16 %v1394, %v1378
      %v1939 = vpack.c.b16 %v1395, %v1379
      %v1940 = vpack.c.b16 %v1396, %v1380
      %v1941 = vpack.c.b16 %v1397, %v1381
      %v1942 = vpack.c.b16 %v1398, %v1382
      %v1943 = vpack.c.b16 %v1399, %v1383
      %v1944 = vpack.c.b16 %v1400, %v1384
      %v1945 = vpack.c.b16 %v1401, %v1385
      %v1946 = vpack.c.b16 %v1402, %v1386
      %v1947 = vpack.c.b16 %v1403, %v1387
      %v1948 = vpack.c.b16 %v1404, %v1388
      %v1949 = vpack.c.b16 %v1405, %v1389
      %v1950 = vpack.c.b16 %v1406, %v1390
      %v1951 = vpack.c.b16 %v1407, %v1391
      %v1952 = vpack.c.b16 %v1424, %v1408
      %v1953 = vpack.c.b16 %v1425, %v1409
      %v1954 = vpack.c.b16 %v1426, %v1410
      %v1955 = vpack.c.b16 %v1427, %v1411
      %v1956 = vpack.c.b16 %v1428, %v1412
      %v1957 = vpack.c.b16 %v1429, %v1413
      %v1958 = vpack.c.b16 %v1430, %v1414
      %v1959 = vpack.c.b16 %v1431, %v1415
      %v1960 = vpack.c.b16 %v1432, %v1416
      %v1961 = vpack.c.b16 %v1433, %v1417
      %v1962 = vpack.c.b16 %v1434, %v1418
      %v1963 = vpack.c.b16 %v1435, %v1419
      %v1964 = vpack.c.b16 %v1436, %v1420
      %v1965 = vpack.c.b16 %v1437, %v1421
      %v1966 = vpack.c.b16 %v1438, %v1422
      %v1967 = vpack.c.b16 %v1439, %v1423
      %v1968 = vpack.c.b16 %v1456, %v1440
      %v1969 = vpack.c.b16 %v1457, %v1441
      %v1970 = vpack.c.b16 %v1458, %v1442
      %v1971 = vpack.c.b16 %v1459, %v1443
      %v1972 = vpack.c.b16 %v1460, %v1444
      %v1973 = vpack.c.b16 %v1461, %v1445
      %v1974 = vpack.c.b16 %v1462, %v1446
      %v1975 = vpack.c.b16 %v1463, %v1447
      %v1976 = vpack.c.b16 %v1464, %v1448
      %v1977 = vpack.c.b16 %v1465, %v1449
      %v1978 = vpack.c.b16 %v1466, %v1450
      %v1979 = vpack.c.b16 %v1467, %v1451
      %v1980 = vpack.c.b16 %v1468, %v1452
      %v1981 = vpack.c.b16 %v1469, %v1453
      %v1982 = vpack.c.b16 %v1470, %v1454
      %v1983 = vpack.c.b16 %v1471, %v1455
      %v1984 = vpack.c.b16 %v1488, %v1472
      %v1985 = vpack.c.b16 %v1489, %v1473
      %v1986 = vpack.c.b16 %v1490, %v1474
      %v1987 = vpack.c.b16 %v1491, %v1475
      %v1988 = vpack.c.b16 %v1492, %v1476
      %v1989 = vpack.c.b16 %v1493, %v1477
      %v1990 = vpack.c.b16 %v1494, %v1478
      %v1991 = vpack.c.b16 %v1495, %v1479
      %v1992 = vpack.c.b16 %v1496, %v1480
      %v1993 = vpack.c.b16 %v1497, %v1481
      %v1994 = vpack.c.b16 %v1498, %v1482
      %v1995 = vpack.c.b16 %v1499, %v1483
      %v1996 = vpack.c.b16 %v1500, %v1484
      %v1997 = vpack.c.b16 %v1501, %v1485
      %v1998 = vpack.c.b16 %v1502, %v1486
      %v1999 = vpack.c.b16 %v1503, %v1487
      %v2000 = vpack.c.b16 %v1520, %v1504
      %v2001 = vpack.c.b16 %v1521, %v1505
      %v2002 = vpack.c.b16 %v1522, %v1506
      %v2003 = vpack.c.b16 %v1523, %v1507
      %v2004 = vpack.c.b16 %v1524, %v1508
      %v2005 = vpack.c.b16 %v1525, %v1509
      %v2006 = vpack.c.b16 %v1526, %v1510
      %v2007 = vpack.c.b16 %v1527, %v1511
      %v2008 = vpack.c.b16 %v1528, %v1512
      %v2009 = vpack.c.b16 %v1529, %v1513
      %v2010 = vpack.c.b16 %v1530, %v1514
      %v2011 = vpack.c.b16 %v1531, %v1515
      %v2012 = vpack.c.b16 %v1532, %v1516
      %v2013 = vpack.c.b16 %v1533, %v1517
      %v2014 = vpack.c.b16 %v1534, %v1518
      %v2015 = vpack.c.b16 %v1535, %v1519
      %v2016 = vpack.c.b16 %v1552, %v1536
      %v2017 = vpack.c.b16 %v1553, %v1537
      %v2018 = vpack.c.b16 %v1554, %v1538
      %v2019 = vpack.c.b16 %v1555, %v1539
      %v2020 = vpack.c.b16 %v1556, %v1540
      %v2021 = vpack.c.b16 %v1557, %v1541
      %v2022 = vpack.c.b16 %v1558, %v1542
      %v2023 = vpack.c.b16 %v1559, %v1543
      %v2024 = vpack.c.b16 %v1560, %v1544
      %v2025 = vpack.c.b16 %v1561, %v1545
      %v2026 = vpack.c.b16 %v1562, %v1546
      %v2027 = vpack.c.b16 %v1563, %v1547
      %v2028 = vpack.c.b16 %v1564, %v1548
      %v2029 = vpack.c.b16 %v1565, %v1549
      %v2030 = vpack.c.b16 %v1566, %v1550
      %v2031 = vpack.c.b16 %v1567, %v1551
      %v2032 = vpack.c.b16 %v1584, %v1568
      %v2033 = vpack.c.b16 %v1585, %v1569
      %v2034 = vpack.c.b16 %v1586, %v1570
      %v2035 = vpack.c.b16 %v1587, %v1571
      %v2036 = vpack.c.b16 %v1588, %v1572
      %v2037 = vpack.c.b16 %v1589, %v1573
      %v2038 = vpack.c.b16 %v1590, %v1574
      %v2039 = vpack.c.b16 %v1591, %v1575
      %v2040 = vpack.c.b16 %v1592, %v1576
      %v2041 = vpack.c.b16 %v1593, %v1577
      %v2042 = vpack.c.b16 %v1594, %v1578
      %v2043 = vpack.c.b16 %v1595, %v1579
      %v2044 = vpack.c.b16 %v1596, %v1580
      %v2045 = vpack.c.b16 %v1597, %v1581
      %v2046 = vpack.c.b16 %v1598, %v1582
      %v2047 = vpack.c.b16 %v1599, %v1583
      %v2048 = vpack.c.b16 %v1616, %v1600
      %v2049 = vpack.c.b16 %v1617, %v1601
      %v2050 = vpack.c.b16 %v1618, %v1602
      %v2051 = vpack.c.b16 %v1619, %v1603
      %v2052 = vpack.c.b16 %v1620, %v1604
      %v2053 = vpack.c.b16 %v1621, %v1605
      %v2054 = vpack.c.b16 %v1622, %v1606
      %v2055 = vpack.c.b16 %v1623, %v1607
      %v2056 = vpack.c.b16 %v1624, %v1608
      %v2057 = vpack.c.b16 %v1625, %v1609
      %v2058 = vpack.c.b16 %v1626, %v1610
      %v2059 = vpack.c.b16 %v1627, %v1611
      %v2060 = vpack.c.b16 %v1628, %v1612
      %v2061 = vpack.c.b16 %v1629, %v1613
      %v2062 = vpack.c.b16 %v1630, %v1614
      %v2063 = vpack.c.b16 %v1631, %v1615
      %v2064 = vpack.c.b16 %v1648, %v1632
      %v2065 = vpack.c.b16 %v1649, %v1633
      %v2066 = vpack.c.b16 %v1650, %v1634
      %v2067 = vpack.c.b16 %v1651, %v1635
      %v2068 = vpack.c.b16 %v1652, %v1636
      %v2069 = vpack.c.b16 %v1653, %v1637
      %v2070 = vpack.c.b16 %v1654, %v1638
      %v2071 = vpack.c.b16 %v1655, %v1639
      %v2072 = vpack.c.b16 %v1656, %v1640
      %v2073 = vpack.c.b16 %v1657, %v1641
      %v2074 = vpack.c.b16 %v1658, %v1642
      %v2075 = vpack.c.b16 %v1659, %v1643
      %v2076 = vpack.c.b16 %v1660, %v1644
      %v2077 = vpack.c.b16 %v1661, %v1645
      %v2078 = vpack.c.b16 %v1662, %v1646
      %v2079 = vpack.c.b16 %v1663, %v1647
      %v2080 = vpack.c.b16 %v1680, %v1664
      %v2081 = vpack.c.b16 %v1681, %v1665
      %v2082 = vpack.c.b16 %v1682, %v1666
      %v2083 = vpack.c.b16 %v1683, %v1667
      %v2084 = vpack.c.b16 %v1684, %v1668
      %v2085 = vpack.c.b16 %v1685, %v1669
      %v2086 = vpack.c.b16 %v1686, %v1670
      %v2087 = vpack.c.b16 %v1687, %v1671
      %v2088 = vpack.c.b16 %v1688, %v1672
      %v2089 = vpack.c.b16 %v1689, %v1673
      %v2090 = vpack.c.b16 %v1690, %v1674
      %v2091 = vpack.c.b16 %v1691, %v1675
      %v2092 = vpack.c.b16 %v1692, %v1676
      %v2093 = vpack.c.b16 %v1693, %v1677
      %v2094 = vpack.c.b16 %v1694, %v1678
      %v2095 = vpack.c.b16 %v1695, %v1679
      %v2096 = vpack.c.b16 %v1712, %v1696
      %v2097 = vpack.c.b16 %v1713, %v1697
      %v2098 = vpack.c.b16 %v1714, %v1698
      %v2099 = vpack.c.b16 %v1715, %v1699
      %v2100 = vpack.c.b16 %v1716, %v1700
      %v2101 = vpack.c.b16 %v1717, %v1701
      %v2102 = vpack.c.b16 %v1718, %v1702
      %v2103 = vpack.c.b16 %v1719, %v1703
      %v2104 = vpack.c.b16 %v1720, %v1704
      %v2105 = vpack.c.b16 %v1721, %v1705
      %v2106 = vpack.c.b16 %v1722, %v1706
      %v2107 = vpack.c.b16 %v1723, %v1707
      %v2108 = vpack.c.b16 %v1724, %v1708
      %v2109 = vpack.c.b16 %v1725, %v1709
      %v2110 = vpack.c.b16 %v1726, %v1710
      %v2111 = vpack.c.b16 %v1727, %v1711
      %v2112 = vpack.c.b16 %v1744, %v1728
      %v2113 = vpack.c.b16 %v1745, %v1729
      %v2114 = vpack.c.b16 %v1746, %v1730
      %v2115 = vpack.c.b16 %v1747, %v1731
      %v2116 = vpack.c.b16 %v1748, %v1732
      %v2117 = vpack.c.b16 %v1749, %v1733
      %v2118 = vpack.c.b16 %v1750, %v1734
      %v2119 = vpack.c.b16 %v1751, %v1735
      %v2120 = vpack.c.b16 %v1752, %v1736
      %v2121 = vpack.c.b16 %v1753, %v1737
      %v2122 = vpack.c.b16 %v1754, %v1738
      %v2123 = vpack.c.b16 %v1755, %v1739
      %v2124 = vpack.c.b16 %v1756, %v1740
      %v2125 = vpack.c.b16 %v1757, %v1741
      %v2126 = vpack.c.b16 %v1758, %v1742
      %v2127 = vpack.c.b16 %v1759, %v1743
      %v2128 = vpack.c.b16 %v1776, %v1760
      %v2129 = vpack.c.b16 %v1777, %v1761
      %v2130 = vpack.c.b16 %v1778, %v1762
      %v2131 = vpack.c.b16 %v1779, %v1763
      %v2132 = vpack.c.b16 %v1780, %v1764
      %v2133 = vpack.c.b16 %v1781, %v1765
      %v2134 = vpack.c.b16 %v1782, %v1766
      %v2135 = vpack.c.b16 %v1783, %v1767
      %v2136 = vpack.c.b16 %v1784, %v1768
      %v2137 = vpack.c.b16 %v1785, %v1769
      %v2138 = vpack.c.b16 %v1786, %v1770
      %v2139 = vpack.c.b16 %v1787, %v1771
      %v2140 = vpack.c.b16 %v1788, %v1772
      %v2141 = vpack.c.b16 %v1789, %v1773
      %v2142 = vpack.c.b16 %v1790, %v1774
      %v2143 = vpack.c.b16 %v1791, %v1775
      %v2144 = vpack.c.b16 %v1808, %v1792
      %v2145 = vpack.c.b16 %v1809, %v1793
      %v2146 = vpack.c.b16 %v1810, %v1794
      %v2147 = vpack.c.b16 %v1811, %v1795
      %v2148 = vpack.c.b16 %v1812, %v1796
      %v2149 = vpack.c.b16 %v1813, %v1797
      %v2150 = vpack.c.b16 %v1814, %v1798
      %v2151 = vpack.c.b16 %v1815, %v1799
      %v2152 = vpack.c.b16 %v1816, %v1800
      %v2153 = vpack.c.b16 %v1817, %v1801
      %v2154 = vpack.c.b16 %v1818, %v1802
      %v2155 = vpack.c.b16 %v1819, %v1803
      %v2156 = vpack.c.b16 %v1820, %v1804
      %v2157 = vpack.c.b16 %v1821, %v1805
      %v2158 = vpack.c.b16 %v1822, %v1806
      %v2159 = vpack.c.b16 %v1823, %v1807
      %v2160 = vpack.c.b16 %v1840, %v1824
      %v2161 = vpack.c.b16 %v1841, %v1825
      %v2162 = vpack.c.b16 %v1842, %v1826
      %v2163 = vpack.c.b16 %v1843, %v1827
      %v2164 = vpack.c.b16 %v1844, %v1828
      %v2165 = vpack.c.b16 %v1845, %v1829
      %v2166 = vpack.c.b16 %v1846, %v1830
      %v2167 = vpack.c.b16 %v1847, %v1831
      %v2168 = vpack.c.b16 %v1848, %v1832
      %v2169 = vpack.c.b16 %v1849, %v1833
      %v2170 = vpack.c.b16 %v1850, %v1834
      %v2171 = vpack.c.b16 %v1851, %v1835
      %v2172 = vpack.c.b16 %v1852, %v1836
      %v2173 = vpack.c.b16 %v1853, %v1837
      %v2174 = vpack.c.b16 %v1854, %v1838
      %v2175 = vpack.c.b16 %v1855, %v1839
      %v2176 = vpack.c.b16 %v1872, %v1856
      %v2177 = vpack.c.b16 %v1873, %v1857
      %v2178 = vpack.c.b16 %v1874, %v1858
      %v2179 = vpack.c.b16 %v1875, %v1859
      %v2180 = vpack.c.b16 %v1876, %v1860
      %v2181 = vpack.c.b16 %v1877, %v1861
      %v2182 = vpack.c.b16 %v1878, %v1862
      %v2183 = vpack.c.b16 %v1879, %v1863
      %v2184 = vpack.c.b16 %v1880, %v1864
      %v2185 = vpack.c.b16 %v1881, %v1865
      %v2186 = vpack.c.b16 %v1882, %v1866
      %v2187 = vpack.c.b16 %v1883, %v1867
      %v2188 = vpack.c.b16 %v1884, %v1868
      %v2189 = vpack.c.b16 %v1885, %v1869
      %v2190 = vpack.c.b16 %v1886, %v1870
      %v2191 = vpack.c.b16 %v1887, %v1871
      %v2192 = vpack.c.b16 %v1904, %v1888
      %v2193 = vpack.c.b16 %v1905, %v1889
      %v2194 = vpack.c.b16 %v1906, %v1890
      %v2195 = vpack.c.b16 %v1907, %v1891
      %v2196 = vpack.c.b16 %v1908, %v1892
      %v2197 = vpack.c.b16 %v1909, %v1893
      %v2198 = vpack.c.b16 %v1910, %v1894
      %v2199 = vpack.c.b16 %v1911, %v1895
      %v2200 = vpack.c.b16 %v1912, %v1896
      %v2201 = vpack.c.b16 %v1913, %v1897
      %v2202 = vpack.c.b16 %v1914, %v1898
      %v2203 = vpack.c.b16 %v1915, %v1899
      %v2204 = vpack.c.b16 %v1916, %v1900
      %v2205 = vpack.c.b16 %v1917, %v1901
      %v2206 = vpack.c.b16 %v1918, %v1902
      %v2207 = vpack.c.b16 %v1919, %v1903
      %2496 = vmatprep.subr.bf16.mxu0 0
      %2497 = vmatpush1.bf16.msra.mxu0 %v640
      %2498 = vmatprep.subr.bf16.mxu0 0
      %2499 = vmatpush1.bf16.msra.mxu0 %v641
      %2500 = vmatprep.subr.bf16.mxu0 0
      %2501 = vmatpush1.bf16.msra.mxu0 %v642
      %2502 = vmatprep.subr.bf16.mxu0 0
      %2503 = vmatpush1.bf16.msra.mxu0 %v643
      %2504 = vmatprep.subr.bf16.mxu0 0
      %2505 = vmatpush1.bf16.msra.mxu0 %v644
      %2506 = vmatprep.subr.bf16.mxu0 0
      %2507 = vmatpush1.bf16.msra.mxu0 %v645
      %2508 = vmatprep.subr.bf16.mxu0 0
      %2509 = vmatpush1.bf16.msra.mxu0 %v646
      %2510 = vmatprep.subr.bf16.mxu0 0
      %2511 = vmatpush1.bf16.msra.mxu0 %v647
      %2512 = vmatprep.subr.bf16.mxu0 0
      %2513 = vmatpush1.bf16.msra.mxu0 %v648
      %2514 = vmatprep.subr.bf16.mxu0 0
      %2515 = vmatpush1.bf16.msra.mxu0 %v649
      %2516 = vmatprep.subr.bf16.mxu0 0
      %2517 = vmatpush1.bf16.msra.mxu0 %v650
      %2518 = vmatprep.subr.bf16.mxu0 0
      %2519 = vmatpush1.bf16.msra.mxu0 %v651
      %2520 = vmatprep.subr.bf16.mxu0 0
      %2521 = vmatpush1.bf16.msra.mxu0 %v652
      %2522 = vmatprep.subr.bf16.mxu0 0
      %2523 = vmatpush1.bf16.msra.mxu0 %v653
      %2524 = vmatprep.subr.bf16.mxu0 0
      %2525 = vmatpush1.bf16.msra.mxu0 %v654
      %2526 = vmatprep.subr.bf16.mxu0 0
      %2527 = vmatpush1.bf16.msra.mxu0 %v655
      %2528 = vmatprep.mubr.bf16.mxu0 %v1921
      %2529 = vmatmul.mubr.bf16.gmra.mrb[0].mxu0 %v1920
      %v2530 = vpop.f32.mrb[0].mxu0
      %v2531 = vadd.f32 0.0, %v2530
      %v2532 = vpop.f32.mrb[0].mxu0
      %v2533 = vpop.f32.mrb[0].mxu0
      %v2534 = vadd.f32 0.0, %v2533
      %v2535 = vpop.f32.mrb[0].mxu0
      %2536 = vmatprep.mubr.bf16.mxu0 %v1937
      %2537 = vmatmul.mubr.bf16.gmra.mrb[0].mxu0 %v1936
      %v2538 = vpop.f32.mrb[0].mxu0
      %v2539 = vadd.f32 0.0, %v2538
      %v2540 = vpop.f32.mrb[0].mxu0
      %v2541 = vpop.f32.mrb[0].mxu0
      %v2542 = vadd.f32 0.0, %v2541
      %v2543 = vpop.f32.mrb[0].mxu0
      %2544 = vmatprep.mubr.bf16.mxu0 %v1953
      %2545 = vmatmul.mubr.bf16.gmra.mrb[0].mxu0 %v1952
      %v2546 = vpop.f32.mrb[0].mxu0
      %v2547 = vadd.f32 0.0, %v2546
      %v2548 = vpop.f32.mrb[0].mxu0
      %v2549 = vpop.f32.mrb[0].mxu0
      %v2550 = vadd.f32 0.0, %v2549
      %v2551 = vpop.f32.mrb[0].mxu0
      %2552 = vmatprep.mubr.bf16.mxu0 %v1969
      %2553 = vmatmul.mubr.bf16.gmra.mrb[0].mxu0 %v1968
      %v2554 = vpop.f32.mrb[0].mxu0
      %v2555 = vadd.f32 0.0, %v2554
      %v2556 = vpop.f32.mrb[0].mxu0
      %v2557 = vpop.f32.mrb[0].mxu0
      %v2558 = vadd.f32 0.0, %v2557
      %v2559 = vpop.f32.mrb[0].mxu0
      %2560 = vmatprep.mubr.bf16.mxu0 %v1985
      %2561 = vmatmul.mubr.bf16.gmra.mrb[0].mxu0 %v1984
      %v2562 = vpop.f32.mrb[0].mxu0
      %v2563 = vadd.f32 0.0, %v2562
      %v2564 = vpop.f32.mrb[0].mxu0
      %v2565 = vpop.f32.mrb[0].mxu0
      %v2566 = vadd.f32 0.0, %v2565
      %v2567 = vpop.f32.mrb[0].mxu0
      %2568 = vmatprep.mubr.bf16.mxu0 %v2001
      %2569 = vmatmul.mubr.bf16.gmra.mrb[0].mxu0 %v2000
      %v2570 = vpop.f32.mrb[0].mxu0
      %v2571 = vadd.f32 0.0, %v2570
      %v2572 = vpop.f32.mrb[0].mxu0
      %v2573 = vpop.f32.mrb[0].mxu0
      %v2574 = vadd.f32 0.0, %v2573
      %v2575 = vpop.f32.mrb[0].mxu0
      %2576 = vmatprep.mubr.bf16.mxu0 %v2017
      %2577 = vmatmul.mubr.bf16.gmra.mrb[0].mxu0 %v2016
      %v2578 = vpop.f32.mrb[0].mxu0
      %v2579 = vadd.f32 0.0, %v2578
      %v2580 = vpop.f32.mrb[0].mxu0
      %v2581 = vpop.f32.mrb[0].mxu0
      %v2582 = vadd.f32 0.0, %v2581
      %v2583 = vpop.f32.mrb[0].mxu0
      %2584 = vmatprep.mubr.bf16.mxu0 %v2033
      %2585 = vmatmul.mubr.bf16.gmra.mrb[0].mxu0 %v2032
      %v2586 = vpop.f32.mrb[0].mxu0
      %v2587 = vadd.f32 0.0, %v2586
      %v2588 = vpop.f32.mrb[0].mxu0
      %v2589 = vpop.f32.mrb[0].mxu0
      %v2590 = vadd.f32 0.0, %v2589
      %v2591 = vpop.f32.mrb[0].mxu0
      %2592 = vmatprep.mubr.bf16.mxu0 %v2049
      %2593 = vmatmul.mubr.bf16.gmra.mrb[0].mxu0 %v2048
      %v2594 = vpop.f32.mrb[0].mxu0
      %v2595 = vadd.f32 0.0, %v2594
      %v2596 = vpop.f32.mrb[0].mxu0
      %v2597 = vpop.f32.mrb[0].mxu0
      %v2598 = vadd.f32 0.0, %v2597
      %v2599 = vpop.f32.mrb[0].mxu0
      %2600 = vmatprep.mubr.bf16.mxu0 %v2065
      %2601 = vmatmul.mubr.bf16.gmra.mrb[0].mxu0 %v2064
      %v2602 = vpop.f32.mrb[0].mxu0
      %v2603 = vadd.f32 0.0, %v2602
      %v2604 = vpop.f32.mrb[0].mxu0
      %v2605 = vpop.f32.mrb[0].mxu0
      %v2606 = vadd.f32 0.0, %v2605
      %v2607 = vpop.f32.mrb[0].mxu0
      %2608 = vmatprep.mubr.bf16.mxu0 %v2081
      %2609 = vmatmul.mubr.bf16.gmra.mrb[0].mxu0 %v2080
      %v2610 = vpop.f32.mrb[0].mxu0
      %v2611 = vadd.f32 0.0, %v2610
      %v2612 = vpop.f32.mrb[0].mxu0
      %v2613 = vpop.f32.mrb[0].mxu0
      %v2614 = vadd.f32 0.0, %v2613
      %v2615 = vpop.f32.mrb[0].mxu0
      %2616 = vmatprep.mubr.bf16.mxu0 %v2097
      %2617 = vmatmul.mubr.bf16.gmra.mrb[0].mxu0 %v2096
      %v2618 = vpop.f32.mrb[0].mxu0
      %v2619 = vadd.f32 0.0, %v2618
      %v2620 = vpop.f32.mrb[0].mxu0
      %v2621 = vpop.f32.mrb[0].mxu0
      %v2622 = vadd.f32 0.0, %v2621
      %v2623 = vpop.f32.mrb[0].mxu0
      %2624 = vmatprep.mubr.bf16.mxu0 %v2113
      %2625 = vmatmul.mubr.bf16.gmra.mrb[0].mxu0 %v2112
      %v2626 = vpop.f32.mrb[0].mxu0
      %v2627 = vadd.f32 0.0, %v2626
      %v2628 = vpop.f32.mrb[0].mxu0
      %v2629 = vpop.f32.mrb[0].mxu0
      %v2630 = vadd.f32 0.0, %v2629
      %v2631 = vpop.f32.mrb[0].mxu0
      %2632 = vmatprep.mubr.bf16.mxu0 %v2129
      %2633 = vmatmul.mubr.bf16.gmra.mrb[0].mxu0 %v2128
      %v2634 = vpop.f32.mrb[0].mxu0
      %v2635 = vadd.f32 0.0, %v2634
      %v2636 = vpop.f32.mrb[0].mxu0
      %v2637 = vpop.f32.mrb[0].mxu0
      %v2638 = vadd.f32 0.0, %v2637
      %v2639 = vpop.f32.mrb[0].mxu0
      %2640 = vmatprep.mubr.bf16.mxu0 %v2145
      %2641 = vmatmul.mubr.bf16.gmra.mrb[0].mxu0 %v2144
      %v2642 = vpop.f32.mrb[0].mxu0
      %v2643 = vadd.f32 0.0, %v2642
      %v2644 = vpop.f32.mrb[0].mxu0
      %v2645 = vpop.f32.mrb[0].mxu0
      %v2646 = vadd.f32 0.0, %v2645
      %v2647 = vpop.f32.mrb[0].mxu0
      %2648 = vmatprep.mubr.bf16.mxu0 %v2161
      %2649 = vmatmul.mubr.bf16.gmra.mrb[0].mxu0 %v2160
      %v2650 = vpop.f32.mrb[0].mxu0
      %v2651 = vadd.f32 0.0, %v2650
      %v2652 = vpop.f32.mrb[0].mxu0
      %v2653 = vpop.f32.mrb[0].mxu0
      %v2654 = vadd.f32 0.0, %v2653
      %v2655 = vpop.f32.mrb[0].mxu0
      %2656 = vmatprep.mubr.bf16.mxu0 %v2177
      %2657 = vmatmul.mubr.bf16.gmra.mrb[0].mxu0 %v2176
      %v2658 = vpop.f32.mrb[0].mxu0
      %v2659 = vadd.f32 0.0, %v2658
      %v2660 = vpop.f32.mrb[0].mxu0
      %v2661 = vpop.f32.mrb[0].mxu0
      %v2662 = vadd.f32 0.0, %v2661
      %v2663 = vpop.f32.mrb[0].mxu0
      %2664 = vmatprep.mubr.bf16.mxu0 %v2193
      %2665 = vmatmul.mubr.bf16.gmra.mrb[0].mxu0 %v2192
      %v2666 = vpop.f32.mrb[0].mxu0
      %v2667 = vadd.f32 0.0, %v2666
      %v2668 = vpop.f32.mrb[0].mxu0
      %v2669 = vpop.f32.mrb[0].mxu0
      %v2670 = vadd.f32 0.0, %v2669
      %v2671 = vpop.f32.mrb[0].mxu0
      %2672 = vdwg.mxu0
      %2673 = vmatprep.subr.bf16.mxu0 0
      %2674 = vmatpush1.bf16.msra.mxu0 %v656
      %2675 = vmatprep.subr.bf16.mxu0 0
      %2676 = vmatpush1.bf16.msra.mxu0 %v657
      %2677 = vmatprep.subr.bf16.mxu0 0
      %2678 = vmatpush1.bf16.msra.mxu0 %v658
      %2679 = vmatprep.subr.bf16.mxu0 0
      %2680 = vmatpush1.bf16.msra.mxu0 %v659
      %2681 = vmatprep.subr.bf16.mxu0 0
      %2682 = vmatpush1.bf16.msra.mxu0 %v660
      %2683 = vmatprep.subr.bf16.mxu0 0
      %2684 = vmatpush1.bf16.msra.mxu0 %v661
      %2685 = vmatprep.subr.bf16.mxu0 0
      %2686 = vmatpush1.bf16.msra.mxu0 %v662
      %2687 = vmatprep.subr.bf16.mxu0 0
      %2688 = vmatpush1.bf16.msra.mxu0 %v663
      %2689 = vmatprep.subr.bf16.mxu0 0
      %2690 = vmatpush1.bf16.msra.mxu0 %v664
      %2691 = vmatprep.subr.bf16.mxu0 0
      %2692 = vmatpush1.bf16.msra.mxu0 %v665
      %2693 = vmatprep.subr.bf16.mxu0 0
      %2694 = vmatpush1.bf16.msra.mxu0 %v666
      %2695 = vmatprep.subr.bf16.mxu0 0
      %2696 = vmatpush1.bf16.msra.mxu0 %v667
      %2697 = vmatprep.subr.bf16.mxu0 0
      %2698 = vmatpush1.bf16.msra.mxu0 %v668
      %2699 = vmatprep.subr.bf16.mxu0 0
      %2700 = vmatpush1.bf16.msra.mxu0 %v669
      %2701 = vmatprep.subr.bf16.mxu0 0
      %2702 = vmatpush1.bf16.msra.mxu0 %v670
      %2703 = vmatprep.subr.bf16.mxu0 0
      %2704 = vmatpush1.bf16.msra.mxu0 %v671
      %2705 = vmatprep.mubr.bf16.mxu0 %v1923
      %2706 = vmatmul.mubr.bf16.gmra.mrb[0].mxu0 %v1922
      %v2707 = vpop.f32.mrb[0].mxu0
      %v2708 = vadd.f32 %v2531, %v2707
      %v2709 = vpop.f32.mrb[0].mxu0
      %v2710 = vpop.f32.mrb[0].mxu0
      %v2711 = vadd.f32 %v2534, %v2710
      %v2712 = vpop.f32.mrb[0].mxu0
      %2713 = vmatprep.mubr.bf16.mxu0 %v1939
      %2714 = vmatmul.mubr.bf16.gmra.mrb[0].mxu0 %v1938
      %v2715 = vpop.f32.mrb[0].mxu0
      %v2716 = vadd.f32 %v2539, %v2715
      %v2717 = vpop.f32.mrb[0].mxu0
      %v2718 = vpop.f32.mrb[0].mxu0
      %v2719 = vadd.f32 %v2542, %v2718
      %v2720 = vpop.f32.mrb[0].mxu0
      %2721 = vmatprep.mubr.bf16.mxu0 %v1955
      %2722 = vmatmul.mubr.bf16.gmra.mrb[0].mxu0 %v1954
      %v2723 = vpop.f32.mrb[0].mxu0
      %v2724 = vadd.f32 %v2547, %v2723
      %v2725 = vpop.f32.mrb[0].mxu0
      %v2726 = vpop.f32.mrb[0].mxu0
      %v2727 = vadd.f32 %v2550, %v2726
      %v2728 = vpop.f32.mrb[0].mxu0
      %2729 = vmatprep.mubr.bf16.mxu0 %v1971
      %2730 = vmatmul.mubr.bf16.gmra.mrb[0].mxu0 %v1970
      %v2731 = vpop.f32.mrb[0].mxu0
      %v2732 = vadd.f32 %v2555, %v2731
      %v2733 = vpop.f32.mrb[0].mxu0
      %v2734 = vpop.f32.mrb[0].mxu0
      %v2735 = vadd.f32 %v2558, %v2734
      %v2736 = vpop.f32.mrb[0].mxu0
      %2737 = vmatprep.mubr.bf16.mxu0 %v1987
      %2738 = vmatmul.mubr.bf16.gmra.mrb[0].mxu0 %v1986
      %v2739 = vpop.f32.mrb[0].mxu0
      %v2740 = vadd.f32 %v2563, %v2739
      %v2741 = vpop.f32.mrb[0].mxu0
      %v2742 = vpop.f32.mrb[0].mxu0
      %v2743 = vadd.f32 %v2566, %v2742
      %v2744 = vpop.f32.mrb[0].mxu0
      %2745 = vmatprep.mubr.bf16.mxu0 %v2003
      %2746 = vmatmul.mubr.bf16.gmra.mrb[0].mxu0 %v2002
      %v2747 = vpop.f32.mrb[0].mxu0
      %v2748 = vadd.f32 %v2571, %v2747
      %v2749 = vpop.f32.mrb[0].mxu0
      %v2750 = vpop.f32.mrb[0].mxu0
      %v2751 = vadd.f32 %v2574, %v2750
      %v2752 = vpop.f32.mrb[0].mxu0
      %2753 = vmatprep.mubr.bf16.mxu0 %v2019
      %2754 = vmatmul.mubr.bf16.gmra.mrb[0].mxu0 %v2018
      %v2755 = vpop.f32.mrb[0].mxu0
      %v2756 = vadd.f32 %v2579, %v2755
      %v2757 = vpop.f32.mrb[0].mxu0
      %v2758 = vpop.f32.mrb[0].mxu0
      %v2759 = vadd.f32 %v2582, %v2758
      %v2760 = vpop.f32.mrb[0].mxu0
      %2761 = vmatprep.mubr.bf16.mxu0 %v2035
      %2762 = vmatmul.mubr.bf16.gmra.mrb[0].mxu0 %v2034
      %v2763 = vpop.f32.mrb[0].mxu0
      %v2764 = vadd.f32 %v2587, %v2763
      %v2765 = vpop.f32.mrb[0].mxu0
      %v2766 = vpop.f32.mrb[0].mxu0
      %v2767 = vadd.f32 %v2590, %v2766
      %v2768 = vpop.f32.mrb[0].mxu0
      %2769 = vmatprep.mubr.bf16.mxu0 %v2051
      %2770 = vmatmul.mubr.bf16.gmra.mrb[0].mxu0 %v2050
      %v2771 = vpop.f32.mrb[0].mxu0
      %v2772 = vadd.f32 %v2595, %v2771
      %v2773 = vpop.f32.mrb[0].mxu0
      %v2774 = vpop.f32.mrb[0].mxu0
      %v2775 = vadd.f32 %v2598, %v2774
      %v2776 = vpop.f32.mrb[0].mxu0
      %2777 = vmatprep.mubr.bf16.mxu0 %v2067
      %2778 = vmatmul.mubr.bf16.gmra.mrb[0].mxu0 %v2066
      %v2779 = vpop.f32.mrb[0].mxu0
      %v2780 = vadd.f32 %v2603, %v2779
      %v2781 = vpop.f32.mrb[0].mxu0
      %v2782 = vpop.f32.mrb[0].mxu0
      %v2783 = vadd.f32 %v2606, %v2782
      %v2784 = vpop.f32.mrb[0].mxu0
      %2785 = vmatprep.mubr.bf16.mxu0 %v2083
      %2786 = vmatmul.mubr.bf16.gmra.mrb[0].mxu0 %v2082
      %v2787 = vpop.f32.mrb[0].mxu0
      %v2788 = vadd.f32 %v2611, %v2787
      %v2789 = vpop.f32.mrb[0].mxu0
      %v2790 = vpop.f32.mrb[0].mxu0
      %v2791 = vadd.f32 %v2614, %v2790
      %v2792 = vpop.f32.mrb[0].mxu0
      %2793 = vmatprep.mubr.bf16.mxu0 %v2099
      %2794 = vmatmul.mubr.bf16.gmra.mrb[0].mxu0 %v2098
      %v2795 = vpop.f32.mrb[0].mxu0
      %v2796 = vadd.f32 %v2619, %v2795
      %v2797 = vpop.f32.mrb[0].mxu0
      %v2798 = vpop.f32.mrb[0].mxu0
      %v2799 = vadd.f32 %v2622, %v2798
      %v2800 = vpop.f32.mrb[0].mxu0
      %2801 = vmatprep.mubr.bf16.mxu0 %v2115
      %2802 = vmatmul.mubr.bf16.gmra.mrb[0].mxu0 %v2114
      %v2803 = vpop.f32.mrb[0].mxu0
      %v2804 = vadd.f32 %v2627, %v2803
      %v2805 = vpop.f32.mrb[0].mxu0
      %v2806 = vpop.f32.mrb[0].mxu0
      %v2807 = vadd.f32 %v2630, %v2806
      %v2808 = vpop.f32.mrb[0].mxu0
      %2809 = vmatprep.mubr.bf16.mxu0 %v2131
      %2810 = vmatmul.mubr.bf16.gmra.mrb[0].mxu0 %v2130
      %v2811 = vpop.f32.mrb[0].mxu0
      %v2812 = vadd.f32 %v2635, %v2811
      %v2813 = vpop.f32.mrb[0].mxu0
      %v2814 = vpop.f32.mrb[0].mxu0
      %v2815 = vadd.f32 %v2638, %v2814
      %v2816 = vpop.f32.mrb[0].mxu0
      %2817 = vmatprep.mubr.bf16.mxu0 %v2147
      %2818 = vmatmul.mubr.bf16.gmra.mrb[0].mxu0 %v2146
      %v2819 = vpop.f32.mrb[0].mxu0
      %v2820 = vadd.f32 %v2643, %v2819
      %v2821 = vpop.f32.mrb[0].mxu0
      %v2822 = vpop.f32.mrb[0].mxu0
      %v2823 = vadd.f32 %v2646, %v2822
      %v2824 = vpop.f32.mrb[0].mxu0
      %2825 = vmatprep.mubr.bf16.mxu0 %v2163
      %2826 = vmatmul.mubr.bf16.gmra.mrb[0].mxu0 %v2162
      %v2827 = vpop.f32.mrb[0].mxu0
      %v2828 = vadd.f32 %v2651, %v2827
      %v2829 = vpop.f32.mrb[0].mxu0
      %v2830 = vpop.f32.mrb[0].mxu0
      %v2831 = vadd.f32 %v2654, %v2830
      %v2832 = vpop.f32.mrb[0].mxu0
      %2833 = vmatprep.mubr.bf16.mxu0 %v2179
      %2834 = vmatmul.mubr.bf16.gmra.mrb[0].mxu0 %v2178
      %v2835 = vpop.f32.mrb[0].mxu0
      %v2836 = vadd.f32 %v2659, %v2835
      %v2837 = vpop.f32.mrb[0].mxu0
      %v2838 = vpop.f32.mrb[0].mxu0
      %v2839 = vadd.f32 %v2662, %v2838
      %v2840 = vpop.f32.mrb[0].mxu0
      %2841 = vmatprep.mubr.bf16.mxu0 %v2195
      %2842 = vmatmul.mubr.bf16.gmra.mrb[0].mxu0 %v2194
      %v2843 = vpop.f32.mrb[0].mxu0
      %v2844 = vadd.f32 %v2667, %v2843
      %v2845 = vpop.f32.mrb[0].mxu0
      %v2846 = vpop.f32.mrb[0].mxu0
      %v2847 = vadd.f32 %v2670, %v2846
      %v2848 = vpop.f32.mrb[0].mxu0
      %2849 = vdwg.mxu0
      %2850 = vmatprep.subr.bf16.mxu0 0
      %2851 = vmatpush1.bf16.msra.mxu0 %v672
      %2852 = vmatprep.subr.bf16.mxu0 0
      %2853 = vmatpush1.bf16.msra.mxu0 %v673
      %2854 = vmatprep.subr.bf16.mxu0 0
      %2855 = vmatpush1.bf16.msra.mxu0 %v674
      %2856 = vmatprep.subr.bf16.mxu0 0
      %2857 = vmatpush1.bf16.msra.mxu0 %v675
      %2858 = vmatprep.subr.bf16.mxu0 0
      %2859 = vmatpush1.bf16.msra.mxu0 %v676
      %2860 = vmatprep.subr.bf16.mxu0 0
      %2861 = vmatpush1.bf16.msra.mxu0 %v677
      %2862 = vmatprep.subr.bf16.mxu0 0
      %2863 = vmatpush1.bf16.msra.mxu0 %v678
      %2864 = vmatprep.subr.bf16.mxu0 0
      %2865 = vmatpush1.bf16.msra.mxu0 %v679
      %2866 = vmatprep.subr.bf16.mxu0 0
      %2867 = vmatpush1.bf16.msra.mxu0 %v680
      %2868 = vmatprep.subr.bf16.mxu0 0
      %2869 = vmatpush1.bf16.msra.mxu0 %v681
      %2870 = vmatprep.subr.bf16.mxu0 0
      %2871 = vmatpush1.bf16.msra.mxu0 %v682
      %2872 = vmatprep.subr.bf16.mxu0 0
      %2873 = vmatpush1.bf16.msra.mxu0 %v683
      %2874 = vmatprep.subr.bf16.mxu0 0
      %2875 = vmatpush1.bf16.msra.mxu0 %v684
      %2876 = vmatprep.subr.bf16.mxu0 0
      %2877 = vmatpush1.bf16.msra.mxu0 %v685
      %2878 = vmatprep.subr.bf16.mxu0 0
      %2879 = vmatpush1.bf16.msra.mxu0 %v686
      %2880 = vmatprep.subr.bf16.mxu0 0
      %2881 = vmatpush1.bf16.msra.mxu0 %v687
      %2882 = vmatprep.mubr.bf16.mxu0 %v1925
      %2883 = vmatmul.mubr.bf16.gmra.mrb[0].mxu0 %v1924
      %v2884 = vpop.f32.mrb[0].mxu0
      %v2885 = vadd.f32 %v2708, %v2884
      %v2886 = vpop.f32.mrb[0].mxu0
      %v2887 = vpop.f32.mrb[0].mxu0
      %v2888 = vadd.f32 %v2711, %v2887
      %v2889 = vpop.f32.mrb[0].mxu0
      %2890 = vmatprep.mubr.bf16.mxu0 %v1941
      %2891 = vmatmul.mubr.bf16.gmra.mrb[0].mxu0 %v1940
      %v2892 = vpop.f32.mrb[0].mxu0
      %v2893 = vadd.f32 %v2716, %v2892
      %v2894 = vpop.f32.mrb[0].mxu0
      %v2895 = vpop.f32.mrb[0].mxu0
      %v2896 = vadd.f32 %v2719, %v2895
      %v2897 = vpop.f32.mrb[0].mxu0
      %2898 = vmatprep.mubr.bf16.mxu0 %v1957
      %2899 = vmatmul.mubr.bf16.gmra.mrb[0].mxu0 %v1956
      %v2900 = vpop.f32.mrb[0].mxu0
      %v2901 = vadd.f32 %v2724, %v2900
      %v2902 = vpop.f32.mrb[0].mxu0
      %v2903 = vpop.f32.mrb[0].mxu0
      %v2904 = vadd.f32 %v2727, %v2903
      %v2905 = vpop.f32.mrb[0].mxu0
      %2906 = vmatprep.mubr.bf16.mxu0 %v1973
      %2907 = vmatmul.mubr.bf16.gmra.mrb[0].mxu0 %v1972
      %v2908 = vpop.f32.mrb[0].mxu0
      %v2909 = vadd.f32 %v2732, %v2908
      %v2910 = vpop.f32.mrb[0].mxu0
      %v2911 = vpop.f32.mrb[0].mxu0
      %v2912 = vadd.f32 %v2735, %v2911
      %v2913 = vpop.f32.mrb[0].mxu0
      %2914 = vmatprep.mubr.bf16.mxu0 %v1989
      %2915 = vmatmul.mubr.bf16.gmra.mrb[0].mxu0 %v1988
      %v2916 = vpop.f32.mrb[0].mxu0
      %v2917 = vadd.f32 %v2740, %v2916
      %v2918 = vpop.f32.mrb[0].mxu0
      %v2919 = vpop.f32.mrb[0].mxu0
      %v2920 = vadd.f32 %v2743, %v2919
      %v2921 = vpop.f32.mrb[0].mxu0
      %2922 = vmatprep.mubr.bf16.mxu0 %v2005
      %2923 = vmatmul.mubr.bf16.gmra.mrb[0].mxu0 %v2004
      %v2924 = vpop.f32.mrb[0].mxu0
      %v2925 = vadd.f32 %v2748, %v2924
      %v2926 = vpop.f32.mrb[0].mxu0
      %v2927 = vpop.f32.mrb[0].mxu0
      %v2928 = vadd.f32 %v2751, %v2927
      %v2929 = vpop.f32.mrb[0].mxu0
      %2930 = vmatprep.mubr.bf16.mxu0 %v2021
      %2931 = vmatmul.mubr.bf16.gmra.mrb[0].mxu0 %v2020
      %v2932 = vpop.f32.mrb[0].mxu0
      %v2933 = vadd.f32 %v2756, %v2932
      %v2934 = vpop.f32.mrb[0].mxu0
      %v2935 = vpop.f32.mrb[0].mxu0
      %v2936 = vadd.f32 %v2759, %v2935
      %v2937 = vpop.f32.mrb[0].mxu0
      %2938 = vmatprep.mubr.bf16.mxu0 %v2037
      %2939 = vmatmul.mubr.bf16.gmra.mrb[0].mxu0 %v2036
      %v2940 = vpop.f32.mrb[0].mxu0
      %v2941 = vadd.f32 %v2764, %v2940
      %v2942 = vpop.f32.mrb[0].mxu0
      %v2943 = vpop.f32.mrb[0].mxu0
      %v2944 = vadd.f32 %v2767, %v2943
      %v2945 = vpop.f32.mrb[0].mxu0
      %2946 = vmatprep.mubr.bf16.mxu0 %v2053
      %2947 = vmatmul.mubr.bf16.gmra.mrb[0].mxu0 %v2052
      %v2948 = vpop.f32.mrb[0].mxu0
      %v2949 = vadd.f32 %v2772, %v2948
      %v2950 = vpop.f32.mrb[0].mxu0
      %v2951 = vpop.f32.mrb[0].mxu0
      %v2952 = vadd.f32 %v2775, %v2951
      %v2953 = vpop.f32.mrb[0].mxu0
      %2954 = vmatprep.mubr.bf16.mxu0 %v2069
      %2955 = vmatmul.mubr.bf16.gmra.mrb[0].mxu0 %v2068
      %v2956 = vpop.f32.mrb[0].mxu0
      %v2957 = vadd.f32 %v2780, %v2956
      %v2958 = vpop.f32.mrb[0].mxu0
      %v2959 = vpop.f32.mrb[0].mxu0
      %v2960 = vadd.f32 %v2783, %v2959
      %v2961 = vpop.f32.mrb[0].mxu0
      %2962 = vmatprep.mubr.bf16.mxu0 %v2085
      %2963 = vmatmul.mubr.bf16.gmra.mrb[0].mxu0 %v2084
      %v2964 = vpop.f32.mrb[0].mxu0
      %v2965 = vadd.f32 %v2788, %v2964
      %v2966 = vpop.f32.mrb[0].mxu0
      %v2967 = vpop.f32.mrb[0].mxu0
      %v2968 = vadd.f32 %v2791, %v2967
      %v2969 = vpop.f32.mrb[0].mxu0
      %2970 = vmatprep.mubr.bf16.mxu0 %v2101
      %2971 = vmatmul.mubr.bf16.gmra.mrb[0].mxu0 %v2100
      %v2972 = vpop.f32.mrb[0].mxu0
      %v2973 = vadd.f32 %v2796, %v2972
      %v2974 = vpop.f32.mrb[0].mxu0
      %v2975 = vpop.f32.mrb[0].mxu0
      %v2976 = vadd.f32 %v2799, %v2975
      %v2977 = vpop.f32.mrb[0].mxu0
      %2978 = vmatprep.mubr.bf16.mxu0 %v2117
      %2979 = vmatmul.mubr.bf16.gmra.mrb[0].mxu0 %v2116
      %v2980 = vpop.f32.mrb[0].mxu0
      %v2981 = vadd.f32 %v2804, %v2980
      %v2982 = vpop.f32.mrb[0].mxu0
      %v2983 = vpop.f32.mrb[0].mxu0
      %v2984 = vadd.f32 %v2807, %v2983
      %v2985 = vpop.f32.mrb[0].mxu0
      %2986 = vmatprep.mubr.bf16.mxu0 %v2133
      %2987 = vmatmul.mubr.bf16.gmra.mrb[0].mxu0 %v2132
      %v2988 = vpop.f32.mrb[0].mxu0
      %v2989 = vadd.f32 %v2812, %v2988
      %v2990 = vpop.f32.mrb[0].mxu0
      %v2991 = vpop.f32.mrb[0].mxu0
      %v2992 = vadd.f32 %v2815, %v2991
      %v2993 = vpop.f32.mrb[0].mxu0
      %2994 = vmatprep.mubr.bf16.mxu0 %v2149
      %2995 = vmatmul.mubr.bf16.gmra.mrb[0].mxu0 %v2148
      %v2996 = vpop.f32.mrb[0].mxu0
      %v2997 = vadd.f32 %v2820, %v2996
      %v2998 = vpop.f32.mrb[0].mxu0
      %v2999 = vpop.f32.mrb[0].mxu0
      %v3000 = vadd.f32 %v2823, %v2999
      %v3001 = vpop.f32.mrb[0].mxu0
      %3002 = vmatprep.mubr.bf16.mxu0 %v2165
      %3003 = vmatmul.mubr.bf16.gmra.mrb[0].mxu0 %v2164
      %v3004 = vpop.f32.mrb[0].mxu0
      %v3005 = vadd.f32 %v2828, %v3004
      %v3006 = vpop.f32.mrb[0].mxu0
      %v3007 = vpop.f32.mrb[0].mxu0
      %v3008 = vadd.f32 %v2831, %v3007
      %v3009 = vpop.f32.mrb[0].mxu0
      %3010 = vmatprep.mubr.bf16.mxu0 %v2181
      %3011 = vmatmul.mubr.bf16.gmra.mrb[0].mxu0 %v2180
      %v3012 = vpop.f32.mrb[0].mxu0
      %v3013 = vadd.f32 %v2836, %v3012
      %v3014 = vpop.f32.mrb[0].mxu0
      %v3015 = vpop.f32.mrb[0].mxu0
      %v3016 = vadd.f32 %v2839, %v3015
      %v3017 = vpop.f32.mrb[0].mxu0
      %3018 = vmatprep.mubr.bf16.mxu0 %v2197
      %3019 = vmatmul.mubr.bf16.gmra.mrb[0].mxu0 %v2196
      %v3020 = vpop.f32.mrb[0].mxu0
      %v3021 = vadd.f32 %v2844, %v3020
      %v3022 = vpop.f32.mrb[0].mxu0
      %v3023 = vpop.f32.mrb[0].mxu0
      %v3024 = vadd.f32 %v2847, %v3023
      %v3025 = vpop.f32.mrb[0].mxu0
      %3026 = vdwg.mxu0
      %3027 = vmatprep.subr.bf16.mxu0 0
      %3028 = vmatpush1.bf16.msra.mxu0 %v688
      %3029 = vmatprep.subr.bf16.mxu0 0
      %3030 = vmatpush1.bf16.msra.mxu0 %v689
      %3031 = vmatprep.subr.bf16.mxu0 0
      %3032 = vmatpush1.bf16.msra.mxu0 %v690
      %3033 = vmatprep.subr.bf16.mxu0 0
      %3034 = vmatpush1.bf16.msra.mxu0 %v691
      %3035 = vmatprep.subr.bf16.mxu0 0
      %3036 = vmatpush1.bf16.msra.mxu0 %v692
      %3037 = vmatprep.subr.bf16.mxu0 0
      %3038 = vmatpush1.bf16.msra.mxu0 %v693
      %3039 = vmatprep.subr.bf16.mxu0 0
      %3040 = vmatpush1.bf16.msra.mxu0 %v694
      %3041 = vmatprep.subr.bf16.mxu0 0
      %3042 = vmatpush1.bf16.msra.mxu0 %v695
      %3043 = vmatprep.subr.bf16.mxu0 0
      %3044 = vmatpush1.bf16.msra.mxu0 %v696
      %3045 = vmatprep.subr.bf16.mxu0 0
      %3046 = vmatpush1.bf16.msra.mxu0 %v697
      %3047 = vmatprep.subr.bf16.mxu0 0
      %3048 = vmatpush1.bf16.msra.mxu0 %v698
      %3049 = vmatprep.subr.bf16.mxu0 0
      %3050 = vmatpush1.bf16.msra.mxu0 %v699
      %3051 = vmatprep.subr.bf16.mxu0 0
      %3052 = vmatpush1.bf16.msra.mxu0 %v700
      %3053 = vmatprep.subr.bf16.mxu0 0
      %3054 = vmatpush1.bf16.msra.mxu0 %v701
      %3055 = vmatprep.subr.bf16.mxu0 0
      %3056 = vmatpush1.bf16.msra.mxu0 %v702
      %3057 = vmatprep.subr.bf16.mxu0 0
      %3058 = vmatpush1.bf16.msra.mxu0 %v703
      %3059 = vmatprep.mubr.bf16.mxu0 %v1927
      %3060 = vmatmul.mubr.bf16.gmra.mrb[0].mxu0 %v1926
      %v3061 = vpop.f32.mrb[0].mxu0
      %v3062 = vadd.f32 %v2885, %v3061
      %v3063 = vpop.f32.mrb[0].mxu0
      %v3064 = vpop.f32.mrb[0].mxu0
      %v3065 = vadd.f32 %v2888, %v3064
      %v3066 = vpop.f32.mrb[0].mxu0
      %3067 = vmatprep.mubr.bf16.mxu0 %v1943
      %3068 = vmatmul.mubr.bf16.gmra.mrb[0].mxu0 %v1942
      %v3069 = vpop.f32.mrb[0].mxu0
      %v3070 = vadd.f32 %v2893, %v3069
      %v3071 = vpop.f32.mrb[0].mxu0
      %v3072 = vpop.f32.mrb[0].mxu0
      %v3073 = vadd.f32 %v2896, %v3072
      %v3074 = vpop.f32.mrb[0].mxu0
      %3075 = vmatprep.mubr.bf16.mxu0 %v1959
      %3076 = vmatmul.mubr.bf16.gmra.mrb[0].mxu0 %v1958
      %v3077 = vpop.f32.mrb[0].mxu0
      %v3078 = vadd.f32 %v2901, %v3077
      %v3079 = vpop.f32.mrb[0].mxu0
      %v3080 = vpop.f32.mrb[0].mxu0
      %v3081 = vadd.f32 %v2904, %v3080
      %v3082 = vpop.f32.mrb[0].mxu0
      %3083 = vmatprep.mubr.bf16.mxu0 %v1975
      %3084 = vmatmul.mubr.bf16.gmra.mrb[0].mxu0 %v1974
      %v3085 = vpop.f32.mrb[0].mxu0
      %v3086 = vadd.f32 %v2909, %v3085
      %v3087 = vpop.f32.mrb[0].mxu0
      %v3088 = vpop.f32.mrb[0].mxu0
      %v3089 = vadd.f32 %v2912, %v3088
      %v3090 = vpop.f32.mrb[0].mxu0
      %3091 = vmatprep.mubr.bf16.mxu0 %v1991
      %3092 = vmatmul.mubr.bf16.gmra.mrb[0].mxu0 %v1990
      %v3093 = vpop.f32.mrb[0].mxu0
      %v3094 = vadd.f32 %v2917, %v3093
      %v3095 = vpop.f32.mrb[0].mxu0
      %v3096 = vpop.f32.mrb[0].mxu0
      %v3097 = vadd.f32 %v2920, %v3096
      %v3098 = vpop.f32.mrb[0].mxu0
      %3099 = vmatprep.mubr.bf16.mxu0 %v2007
      %3100 = vmatmul.mubr.bf16.gmra.mrb[0].mxu0 %v2006
      %v3101 = vpop.f32.mrb[0].mxu0
      %v3102 = vadd.f32 %v2925, %v3101
      %v3103 = vpop.f32.mrb[0].mxu0
      %v3104 = vpop.f32.mrb[0].mxu0
      %v3105 = vadd.f32 %v2928, %v3104
      %v3106 = vpop.f32.mrb[0].mxu0
      %3107 = vmatprep.mubr.bf16.mxu0 %v2023
      %3108 = vmatmul.mubr.bf16.gmra.mrb[0].mxu0 %v2022
      %v3109 = vpop.f32.mrb[0].mxu0
      %v3110 = vadd.f32 %v2933, %v3109
      %v3111 = vpop.f32.mrb[0].mxu0
      %v3112 = vpop.f32.mrb[0].mxu0
      %v3113 = vadd.f32 %v2936, %v3112
      %v3114 = vpop.f32.mrb[0].mxu0
      %3115 = vmatprep.mubr.bf16.mxu0 %v2039
      %3116 = vmatmul.mubr.bf16.gmra.mrb[0].mxu0 %v2038
      %v3117 = vpop.f32.mrb[0].mxu0
      %v3118 = vadd.f32 %v2941, %v3117
      %v3119 = vpop.f32.mrb[0].mxu0
      %v3120 = vpop.f32.mrb[0].mxu0
      %v3121 = vadd.f32 %v2944, %v3120
      %v3122 = vpop.f32.mrb[0].mxu0
      %3123 = vmatprep.mubr.bf16.mxu0 %v2055
      %3124 = vmatmul.mubr.bf16.gmra.mrb[0].mxu0 %v2054
      %v3125 = vpop.f32.mrb[0].mxu0
      %v3126 = vadd.f32 %v2949, %v3125
      %v3127 = vpop.f32.mrb[0].mxu0
      %v3128 = vpop.f32.mrb[0].mxu0
      %v3129 = vadd.f32 %v2952, %v3128
      %v3130 = vpop.f32.mrb[0].mxu0
      %3131 = vmatprep.mubr.bf16.mxu0 %v2071
      %3132 = vmatmul.mubr.bf16.gmra.mrb[0].mxu0 %v2070
      %v3133 = vpop.f32.mrb[0].mxu0
      %v3134 = vadd.f32 %v2957, %v3133
      %v3135 = vpop.f32.mrb[0].mxu0
      %v3136 = vpop.f32.mrb[0].mxu0
      %v3137 = vadd.f32 %v2960, %v3136
      %v3138 = vpop.f32.mrb[0].mxu0
      %3139 = vmatprep.mubr.bf16.mxu0 %v2087
      %3140 = vmatmul.mubr.bf16.gmra.mrb[0].mxu0 %v2086
      %v3141 = vpop.f32.mrb[0].mxu0
      %v3142 = vadd.f32 %v2965, %v3141
      %v3143 = vpop.f32.mrb[0].mxu0
      %v3144 = vpop.f32.mrb[0].mxu0
      %v3145 = vadd.f32 %v2968, %v3144
      %v3146 = vpop.f32.mrb[0].mxu0
      %3147 = vmatprep.mubr.bf16.mxu0 %v2103
      %3148 = vmatmul.mubr.bf16.gmra.mrb[0].mxu0 %v2102
      %v3149 = vpop.f32.mrb[0].mxu0
      %v3150 = vadd.f32 %v2973, %v3149
      %v3151 = vpop.f32.mrb[0].mxu0
      %v3152 = vpop.f32.mrb[0].mxu0
      %v3153 = vadd.f32 %v2976, %v3152
      %v3154 = vpop.f32.mrb[0].mxu0
      %3155 = vmatprep.mubr.bf16.mxu0 %v2119
      %3156 = vmatmul.mubr.bf16.gmra.mrb[0].mxu0 %v2118
      %v3157 = vpop.f32.mrb[0].mxu0
      %v3158 = vadd.f32 %v2981, %v3157
      %v3159 = vpop.f32.mrb[0].mxu0
      %v3160 = vpop.f32.mrb[0].mxu0
      %v3161 = vadd.f32 %v2984, %v3160
      %v3162 = vpop.f32.mrb[0].mxu0
      %3163 = vmatprep.mubr.bf16.mxu0 %v2135
      %3164 = vmatmul.mubr.bf16.gmra.mrb[0].mxu0 %v2134
      %v3165 = vpop.f32.mrb[0].mxu0
      %v3166 = vadd.f32 %v2989, %v3165
      %v3167 = vpop.f32.mrb[0].mxu0
      %v3168 = vpop.f32.mrb[0].mxu0
      %v3169 = vadd.f32 %v2992, %v3168
      %v3170 = vpop.f32.mrb[0].mxu0
      %3171 = vmatprep.mubr.bf16.mxu0 %v2151
      %3172 = vmatmul.mubr.bf16.gmra.mrb[0].mxu0 %v2150
      %v3173 = vpop.f32.mrb[0].mxu0
      %v3174 = vadd.f32 %v2997, %v3173
      %v3175 = vpop.f32.mrb[0].mxu0
      %v3176 = vpop.f32.mrb[0].mxu0
      %v3177 = vadd.f32 %v3000, %v3176
      %v3178 = vpop.f32.mrb[0].mxu0
      %3179 = vmatprep.mubr.bf16.mxu0 %v2167
      %3180 = vmatmul.mubr.bf16.gmra.mrb[0].mxu0 %v2166
      %v3181 = vpop.f32.mrb[0].mxu0
      %v3182 = vadd.f32 %v3005, %v3181
      %v3183 = vpop.f32.mrb[0].mxu0
      %v3184 = vpop.f32.mrb[0].mxu0
      %v3185 = vadd.f32 %v3008, %v3184
      %v3186 = vpop.f32.mrb[0].mxu0
      %3187 = vmatprep.mubr.bf16.mxu0 %v2183
      %3188 = vmatmul.mubr.bf16.gmra.mrb[0].mxu0 %v2182
      %v3189 = vpop.f32.mrb[0].mxu0
      %v3190 = vadd.f32 %v3013, %v3189
      %v3191 = vpop.f32.mrb[0].mxu0
      %v3192 = vpop.f32.mrb[0].mxu0
      %v3193 = vadd.f32 %v3016, %v3192
      %v3194 = vpop.f32.mrb[0].mxu0
      %3195 = vmatprep.mubr.bf16.mxu0 %v2199
      %3196 = vmatmul.mubr.bf16.gmra.mrb[0].mxu0 %v2198
      %v3197 = vpop.f32.mrb[0].mxu0
      %v3198 = vadd.f32 %v3021, %v3197
      %v3199 = vpop.f32.mrb[0].mxu0
      %v3200 = vpop.f32.mrb[0].mxu0
      %v3201 = vadd.f32 %v3024, %v3200
      %v3202 = vpop.f32.mrb[0].mxu0
      %3203 = vdwg.mxu0
      %3204 = vmatprep.subr.bf16.mxu0 0
      %3205 = vmatpush1.bf16.msra.mxu0 %v704
      %3206 = vmatprep.subr.bf16.mxu0 0
      %3207 = vmatpush1.bf16.msra.mxu0 %v705
      %3208 = vmatprep.subr.bf16.mxu0 0
      %3209 = vmatpush1.bf16.msra.mxu0 %v706
      %3210 = vmatprep.subr.bf16.mxu0 0
      %3211 = vmatpush1.bf16.msra.mxu0 %v707
      %3212 = vmatprep.subr.bf16.mxu0 0
      %3213 = vmatpush1.bf16.msra.mxu0 %v708
      %3214 = vmatprep.subr.bf16.mxu0 0
      %3215 = vmatpush1.bf16.msra.mxu0 %v709
      %3216 = vmatprep.subr.bf16.mxu0 0
      %3217 = vmatpush1.bf16.msra.mxu0 %v710
      %3218 = vmatprep.subr.bf16.mxu0 0
      %3219 = vmatpush1.bf16.msra.mxu0 %v711
      %3220 = vmatprep.subr.bf16.mxu0 0
      %3221 = vmatpush1.bf16.msra.mxu0 %v712
      %3222 = vmatprep.subr.bf16.mxu0 0
      %3223 = vmatpush1.bf16.msra.mxu0 %v713
      %3224 = vmatprep.subr.bf16.mxu0 0
      %3225 = vmatpush1.bf16.msra.mxu0 %v714
      %3226 = vmatprep.subr.bf16.mxu0 0
      %3227 = vmatpush1.bf16.msra.mxu0 %v715
      %3228 = vmatprep.subr.bf16.mxu0 0
      %3229 = vmatpush1.bf16.msra.mxu0 %v716
      %3230 = vmatprep.subr.bf16.mxu0 0
      %3231 = vmatpush1.bf16.msra.mxu0 %v717
      %3232 = vmatprep.subr.bf16.mxu0 0
      %3233 = vmatpush1.bf16.msra.mxu0 %v718
      %3234 = vmatprep.subr.bf16.mxu0 0
      %3235 = vmatpush1.bf16.msra.mxu0 %v719
      %3236 = vmatprep.mubr.bf16.mxu0 %v1929
      %3237 = vmatmul.mubr.bf16.gmra.mrb[0].mxu0 %v1928
      %v3238 = vpop.f32.mrb[0].mxu0
      %v3239 = vadd.f32 %v3062, %v3238
      %v3240 = vpop.f32.mrb[0].mxu0
      %v3241 = vpop.f32.mrb[0].mxu0
      %v3242 = vadd.f32 %v3065, %v3241
      %v3243 = vpop.f32.mrb[0].mxu0
      %3244 = vmatprep.mubr.bf16.mxu0 %v1945
      %3245 = vmatmul.mubr.bf16.gmra.mrb[0].mxu0 %v1944
      %v3246 = vpop.f32.mrb[0].mxu0
      %v3247 = vadd.f32 %v3070, %v3246
      %v3248 = vpop.f32.mrb[0].mxu0
      %v3249 = vpop.f32.mrb[0].mxu0
      %v3250 = vadd.f32 %v3073, %v3249
      %v3251 = vpop.f32.mrb[0].mxu0
      %3252 = vmatprep.mubr.bf16.mxu0 %v1961
      %3253 = vmatmul.mubr.bf16.gmra.mrb[0].mxu0 %v1960
      %v3254 = vpop.f32.mrb[0].mxu0
      %v3255 = vadd.f32 %v3078, %v3254
      %v3256 = vpop.f32.mrb[0].mxu0
      %v3257 = vpop.f32.mrb[0].mxu0
      %v3258 = vadd.f32 %v3081, %v3257
      %v3259 = vpop.f32.mrb[0].mxu0
      %3260 = vmatprep.mubr.bf16.mxu0 %v1977
      %3261 = vmatmul.mubr.bf16.gmra.mrb[0].mxu0 %v1976
      %v3262 = vpop.f32.mrb[0].mxu0
      %v3263 = vadd.f32 %v3086, %v3262
      %v3264 = vpop.f32.mrb[0].mxu0
      %v3265 = vpop.f32.mrb[0].mxu0
      %v3266 = vadd.f32 %v3089, %v3265
      %v3267 = vpop.f32.mrb[0].mxu0
      %3268 = vmatprep.mubr.bf16.mxu0 %v1993
      %3269 = vmatmul.mubr.bf16.gmra.mrb[0].mxu0 %v1992
      %v3270 = vpop.f32.mrb[0].mxu0
      %v3271 = vadd.f32 %v3094, %v3270
      %v3272 = vpop.f32.mrb[0].mxu0
      %v3273 = vpop.f32.mrb[0].mxu0
      %v3274 = vadd.f32 %v3097, %v3273
      %v3275 = vpop.f32.mrb[0].mxu0
      %3276 = vmatprep.mubr.bf16.mxu0 %v2009
      %3277 = vmatmul.mubr.bf16.gmra.mrb[0].mxu0 %v2008
      %v3278 = vpop.f32.mrb[0].mxu0
      %v3279 = vadd.f32 %v3102, %v3278
      %v3280 = vpop.f32.mrb[0].mxu0
      %v3281 = vpop.f32.mrb[0].mxu0
      %v3282 = vadd.f32 %v3105, %v3281
      %v3283 = vpop.f32.mrb[0].mxu0
      %3284 = vmatprep.mubr.bf16.mxu0 %v2025
      %3285 = vmatmul.mubr.bf16.gmra.mrb[0].mxu0 %v2024
      %v3286 = vpop.f32.mrb[0].mxu0
      %v3287 = vadd.f32 %v3110, %v3286
      %v3288 = vpop.f32.mrb[0].mxu0
      %v3289 = vpop.f32.mrb[0].mxu0
      %v3290 = vadd.f32 %v3113, %v3289
      %v3291 = vpop.f32.mrb[0].mxu0
      %3292 = vmatprep.mubr.bf16.mxu0 %v2041
      %3293 = vmatmul.mubr.bf16.gmra.mrb[0].mxu0 %v2040
      %v3294 = vpop.f32.mrb[0].mxu0
      %v3295 = vadd.f32 %v3118, %v3294
      %v3296 = vpop.f32.mrb[0].mxu0
      %v3297 = vpop.f32.mrb[0].mxu0
      %v3298 = vadd.f32 %v3121, %v3297
      %v3299 = vpop.f32.mrb[0].mxu0
      %3300 = vmatprep.mubr.bf16.mxu0 %v2057
      %3301 = vmatmul.mubr.bf16.gmra.mrb[0].mxu0 %v2056
      %v3302 = vpop.f32.mrb[0].mxu0
      %v3303 = vadd.f32 %v3126, %v3302
      %v3304 = vpop.f32.mrb[0].mxu0
      %v3305 = vpop.f32.mrb[0].mxu0
      %v3306 = vadd.f32 %v3129, %v3305
      %v3307 = vpop.f32.mrb[0].mxu0
      %3308 = vmatprep.mubr.bf16.mxu0 %v2073
      %3309 = vmatmul.mubr.bf16.gmra.mrb[0].mxu0 %v2072
      %v3310 = vpop.f32.mrb[0].mxu0
      %v3311 = vadd.f32 %v3134, %v3310
      %v3312 = vpop.f32.mrb[0].mxu0
      %v3313 = vpop.f32.mrb[0].mxu0
      %v3314 = vadd.f32 %v3137, %v3313
      %v3315 = vpop.f32.mrb[0].mxu0
      %3316 = vmatprep.mubr.bf16.mxu0 %v2089
      %3317 = vmatmul.mubr.bf16.gmra.mrb[0].mxu0 %v2088
      %v3318 = vpop.f32.mrb[0].mxu0
      %v3319 = vadd.f32 %v3142, %v3318
      %v3320 = vpop.f32.mrb[0].mxu0
      %v3321 = vpop.f32.mrb[0].mxu0
      %v3322 = vadd.f32 %v3145, %v3321
      %v3323 = vpop.f32.mrb[0].mxu0
      %3324 = vmatprep.mubr.bf16.mxu0 %v2105
      %3325 = vmatmul.mubr.bf16.gmra.mrb[0].mxu0 %v2104
      %v3326 = vpop.f32.mrb[0].mxu0
      %v3327 = vadd.f32 %v3150, %v3326
      %v3328 = vpop.f32.mrb[0].mxu0
      %v3329 = vpop.f32.mrb[0].mxu0
      %v3330 = vadd.f32 %v3153, %v3329
      %v3331 = vpop.f32.mrb[0].mxu0
      %3332 = vmatprep.mubr.bf16.mxu0 %v2121
      %3333 = vmatmul.mubr.bf16.gmra.mrb[0].mxu0 %v2120
      %v3334 = vpop.f32.mrb[0].mxu0
      %v3335 = vadd.f32 %v3158, %v3334
      %v3336 = vpop.f32.mrb[0].mxu0
      %v3337 = vpop.f32.mrb[0].mxu0
      %v3338 = vadd.f32 %v3161, %v3337
      %v3339 = vpop.f32.mrb[0].mxu0
      %3340 = vmatprep.mubr.bf16.mxu0 %v2137
      %3341 = vmatmul.mubr.bf16.gmra.mrb[0].mxu0 %v2136
      %v3342 = vpop.f32.mrb[0].mxu0
      %v3343 = vadd.f32 %v3166, %v3342
      %v3344 = vpop.f32.mrb[0].mxu0
      %v3345 = vpop.f32.mrb[0].mxu0
      %v3346 = vadd.f32 %v3169, %v3345
      %v3347 = vpop.f32.mrb[0].mxu0
      %3348 = vmatprep.mubr.bf16.mxu0 %v2153
      %3349 = vmatmul.mubr.bf16.gmra.mrb[0].mxu0 %v2152
      %v3350 = vpop.f32.mrb[0].mxu0
      %v3351 = vadd.f32 %v3174, %v3350
      %v3352 = vpop.f32.mrb[0].mxu0
      %v3353 = vpop.f32.mrb[0].mxu0
      %v3354 = vadd.f32 %v3177, %v3353
      %v3355 = vpop.f32.mrb[0].mxu0
      %3356 = vmatprep.mubr.bf16.mxu0 %v2169
      %3357 = vmatmul.mubr.bf16.gmra.mrb[0].mxu0 %v2168
      %v3358 = vpop.f32.mrb[0].mxu0
      %v3359 = vadd.f32 %v3182, %v3358
      %v3360 = vpop.f32.mrb[0].mxu0
      %v3361 = vpop.f32.mrb[0].mxu0
      %v3362 = vadd.f32 %v3185, %v3361
      %v3363 = vpop.f32.mrb[0].mxu0
      %3364 = vmatprep.mubr.bf16.mxu0 %v2185
      %3365 = vmatmul.mubr.bf16.gmra.mrb[0].mxu0 %v2184
      %v3366 = vpop.f32.mrb[0].mxu0
      %v3367 = vadd.f32 %v3190, %v3366
      %v3368 = vpop.f32.mrb[0].mxu0
      %v3369 = vpop.f32.mrb[0].mxu0
      %v3370 = vadd.f32 %v3193, %v3369
      %v3371 = vpop.f32.mrb[0].mxu0
      %3372 = vmatprep.mubr.bf16.mxu0 %v2201
      %3373 = vmatmul.mubr.bf16.gmra.mrb[0].mxu0 %v2200
      %v3374 = vpop.f32.mrb[0].mxu0
      %v3375 = vadd.f32 %v3198, %v3374
      %v3376 = vpop.f32.mrb[0].mxu0
      %v3377 = vpop.f32.mrb[0].mxu0
      %v3378 = vadd.f32 %v3201, %v3377
      %v3379 = vpop.f32.mrb[0].mxu0
      %3380 = vdwg.mxu0
      %3381 = vmatprep.subr.bf16.mxu0 0
      %3382 = vmatpush1.bf16.msra.mxu0 %v720
      %3383 = vmatprep.subr.bf16.mxu0 0
      %3384 = vmatpush1.bf16.msra.mxu0 %v721
      %3385 = vmatprep.subr.bf16.mxu0 0
      %3386 = vmatpush1.bf16.msra.mxu0 %v722
      %3387 = vmatprep.subr.bf16.mxu0 0
      %3388 = vmatpush1.bf16.msra.mxu0 %v723
      %3389 = vmatprep.subr.bf16.mxu0 0
      %3390 = vmatpush1.bf16.msra.mxu0 %v724
      %3391 = vmatprep.subr.bf16.mxu0 0
      %3392 = vmatpush1.bf16.msra.mxu0 %v725
      %3393 = vmatprep.subr.bf16.mxu0 0
      %3394 = vmatpush1.bf16.msra.mxu0 %v726
      %3395 = vmatprep.subr.bf16.mxu0 0
      %3396 = vmatpush1.bf16.msra.mxu0 %v727
      %3397 = vmatprep.subr.bf16.mxu0 0
      %3398 = vmatpush1.bf16.msra.mxu0 %v728
      %3399 = vmatprep.subr.bf16.mxu0 0
      %3400 = vmatpush1.bf16.msra.mxu0 %v729
      %3401 = vmatprep.subr.bf16.mxu0 0
      %3402 = vmatpush1.bf16.msra.mxu0 %v730
      %3403 = vmatprep.subr.bf16.mxu0 0
      %3404 = vmatpush1.bf16.msra.mxu0 %v731
      %3405 = vmatprep.subr.bf16.mxu0 0
      %3406 = vmatpush1.bf16.msra.mxu0 %v732
      %3407 = vmatprep.subr.bf16.mxu0 0
      %3408 = vmatpush1.bf16.msra.mxu0 %v733
      %3409 = vmatprep.subr.bf16.mxu0 0
      %3410 = vmatpush1.bf16.msra.mxu0 %v734
      %3411 = vmatprep.subr.bf16.mxu0 0
      %3412 = vmatpush1.bf16.msra.mxu0 %v735
      %3413 = vmatprep.mubr.bf16.mxu0 %v1931
      %3414 = vmatmul.mubr.bf16.gmra.mrb[0].mxu0 %v1930
      %v3415 = vpop.f32.mrb[0].mxu0
      %v3416 = vadd.f32 %v3239, %v3415
      %v3417 = vpop.f32.mrb[0].mxu0
      %v3418 = vpop.f32.mrb[0].mxu0
      %v3419 = vadd.f32 %v3242, %v3418
      %v3420 = vpop.f32.mrb[0].mxu0
      %3421 = vmatprep.mubr.bf16.mxu0 %v1947
      %3422 = vmatmul.mubr.bf16.gmra.mrb[0].mxu0 %v1946
      %v3423 = vpop.f32.mrb[0].mxu0
      %v3424 = vadd.f32 %v3247, %v3423
      %v3425 = vpop.f32.mrb[0].mxu0
      %v3426 = vpop.f32.mrb[0].mxu0
      %v3427 = vadd.f32 %v3250, %v3426
      %v3428 = vpop.f32.mrb[0].mxu0
      %3429 = vmatprep.mubr.bf16.mxu0 %v1963
      %3430 = vmatmul.mubr.bf16.gmra.mrb[0].mxu0 %v1962
      %v3431 = vpop.f32.mrb[0].mxu0
      %v3432 = vadd.f32 %v3255, %v3431
      %v3433 = vpop.f32.mrb[0].mxu0
      %v3434 = vpop.f32.mrb[0].mxu0
      %v3435 = vadd.f32 %v3258, %v3434
      %v3436 = vpop.f32.mrb[0].mxu0
      %3437 = vmatprep.mubr.bf16.mxu0 %v1979
      %3438 = vmatmul.mubr.bf16.gmra.mrb[0].mxu0 %v1978
      %v3439 = vpop.f32.mrb[0].mxu0
      %v3440 = vadd.f32 %v3263, %v3439
      %v3441 = vpop.f32.mrb[0].mxu0
      %v3442 = vpop.f32.mrb[0].mxu0
      %v3443 = vadd.f32 %v3266, %v3442
      %v3444 = vpop.f32.mrb[0].mxu0
      %3445 = vmatprep.mubr.bf16.mxu0 %v1995
      %3446 = vmatmul.mubr.bf16.gmra.mrb[0].mxu0 %v1994
      %v3447 = vpop.f32.mrb[0].mxu0
      %v3448 = vadd.f32 %v3271, %v3447
      %v3449 = vpop.f32.mrb[0].mxu0
      %v3450 = vpop.f32.mrb[0].mxu0
      %v3451 = vadd.f32 %v3274, %v3450
      %v3452 = vpop.f32.mrb[0].mxu0
      %3453 = vmatprep.mubr.bf16.mxu0 %v2011
      %3454 = vmatmul.mubr.bf16.gmra.mrb[0].mxu0 %v2010
      %v3455 = vpop.f32.mrb[0].mxu0
      %v3456 = vadd.f32 %v3279, %v3455
      %v3457 = vpop.f32.mrb[0].mxu0
      %v3458 = vpop.f32.mrb[0].mxu0
      %v3459 = vadd.f32 %v3282, %v3458
      %v3460 = vpop.f32.mrb[0].mxu0
      %3461 = vmatprep.mubr.bf16.mxu0 %v2027
      %3462 = vmatmul.mubr.bf16.gmra.mrb[0].mxu0 %v2026
      %v3463 = vpop.f32.mrb[0].mxu0
      %v3464 = vadd.f32 %v3287, %v3463
      %v3465 = vpop.f32.mrb[0].mxu0
      %v3466 = vpop.f32.mrb[0].mxu0
      %v3467 = vadd.f32 %v3290, %v3466
      %v3468 = vpop.f32.mrb[0].mxu0
      %3469 = vmatprep.mubr.bf16.mxu0 %v2043
      %3470 = vmatmul.mubr.bf16.gmra.mrb[0].mxu0 %v2042
      %v3471 = vpop.f32.mrb[0].mxu0
      %v3472 = vadd.f32 %v3295, %v3471
      %v3473 = vpop.f32.mrb[0].mxu0
      %v3474 = vpop.f32.mrb[0].mxu0
      %v3475 = vadd.f32 %v3298, %v3474
      %v3476 = vpop.f32.mrb[0].mxu0
      %3477 = vmatprep.mubr.bf16.mxu0 %v2059
      %3478 = vmatmul.mubr.bf16.gmra.mrb[0].mxu0 %v2058
      %v3479 = vpop.f32.mrb[0].mxu0
      %v3480 = vadd.f32 %v3303, %v3479
      %v3481 = vpop.f32.mrb[0].mxu0
      %v3482 = vpop.f32.mrb[0].mxu0
      %v3483 = vadd.f32 %v3306, %v3482
      %v3484 = vpop.f32.mrb[0].mxu0
      %3485 = vmatprep.mubr.bf16.mxu0 %v2075
      %3486 = vmatmul.mubr.bf16.gmra.mrb[0].mxu0 %v2074
      %v3487 = vpop.f32.mrb[0].mxu0
      %v3488 = vadd.f32 %v3311, %v3487
      %v3489 = vpop.f32.mrb[0].mxu0
      %v3490 = vpop.f32.mrb[0].mxu0
      %v3491 = vadd.f32 %v3314, %v3490
      %v3492 = vpop.f32.mrb[0].mxu0
      %3493 = vmatprep.mubr.bf16.mxu0 %v2091
      %3494 = vmatmul.mubr.bf16.gmra.mrb[0].mxu0 %v2090
      %v3495 = vpop.f32.mrb[0].mxu0
      %v3496 = vadd.f32 %v3319, %v3495
      %v3497 = vpop.f32.mrb[0].mxu0
      %v3498 = vpop.f32.mrb[0].mxu0
      %v3499 = vadd.f32 %v3322, %v3498
      %v3500 = vpop.f32.mrb[0].mxu0
      %3501 = vmatprep.mubr.bf16.mxu0 %v2107
      %3502 = vmatmul.mubr.bf16.gmra.mrb[0].mxu0 %v2106
      %v3503 = vpop.f32.mrb[0].mxu0
      %v3504 = vadd.f32 %v3327, %v3503
      %v3505 = vpop.f32.mrb[0].mxu0
      %v3506 = vpop.f32.mrb[0].mxu0
      %v3507 = vadd.f32 %v3330, %v3506
      %v3508 = vpop.f32.mrb[0].mxu0
      %3509 = vmatprep.mubr.bf16.mxu0 %v2123
      %3510 = vmatmul.mubr.bf16.gmra.mrb[0].mxu0 %v2122
      %v3511 = vpop.f32.mrb[0].mxu0
      %v3512 = vadd.f32 %v3335, %v3511
      %v3513 = vpop.f32.mrb[0].mxu0
      %v3514 = vpop.f32.mrb[0].mxu0
      %v3515 = vadd.f32 %v3338, %v3514
      %v3516 = vpop.f32.mrb[0].mxu0
      %3517 = vmatprep.mubr.bf16.mxu0 %v2139
      %3518 = vmatmul.mubr.bf16.gmra.mrb[0].mxu0 %v2138
      %v3519 = vpop.f32.mrb[0].mxu0
      %v3520 = vadd.f32 %v3343, %v3519
      %v3521 = vpop.f32.mrb[0].mxu0
      %v3522 = vpop.f32.mrb[0].mxu0
      %v3523 = vadd.f32 %v3346, %v3522
      %v3524 = vpop.f32.mrb[0].mxu0
      %3525 = vmatprep.mubr.bf16.mxu0 %v2155
      %3526 = vmatmul.mubr.bf16.gmra.mrb[0].mxu0 %v2154
      %v3527 = vpop.f32.mrb[0].mxu0
      %v3528 = vadd.f32 %v3351, %v3527
      %v3529 = vpop.f32.mrb[0].mxu0
      %v3530 = vpop.f32.mrb[0].mxu0
      %v3531 = vadd.f32 %v3354, %v3530
      %v3532 = vpop.f32.mrb[0].mxu0
      %3533 = vmatprep.mubr.bf16.mxu0 %v2171
      %3534 = vmatmul.mubr.bf16.gmra.mrb[0].mxu0 %v2170
      %v3535 = vpop.f32.mrb[0].mxu0
      %v3536 = vadd.f32 %v3359, %v3535
      %v3537 = vpop.f32.mrb[0].mxu0
      %v3538 = vpop.f32.mrb[0].mxu0
      %v3539 = vadd.f32 %v3362, %v3538
      %v3540 = vpop.f32.mrb[0].mxu0
      %3541 = vmatprep.mubr.bf16.mxu0 %v2187
      %3542 = vmatmul.mubr.bf16.gmra.mrb[0].mxu0 %v2186
      %v3543 = vpop.f32.mrb[0].mxu0
      %v3544 = vadd.f32 %v3367, %v3543
      %v3545 = vpop.f32.mrb[0].mxu0
      %v3546 = vpop.f32.mrb[0].mxu0
      %v3547 = vadd.f32 %v3370, %v3546
      %v3548 = vpop.f32.mrb[0].mxu0
      %3549 = vmatprep.mubr.bf16.mxu0 %v2203
      %3550 = vmatmul.mubr.bf16.gmra.mrb[0].mxu0 %v2202
      %v3551 = vpop.f32.mrb[0].mxu0
      %v3552 = vadd.f32 %v3375, %v3551
      %v3553 = vpop.f32.mrb[0].mxu0
      %v3554 = vpop.f32.mrb[0].mxu0
      %v3555 = vadd.f32 %v3378, %v3554
      %v3556 = vpop.f32.mrb[0].mxu0
      %3557 = vdwg.mxu0
      %3558 = vmatprep.subr.bf16.mxu0 0
      %3559 = vmatpush1.bf16.msra.mxu0 %v736
      %3560 = vmatprep.subr.bf16.mxu0 0
      %3561 = vmatpush1.bf16.msra.mxu0 %v737
      %3562 = vmatprep.subr.bf16.mxu0 0
      %3563 = vmatpush1.bf16.msra.mxu0 %v738
      %3564 = vmatprep.subr.bf16.mxu0 0
      %3565 = vmatpush1.bf16.msra.mxu0 %v739
      %3566 = vmatprep.subr.bf16.mxu0 0
      %3567 = vmatpush1.bf16.msra.mxu0 %v740
      %3568 = vmatprep.subr.bf16.mxu0 0
      %3569 = vmatpush1.bf16.msra.mxu0 %v741
      %3570 = vmatprep.subr.bf16.mxu0 0
      %3571 = vmatpush1.bf16.msra.mxu0 %v742
      %3572 = vmatprep.subr.bf16.mxu0 0
      %3573 = vmatpush1.bf16.msra.mxu0 %v743
      %3574 = vmatprep.subr.bf16.mxu0 0
      %3575 = vmatpush1.bf16.msra.mxu0 %v744
      %3576 = vmatprep.subr.bf16.mxu0 0
      %3577 = vmatpush1.bf16.msra.mxu0 %v745
      %3578 = vmatprep.subr.bf16.mxu0 0
      %3579 = vmatpush1.bf16.msra.mxu0 %v746
      %3580 = vmatprep.subr.bf16.mxu0 0
      %3581 = vmatpush1.bf16.msra.mxu0 %v747
      %3582 = vmatprep.subr.bf16.mxu0 0
      %3583 = vmatpush1.bf16.msra.mxu0 %v748
      %3584 = vmatprep.subr.bf16.mxu0 0
      %3585 = vmatpush1.bf16.msra.mxu0 %v749
      %3586 = vmatprep.subr.bf16.mxu0 0
      %3587 = vmatpush1.bf16.msra.mxu0 %v750
      %3588 = vmatprep.subr.bf16.mxu0 0
      %3589 = vmatpush1.bf16.msra.mxu0 %v751
      %3590 = vmatprep.mubr.bf16.mxu0 %v1933
      %3591 = vmatmul.mubr.bf16.gmra.mrb[0].mxu0 %v1932
      %v3592 = vpop.f32.mrb[0].mxu0
      %v3593 = vadd.f32 %v3416, %v3592
      %v3594 = vpop.f32.mrb[0].mxu0
      %v3595 = vpop.f32.mrb[0].mxu0
      %v3596 = vadd.f32 %v3419, %v3595
      %v3597 = vpop.f32.mrb[0].mxu0
      %3598 = vmatprep.mubr.bf16.mxu0 %v1949
      %3599 = vmatmul.mubr.bf16.gmra.mrb[0].mxu0 %v1948
      %v3600 = vpop.f32.mrb[0].mxu0
      %v3601 = vadd.f32 %v3424, %v3600
      %v3602 = vpop.f32.mrb[0].mxu0
      %v3603 = vpop.f32.mrb[0].mxu0
      %v3604 = vadd.f32 %v3427, %v3603
      %v3605 = vpop.f32.mrb[0].mxu0
      %3606 = vmatprep.mubr.bf16.mxu0 %v1965
      %3607 = vmatmul.mubr.bf16.gmra.mrb[0].mxu0 %v1964
      %v3608 = vpop.f32.mrb[0].mxu0
      %v3609 = vadd.f32 %v3432, %v3608
      %v3610 = vpop.f32.mrb[0].mxu0
      %v3611 = vpop.f32.mrb[0].mxu0
      %v3612 = vadd.f32 %v3435, %v3611
      %v3613 = vpop.f32.mrb[0].mxu0
      %3614 = vmatprep.mubr.bf16.mxu0 %v1981
      %3615 = vmatmul.mubr.bf16.gmra.mrb[0].mxu0 %v1980
      %v3616 = vpop.f32.mrb[0].mxu0
      %v3617 = vadd.f32 %v3440, %v3616
      %v3618 = vpop.f32.mrb[0].mxu0
      %v3619 = vpop.f32.mrb[0].mxu0
      %v3620 = vadd.f32 %v3443, %v3619
      %v3621 = vpop.f32.mrb[0].mxu0
      %3622 = vmatprep.mubr.bf16.mxu0 %v1997
      %3623 = vmatmul.mubr.bf16.gmra.mrb[0].mxu0 %v1996
      %v3624 = vpop.f32.mrb[0].mxu0
      %v3625 = vadd.f32 %v3448, %v3624
      %v3626 = vpop.f32.mrb[0].mxu0
      %v3627 = vpop.f32.mrb[0].mxu0
      %v3628 = vadd.f32 %v3451, %v3627
      %v3629 = vpop.f32.mrb[0].mxu0
      %3630 = vmatprep.mubr.bf16.mxu0 %v2013
      %3631 = vmatmul.mubr.bf16.gmra.mrb[0].mxu0 %v2012
      %v3632 = vpop.f32.mrb[0].mxu0
      %v3633 = vadd.f32 %v3456, %v3632
      %v3634 = vpop.f32.mrb[0].mxu0
      %v3635 = vpop.f32.mrb[0].mxu0
      %v3636 = vadd.f32 %v3459, %v3635
      %v3637 = vpop.f32.mrb[0].mxu0
      %3638 = vmatprep.mubr.bf16.mxu0 %v2029
      %3639 = vmatmul.mubr.bf16.gmra.mrb[0].mxu0 %v2028
      %v3640 = vpop.f32.mrb[0].mxu0
      %v3641 = vadd.f32 %v3464, %v3640
      %v3642 = vpop.f32.mrb[0].mxu0
      %v3643 = vpop.f32.mrb[0].mxu0
      %v3644 = vadd.f32 %v3467, %v3643
      %v3645 = vpop.f32.mrb[0].mxu0
      %3646 = vmatprep.mubr.bf16.mxu0 %v2045
      %3647 = vmatmul.mubr.bf16.gmra.mrb[0].mxu0 %v2044
      %v3648 = vpop.f32.mrb[0].mxu0
      %v3649 = vadd.f32 %v3472, %v3648
      %v3650 = vpop.f32.mrb[0].mxu0
      %v3651 = vpop.f32.mrb[0].mxu0
      %v3652 = vadd.f32 %v3475, %v3651
      %v3653 = vpop.f32.mrb[0].mxu0
      %3654 = vmatprep.mubr.bf16.mxu0 %v2061
      %3655 = vmatmul.mubr.bf16.gmra.mrb[0].mxu0 %v2060
      %v3656 = vpop.f32.mrb[0].mxu0
      %v3657 = vadd.f32 %v3480, %v3656
      %v3658 = vpop.f32.mrb[0].mxu0
      %v3659 = vpop.f32.mrb[0].mxu0
      %v3660 = vadd.f32 %v3483, %v3659
      %v3661 = vpop.f32.mrb[0].mxu0
      %3662 = vmatprep.mubr.bf16.mxu0 %v2077
      %3663 = vmatmul.mubr.bf16.gmra.mrb[0].mxu0 %v2076
      %v3664 = vpop.f32.mrb[0].mxu0
      %v3665 = vadd.f32 %v3488, %v3664
      %v3666 = vpop.f32.mrb[0].mxu0
      %v3667 = vpop.f32.mrb[0].mxu0
      %v3668 = vadd.f32 %v3491, %v3667
      %v3669 = vpop.f32.mrb[0].mxu0
      %3670 = vmatprep.mubr.bf16.mxu0 %v2093
      %3671 = vmatmul.mubr.bf16.gmra.mrb[0].mxu0 %v2092
      %v3672 = vpop.f32.mrb[0].mxu0
      %v3673 = vadd.f32 %v3496, %v3672
      %v3674 = vpop.f32.mrb[0].mxu0
      %v3675 = vpop.f32.mrb[0].mxu0
      %v3676 = vadd.f32 %v3499, %v3675
      %v3677 = vpop.f32.mrb[0].mxu0
      %3678 = vmatprep.mubr.bf16.mxu0 %v2109
      %3679 = vmatmul.mubr.bf16.gmra.mrb[0].mxu0 %v2108
      %v3680 = vpop.f32.mrb[0].mxu0
      %v3681 = vadd.f32 %v3504, %v3680
      %v3682 = vpop.f32.mrb[0].mxu0
      %v3683 = vpop.f32.mrb[0].mxu0
      %v3684 = vadd.f32 %v3507, %v3683
      %v3685 = vpop.f32.mrb[0].mxu0
      %3686 = vmatprep.mubr.bf16.mxu0 %v2125
      %3687 = vmatmul.mubr.bf16.gmra.mrb[0].mxu0 %v2124
      %v3688 = vpop.f32.mrb[0].mxu0
      %v3689 = vadd.f32 %v3512, %v3688
      %v3690 = vpop.f32.mrb[0].mxu0
      %v3691 = vpop.f32.mrb[0].mxu0
      %v3692 = vadd.f32 %v3515, %v3691
      %v3693 = vpop.f32.mrb[0].mxu0
      %3694 = vmatprep.mubr.bf16.mxu0 %v2141
      %3695 = vmatmul.mubr.bf16.gmra.mrb[0].mxu0 %v2140
      %v3696 = vpop.f32.mrb[0].mxu0
      %v3697 = vadd.f32 %v3520, %v3696
      %v3698 = vpop.f32.mrb[0].mxu0
      %v3699 = vpop.f32.mrb[0].mxu0
      %v3700 = vadd.f32 %v3523, %v3699
      %v3701 = vpop.f32.mrb[0].mxu0
      %3702 = vmatprep.mubr.bf16.mxu0 %v2157
      %3703 = vmatmul.mubr.bf16.gmra.mrb[0].mxu0 %v2156
      %v3704 = vpop.f32.mrb[0].mxu0
      %v3705 = vadd.f32 %v3528, %v3704
      %v3706 = vpop.f32.mrb[0].mxu0
      %v3707 = vpop.f32.mrb[0].mxu0
      %v3708 = vadd.f32 %v3531, %v3707
      %v3709 = vpop.f32.mrb[0].mxu0
      %3710 = vmatprep.mubr.bf16.mxu0 %v2173
      %3711 = vmatmul.mubr.bf16.gmra.mrb[0].mxu0 %v2172
      %v3712 = vpop.f32.mrb[0].mxu0
      %v3713 = vadd.f32 %v3536, %v3712
      %v3714 = vpop.f32.mrb[0].mxu0
      %v3715 = vpop.f32.mrb[0].mxu0
      %v3716 = vadd.f32 %v3539, %v3715
      %v3717 = vpop.f32.mrb[0].mxu0
      %3718 = vmatprep.mubr.bf16.mxu0 %v2189
      %3719 = vmatmul.mubr.bf16.gmra.mrb[0].mxu0 %v2188
      %v3720 = vpop.f32.mrb[0].mxu0
      %v3721 = vadd.f32 %v3544, %v3720
      %v3722 = vpop.f32.mrb[0].mxu0
      %v3723 = vpop.f32.mrb[0].mxu0
      %v3724 = vadd.f32 %v3547, %v3723
      %v3725 = vpop.f32.mrb[0].mxu0
      %3726 = vmatprep.mubr.bf16.mxu0 %v2205
      %3727 = vmatmul.mubr.bf16.gmra.mrb[0].mxu0 %v2204
      %v3728 = vpop.f32.mrb[0].mxu0
      %v3729 = vadd.f32 %v3552, %v3728
      %v3730 = vpop.f32.mrb[0].mxu0
      %v3731 = vpop.f32.mrb[0].mxu0
      %v3732 = vadd.f32 %v3555, %v3731
      %v3733 = vpop.f32.mrb[0].mxu0
      %3734 = vdwg.mxu0
      %3735 = vmatprep.subr.bf16.mxu0 0
      %3736 = vmatpush1.bf16.msra.mxu0 %v752
      %3737 = vmatprep.subr.bf16.mxu0 0
      %3738 = vmatpush1.bf16.msra.mxu0 %v753
      %3739 = vmatprep.subr.bf16.mxu0 0
      %3740 = vmatpush1.bf16.msra.mxu0 %v754
      %3741 = vmatprep.subr.bf16.mxu0 0
      %3742 = vmatpush1.bf16.msra.mxu0 %v755
      %3743 = vmatprep.subr.bf16.mxu0 0
      %3744 = vmatpush1.bf16.msra.mxu0 %v756
      %3745 = vmatprep.subr.bf16.mxu0 0
      %3746 = vmatpush1.bf16.msra.mxu0 %v757
      %3747 = vmatprep.subr.bf16.mxu0 0
      %3748 = vmatpush1.bf16.msra.mxu0 %v758
      %3749 = vmatprep.subr.bf16.mxu0 0
      %3750 = vmatpush1.bf16.msra.mxu0 %v759
      %3751 = vmatprep.subr.bf16.mxu0 0
      %3752 = vmatpush1.bf16.msra.mxu0 %v760
      %3753 = vmatprep.subr.bf16.mxu0 0
      %3754 = vmatpush1.bf16.msra.mxu0 %v761
      %3755 = vmatprep.subr.bf16.mxu0 0
      %3756 = vmatpush1.bf16.msra.mxu0 %v762
      %3757 = vmatprep.subr.bf16.mxu0 0
      %3758 = vmatpush1.bf16.msra.mxu0 %v763
      %3759 = vmatprep.subr.bf16.mxu0 0
      %3760 = vmatpush1.bf16.msra.mxu0 %v764
      %3761 = vmatprep.subr.bf16.mxu0 0
      %3762 = vmatpush1.bf16.msra.mxu0 %v765
      %3763 = vmatprep.subr.bf16.mxu0 0
      %3764 = vmatpush1.bf16.msra.mxu0 %v766
      %3765 = vmatprep.subr.bf16.mxu0 0
      %3766 = vmatpush1.bf16.msra.mxu0 %v767
      %3767 = vmatprep.mubr.bf16.mxu0 %v1935
      %3768 = vmatmul.mubr.bf16.gmra.mrb[0].mxu0 %v1934
      %v3769 = vpop.f32.mrb[0].mxu0
      %v3770 = vadd.f32 %v3593, %v3769
      %v3771 = vpop.f32.mrb[0].mxu0
      %v3772 = vpop.f32.mrb[0].mxu0
      %v3773 = vadd.f32 %v3596, %v3772
      %v3774 = vpop.f32.mrb[0].mxu0
      %3775 = vmatprep.mubr.bf16.mxu0 %v1951
      %3776 = vmatmul.mubr.bf16.gmra.mrb[0].mxu0 %v1950
      %v3777 = vpop.f32.mrb[0].mxu0
      %v3778 = vadd.f32 %v3601, %v3777
      %v3779 = vpop.f32.mrb[0].mxu0
      %v3780 = vpop.f32.mrb[0].mxu0
      %v3781 = vadd.f32 %v3604, %v3780
      %v3782 = vpop.f32.mrb[0].mxu0
      %3783 = vmatprep.mubr.bf16.mxu0 %v1967
      %3784 = vmatmul.mubr.bf16.gmra.mrb[0].mxu0 %v1966
      %v3785 = vpop.f32.mrb[0].mxu0
      %v3786 = vadd.f32 %v3609, %v3785
      %v3787 = vpop.f32.mrb[0].mxu0
      %v3788 = vpop.f32.mrb[0].mxu0
      %v3789 = vadd.f32 %v3612, %v3788
      %v3790 = vpop.f32.mrb[0].mxu0
      %3791 = vmatprep.mubr.bf16.mxu0 %v1983
      %3792 = vmatmul.mubr.bf16.gmra.mrb[0].mxu0 %v1982
      %v3793 = vpop.f32.mrb[0].mxu0
      %v3794 = vadd.f32 %v3617, %v3793
      %v3795 = vpop.f32.mrb[0].mxu0
      %v3796 = vpop.f32.mrb[0].mxu0
      %v3797 = vadd.f32 %v3620, %v3796
      %v3798 = vpop.f32.mrb[0].mxu0
      %3799 = vmatprep.mubr.bf16.mxu0 %v1999
      %3800 = vmatmul.mubr.bf16.gmra.mrb[0].mxu0 %v1998
      %v3801 = vpop.f32.mrb[0].mxu0
      %v3802 = vadd.f32 %v3625, %v3801
      %v3803 = vpop.f32.mrb[0].mxu0
      %v3804 = vpop.f32.mrb[0].mxu0
      %v3805 = vadd.f32 %v3628, %v3804
      %v3806 = vpop.f32.mrb[0].mxu0
      %3807 = vmatprep.mubr.bf16.mxu0 %v2015
      %3808 = vmatmul.mubr.bf16.gmra.mrb[0].mxu0 %v2014
      %v3809 = vpop.f32.mrb[0].mxu0
      %v3810 = vadd.f32 %v3633, %v3809
      %v3811 = vpop.f32.mrb[0].mxu0
      %v3812 = vpop.f32.mrb[0].mxu0
      %v3813 = vadd.f32 %v3636, %v3812
      %v3814 = vpop.f32.mrb[0].mxu0
      %3815 = vmatprep.mubr.bf16.mxu0 %v2031
      %3816 = vmatmul.mubr.bf16.gmra.mrb[0].mxu0 %v2030
      %v3817 = vpop.f32.mrb[0].mxu0
      %v3818 = vadd.f32 %v3641, %v3817
      %v3819 = vpop.f32.mrb[0].mxu0
      %v3820 = vpop.f32.mrb[0].mxu0
      %v3821 = vadd.f32 %v3644, %v3820
      %v3822 = vpop.f32.mrb[0].mxu0
      %3823 = vmatprep.mubr.bf16.mxu0 %v2047
      %3824 = vmatmul.mubr.bf16.gmra.mrb[0].mxu0 %v2046
      %v3825 = vpop.f32.mrb[0].mxu0
      %v3826 = vadd.f32 %v3649, %v3825
      %v3827 = vpop.f32.mrb[0].mxu0
      %v3828 = vpop.f32.mrb[0].mxu0
      %v3829 = vadd.f32 %v3652, %v3828
      %v3830 = vpop.f32.mrb[0].mxu0
      %3831 = vmatprep.mubr.bf16.mxu0 %v2063
      %3832 = vmatmul.mubr.bf16.gmra.mrb[0].mxu0 %v2062
      %v3833 = vpop.f32.mrb[0].mxu0
      %v3834 = vadd.f32 %v3657, %v3833
      %v3835 = vpop.f32.mrb[0].mxu0
      %v3836 = vpop.f32.mrb[0].mxu0
      %v3837 = vadd.f32 %v3660, %v3836
      %v3838 = vpop.f32.mrb[0].mxu0
      %3839 = vmatprep.mubr.bf16.mxu0 %v2079
      %3840 = vmatmul.mubr.bf16.gmra.mrb[0].mxu0 %v2078
      %v3841 = vpop.f32.mrb[0].mxu0
      %v3842 = vadd.f32 %v3665, %v3841
      %v3843 = vpop.f32.mrb[0].mxu0
      %v3844 = vpop.f32.mrb[0].mxu0
      %v3845 = vadd.f32 %v3668, %v3844
      %v3846 = vpop.f32.mrb[0].mxu0
      %3847 = vmatprep.mubr.bf16.mxu0 %v2095
      %3848 = vmatmul.mubr.bf16.gmra.mrb[0].mxu0 %v2094
      %v3849 = vpop.f32.mrb[0].mxu0
      %v3850 = vadd.f32 %v3673, %v3849
      %v3851 = vpop.f32.mrb[0].mxu0
      %v3852 = vpop.f32.mrb[0].mxu0
      %v3853 = vadd.f32 %v3676, %v3852
      %v3854 = vpop.f32.mrb[0].mxu0
      %3855 = vmatprep.mubr.bf16.mxu0 %v2111
      %3856 = vmatmul.mubr.bf16.gmra.mrb[0].mxu0 %v2110
      %v3857 = vpop.f32.mrb[0].mxu0
      %v3858 = vadd.f32 %v3681, %v3857
      %v3859 = vpop.f32.mrb[0].mxu0
      %v3860 = vpop.f32.mrb[0].mxu0
      %v3861 = vadd.f32 %v3684, %v3860
      %v3862 = vpop.f32.mrb[0].mxu0
      %3863 = vmatprep.mubr.bf16.mxu0 %v2127
      %3864 = vmatmul.mubr.bf16.gmra.mrb[0].mxu0 %v2126
      %v3865 = vpop.f32.mrb[0].mxu0
      %v3866 = vadd.f32 %v3689, %v3865
      %v3867 = vpop.f32.mrb[0].mxu0
      %v3868 = vpop.f32.mrb[0].mxu0
      %v3869 = vadd.f32 %v3692, %v3868
      %v3870 = vpop.f32.mrb[0].mxu0
      %3871 = vmatprep.mubr.bf16.mxu0 %v2143
      %3872 = vmatmul.mubr.bf16.gmra.mrb[0].mxu0 %v2142
      %v3873 = vpop.f32.mrb[0].mxu0
      %v3874 = vadd.f32 %v3697, %v3873
      %v3875 = vpop.f32.mrb[0].mxu0
      %v3876 = vpop.f32.mrb[0].mxu0
      %v3877 = vadd.f32 %v3700, %v3876
      %v3878 = vpop.f32.mrb[0].mxu0
      %3879 = vmatprep.mubr.bf16.mxu0 %v2159
      %3880 = vmatmul.mubr.bf16.gmra.mrb[0].mxu0 %v2158
      %v3881 = vpop.f32.mrb[0].mxu0
      %v3882 = vadd.f32 %v3705, %v3881
      %v3883 = vpop.f32.mrb[0].mxu0
      %v3884 = vpop.f32.mrb[0].mxu0
      %v3885 = vadd.f32 %v3708, %v3884
      %v3886 = vpop.f32.mrb[0].mxu0
      %3887 = vmatprep.mubr.bf16.mxu0 %v2175
      %3888 = vmatmul.mubr.bf16.gmra.mrb[0].mxu0 %v2174
      %v3889 = vpop.f32.mrb[0].mxu0
      %v3890 = vadd.f32 %v3713, %v3889
      %v3891 = vpop.f32.mrb[0].mxu0
      %v3892 = vpop.f32.mrb[0].mxu0
      %v3893 = vadd.f32 %v3716, %v3892
      %v3894 = vpop.f32.mrb[0].mxu0
      %3895 = vmatprep.mubr.bf16.mxu0 %v2191
      %3896 = vmatmul.mubr.bf16.gmra.mrb[0].mxu0 %v2190
      %v3897 = vpop.f32.mrb[0].mxu0
      %v3898 = vadd.f32 %v3721, %v3897
      %v3899 = vpop.f32.mrb[0].mxu0
      %v3900 = vpop.f32.mrb[0].mxu0
      %v3901 = vadd.f32 %v3724, %v3900
      %v3902 = vpop.f32.mrb[0].mxu0
      %3903 = vmatprep.mubr.bf16.mxu0 %v2207
      %3904 = vmatmul.mubr.bf16.gmra.mrb[0].mxu0 %v2206
      %v3905 = vpop.f32.mrb[0].mxu0
      %v3906 = vadd.f32 %v3729, %v3905
      %v3907 = vpop.f32.mrb[0].mxu0
      %v3908 = vpop.f32.mrb[0].mxu0
      %v3909 = vadd.f32 %v3732, %v3908
      %v3910 = vpop.f32.mrb[0].mxu0
      %3911 = vdwg.mxu0
      %3912 = vrot.lane.b32.xlu0 %v3770, 68
      %v3913 = vpop.permute.xlu0 %3912
      %3914 = vrot.lane.b32.xlu0 %v3773, 68
      %v3915 = vpop.permute.xlu0 %3914
      %3916 = vrot.lane.b32.xlu0 %v3778, 68
      %v3917 = vpop.permute.xlu0 %3916
      %3918 = vrot.lane.b32.xlu0 %v3781, 68
      %v3919 = vpop.permute.xlu0 %3918
      %v3920 = vld [vmem:[%s2] sm:$0xff]
      %v3921 = vld [vmem:[%s2 + $0x8] sm:$0xff]
      %v3922 = vld [vmem:[%s2 + $0x10] sm:$0xff]
      %v3923 = vld [vmem:[%s2 + $0x18] sm:$0xff]
      %v3924 = vmul.f32 %v3913, %v3920
      %v3925 = vmul.f32 %v3915, %v3921
      %v3926 = vmul.f32 %v3917, %v3922
      %v3927 = vmul.f32 %v3919, %v3923
      %v3928 = vadd.f32 %v3834, %v3924
      %v3929 = vadd.f32 %v3837, %v3925
      %v3930 = vadd.f32 %v3842, %v3926
      %v3931 = vadd.f32 %v3845, %v3927
      %3932 = vrot.lane.b32.xlu0 %v3786, 64
      %v3933 = vpop.permute.xlu0 %3932
      %3934 = vrot.lane.b32.xlu0 %v3789, 64
      %v3935 = vpop.permute.xlu0 %3934
      %3936 = vrot.lane.b32.xlu0 %v3794, 64
      %v3937 = vpop.permute.xlu0 %3936
      %3938 = vrot.lane.b32.xlu0 %v3797, 64
      %v3939 = vpop.permute.xlu0 %3938
      %s3940 = scalar_lea.vmem %s2, 32
      %v3941 = vld [vmem:[%s3940] sm:$0xff]
      %v3942 = vld [vmem:[%s3940 + $0x8] sm:$0xff]
      %v3943 = vld [vmem:[%s3940 + $0x10] sm:$0xff]
      %v3944 = vld [vmem:[%s3940 + $0x18] sm:$0xff]
      %v3945 = vmul.f32 %v3933, %v3941
      %v3946 = vmul.f32 %v3935, %v3942
      %v3947 = vmul.f32 %v3937, %v3943
      %v3948 = vmul.f32 %v3939, %v3944
      %v3949 = vadd.f32 %v3928, %v3945
      %v3950 = vadd.f32 %v3929, %v3946
      %v3951 = vadd.f32 %v3930, %v3947
      %v3952 = vadd.f32 %v3931, %v3948
      %3953 = vrot.lane.b32.xlu0 %v3802, 60
      %v3954 = vpop.permute.xlu0 %3953
      %3955 = vrot.lane.b32.xlu0 %v3805, 60
      %v3956 = vpop.permute.xlu0 %3955
      %3957 = vrot.lane.b32.xlu0 %v3810, 60
      %v3958 = vpop.permute.xlu0 %3957
      %3959 = vrot.lane.b32.xlu0 %v3813, 60
      %v3960 = vpop.permute.xlu0 %3959
      %s3961 = scalar_lea.vmem %s2, 64
      %v3962 = vld [vmem:[%s3961] sm:$0xff]
      %v3963 = vld [vmem:[%s3961 + $0x8] sm:$0xff]
      %v3964 = vld [vmem:[%s3961 + $0x10] sm:$0xff]
      %v3965 = vld [vmem:[%s3961 + $0x18] sm:$0xff]
      %v3966 = vmul.f32 %v3954, %v3962
      %v3967 = vmul.f32 %v3956, %v3963
      %v3968 = vmul.f32 %v3958, %v3964
      %v3969 = vmul.f32 %v3960, %v3965
      %v3970 = vadd.f32 %v3949, %v3966
      %v3971 = vadd.f32 %v3950, %v3967
      %v3972 = vadd.f32 %v3951, %v3968
      %v3973 = vadd.f32 %v3952, %v3969
      %3974 = vrot.lane.b32.xlu0 %v3818, 4
      %v3975 = vpop.permute.xlu0 %3974
      %3976 = vrot.lane.b32.xlu0 %v3821, 4
      %v3977 = vpop.permute.xlu0 %3976
      %3978 = vrot.lane.b32.xlu0 %v3826, 4
      %v3979 = vpop.permute.xlu0 %3978
      %3980 = vrot.lane.b32.xlu0 %v3829, 4
      %v3981 = vpop.permute.xlu0 %3980
      %s3982 = scalar_lea.vmem %s2, 96
      %v3983 = vld [vmem:[%s3982] sm:$0xff]
      %v3984 = vld [vmem:[%s3982 + $0x8] sm:$0xff]
      %v3985 = vld [vmem:[%s3982 + $0x10] sm:$0xff]
      %v3986 = vld [vmem:[%s3982 + $0x18] sm:$0xff]
      %v3987 = vmul.f32 %v3975, %v3983
      %v3988 = vmul.f32 %v3977, %v3984
      %v3989 = vmul.f32 %v3979, %v3985
      %v3990 = vmul.f32 %v3981, %v3986
      %v3991 = vadd.f32 %v3970, %v3987
      %v3992 = vadd.f32 %v3971, %v3988
      %v3993 = vadd.f32 %v3972, %v3989
      %v3994 = vadd.f32 %v3973, %v3990
      %3995 = vrot.lane.b32.xlu0 %v3850, 124
      %v3996 = vpop.permute.xlu0 %3995
      %3997 = vrot.lane.b32.xlu0 %v3853, 124
      %v3998 = vpop.permute.xlu0 %3997
      %3999 = vrot.lane.b32.xlu0 %v3858, 124
      %v4000 = vpop.permute.xlu0 %3999
      %4001 = vrot.lane.b32.xlu0 %v3861, 124
      %v4002 = vpop.permute.xlu0 %4001
      %s4003 = scalar_lea.vmem %s2, 160
      %v4004 = vld [vmem:[%s4003] sm:$0xff]
      %v4005 = vld [vmem:[%s4003 + $0x8] sm:$0xff]
      %v4006 = vld [vmem:[%s4003 + $0x10] sm:$0xff]
      %v4007 = vld [vmem:[%s4003 + $0x18] sm:$0xff]
      %v4008 = vmul.f32 %v3996, %v4004
      %v4009 = vmul.f32 %v3998, %v4005
      %v4010 = vmul.f32 %v4000, %v4006
      %v4011 = vmul.f32 %v4002, %v4007
      %v4012 = vadd.f32 %v3991, %v4008
      %v4013 = vadd.f32 %v3992, %v4009
      %v4014 = vadd.f32 %v3993, %v4010
      %v4015 = vadd.f32 %v3994, %v4011
      %4016 = vrot.lane.b32.xlu0 %v3866, 68
      %v4017 = vpop.permute.xlu0 %4016
      %4018 = vrot.lane.b32.xlu0 %v3869, 68
      %v4019 = vpop.permute.xlu0 %4018
      %4020 = vrot.lane.b32.xlu0 %v3874, 68
      %v4021 = vpop.permute.xlu0 %4020
      %4022 = vrot.lane.b32.xlu0 %v3877, 68
      %v4023 = vpop.permute.xlu0 %4022
      %s4024 = scalar_lea.vmem %s2, 192
      %v4025 = vld [vmem:[%s4024] sm:$0xff]
      %v4026 = vld [vmem:[%s4024 + $0x8] sm:$0xff]
      %v4027 = vld [vmem:[%s4024 + $0x10] sm:$0xff]
      %v4028 = vld [vmem:[%s4024 + $0x18] sm:$0xff]
      %v4029 = vmul.f32 %v4017, %v4025
      %v4030 = vmul.f32 %v4019, %v4026
      %v4031 = vmul.f32 %v4021, %v4027
      %v4032 = vmul.f32 %v4023, %v4028
      %v4033 = vadd.f32 %v4012, %v4029
      %v4034 = vadd.f32 %v4013, %v4030
      %v4035 = vadd.f32 %v4014, %v4031
      %v4036 = vadd.f32 %v4015, %v4032
      %4037 = vrot.lane.b32.xlu0 %v3882, 64
      %v4038 = vpop.permute.xlu0 %4037
      %4039 = vrot.lane.b32.xlu0 %v3885, 64
      %v4040 = vpop.permute.xlu0 %4039
      %4041 = vrot.lane.b32.xlu0 %v3890, 64
      %v4042 = vpop.permute.xlu0 %4041
      %4043 = vrot.lane.b32.xlu0 %v3893, 64
      %v4044 = vpop.permute.xlu0 %4043
      %s4045 = scalar_lea.vmem %s2, 224
      %v4046 = vld [vmem:[%s4045] sm:$0xff]
      %v4047 = vld [vmem:[%s4045 + $0x8] sm:$0xff]
      %v4048 = vld [vmem:[%s4045 + $0x10] sm:$0xff]
      %v4049 = vld [vmem:[%s4045 + $0x18] sm:$0xff]
      %v4050 = vmul.f32 %v4038, %v4046
      %v4051 = vmul.f32 %v4040, %v4047
      %v4052 = vmul.f32 %v4042, %v4048
      %v4053 = vmul.f32 %v4044, %v4049
      %v4054 = vadd.f32 %v4033, %v4050
      %v4055 = vadd.f32 %v4034, %v4051
      %v4056 = vadd.f32 %v4035, %v4052
      %v4057 = vadd.f32 %v4036, %v4053
      %4058 = vrot.lane.b32.xlu0 %v3898, 60
      %v4059 = vpop.permute.xlu0 %4058
      %4060 = vrot.lane.b32.xlu0 %v3901, 60
      %v4061 = vpop.permute.xlu0 %4060
      %4062 = vrot.lane.b32.xlu0 %v3906, 60
      %v4063 = vpop.permute.xlu0 %4062
      %4064 = vrot.lane.b32.xlu0 %v3909, 60
      %v4065 = vpop.permute.xlu0 %4064
      %s4066 = scalar_lea.vmem %s2, 256
      %v4067 = vld [vmem:[%s4066] sm:$0xff]
      %v4068 = vld [vmem:[%s4066 + $0x8] sm:$0xff]
      %v4069 = vld [vmem:[%s4066 + $0x10] sm:$0xff]
      %v4070 = vld [vmem:[%s4066 + $0x18] sm:$0xff]
      %v4071 = vmul.f32 %v4059, %v4067
      %v4072 = vmul.f32 %v4061, %v4068
      %v4073 = vmul.f32 %v4063, %v4069
      %v4074 = vmul.f32 %v4065, %v4070
      %v4075 = vadd.f32 %v4054, %v4071
      %v4076 = vadd.f32 %v4055, %v4072
      %v4077 = vadd.f32 %v4056, %v4073
      %v4078 = vadd.f32 %v4057, %v4074
      %v4079 = vld [vmem:[%s3] sm:$0xff]
      %v4080 = vld [vmem:[%s3 + $0x8] sm:$0xff]
      %v4081 = vld [vmem:[%s3 + $0x10] sm:$0xff]
      %v4082 = vld [vmem:[%s3 + $0x18] sm:$0xff]
      %4084 = vset.pattern.permute.xlu0 0
      %4085 = vperm.xlu0 %4084, %v4079
      %v4086 = vpop.permute.xlu0 %4085
      %4089 = vset.pattern.permute.xlu0 0
      %4090 = vperm.xlu0 %4089, %v4080
      %v4091 = vpop.permute.xlu0 %4090
      %4094 = vset.pattern.permute.xlu0 0
      %4095 = vperm.xlu0 %4094, %v4081
      %v4096 = vpop.permute.xlu0 %4095
      %4099 = vset.pattern.permute.xlu0 0
      %4100 = vperm.xlu0 %4099, %v4082
      %v4101 = vpop.permute.xlu0 %4100
      %v4103 = vmul.f32 %v4075, %v4086
      %v4104 = vmul.f32 %v4076, %v4091
      %v4105 = vmul.f32 %v4077, %v4096
      %v4106 = vmul.f32 %v4078, %v4101
      %v4107 = vld [vmem:[%s4] sm:$0xff]
      %v4108 = vld [vmem:[%s4 + $0x8] sm:$0xff]
      %v4109 = vld [vmem:[%s4 + $0x10] sm:$0xff]
      %v4110 = vld [vmem:[%s4 + $0x18] sm:$0xff]
      %4112 = vset.pattern.permute.xlu0 0
      %4113 = vperm.xlu0 %4112, %v4107
      %v4114 = vpop.permute.xlu0 %4113
      %4117 = vset.pattern.permute.xlu0 0
      %4118 = vperm.xlu0 %4117, %v4108
      %v4119 = vpop.permute.xlu0 %4118
      %4122 = vset.pattern.permute.xlu0 0
      %4123 = vperm.xlu0 %4122, %v4109
      %v4124 = vpop.permute.xlu0 %4123
      %4127 = vset.pattern.permute.xlu0 0
      %4128 = vperm.xlu0 %4127, %v4110
      %v4129 = vpop.permute.xlu0 %4128
      %v4131 = vadd.f32 %v4103, %v4114
      %v4132 = vadd.f32 %v4104, %v4119
      %v4133 = vadd.f32 %v4105, %v4124
      %v4134 = vadd.f32 %v4106, %v4129
      %v4135 = vmax.f32 %v4131, 0.0
      %v4136 = vmax.f32 %v4132, 0.0
      %v4137 = vmax.f32 %v4133, 0.0
      %v4138 = vmax.f32 %v4134, 0.0
      %v4139 = vld [vmem:[%s5] sm:$0x1f]
      %v4140 = vld [vmem:[%s6] sm:$0x1f]
      %4142 = vset.pattern.permute.xlu0 0
      %4143 = vperm.xlu0 %4142, %v4140
      %v4144 = vpop.permute.xlu0 %4143
      %vm4146 = vcmask 261120
      %v4148 = vsel %vm4146, %v4139, 0
      %4150 = vmatprep.subr.mxu0 0.0
      %4151 = vmatpush1.msra.mxu0 %v4135
      %4152 = vmatprep.subr.mxu0 0.0
      %4153 = vmatpush1.msra.mxu0 %v4136
      %4154 = vmatprep.subr.mxu0 0.0
      %4155 = vmatpush1.msra.mxu0 %v4137
      %4156 = vmatprep.subr.mxu0 0.0
      %4157 = vmatpush1.msra.mxu0 %v4138
      %4158 = vmatprep.subr.mxu0 0.0
      %4159 = vmatpush1.msra.mxu0 0.0
      %4160 = vmatprep.subr.mxu0 0.0
      %4161 = vmatpush1.msra.mxu0 0.0
      %4162 = vmatprep.subr.mxu0 0.0
      %4163 = vmatpush1.msra.mxu0 0.0
      %4164 = vmatprep.subr.mxu0 0.0
      %4165 = vmatpush1.msra.mxu0 0.0
      %4166 = vmatprep.subr.mxu0 0.0
      %4167 = vmatpush1.msra.mxu0 0.0
      %4168 = vmatprep.subr.mxu0 0.0
      %4169 = vmatpush1.msra.mxu0 0.0
      %4170 = vmatprep.subr.mxu0 0.0
      %4171 = vmatpush1.msra.mxu0 0.0
      %4172 = vmatprep.subr.mxu0 0.0
      %4173 = vmatpush1.msra.mxu0 0.0
      %4174 = vmatprep.subr.mxu0 0.0
      %4175 = vmatpush1.msra.mxu0 0.0
      %4176 = vmatprep.subr.mxu0 0.0
      %4177 = vmatpush1.msra.mxu0 0.0
      %4178 = vmatprep.subr.mxu0 0.0
      %4179 = vmatpush1.msra.mxu0 0.0
      %4180 = vmatprep.subr.mxu0 0.0
      %4181 = vmatpush1.msra.mxu0 0.0
      %4182 = vmatprep.subr.mxu0 0.0
      %4183 = vmatpush1.msra.mxu0 0.0
      %4184 = vmatprep.subr.mxu0 0.0
      %4185 = vmatpush1.msra.mxu0 0.0
      %4186 = vmatprep.subr.mxu0 0.0
      %4187 = vmatpush1.msra.mxu0 0.0
      %4188 = vmatprep.subr.mxu0 0.0
      %4189 = vmatpush1.msra.mxu0 0.0
      %4190 = vmatprep.subr.mxu0 0.0
      %4191 = vmatpush1.msra.mxu0 0.0
      %4192 = vmatprep.subr.mxu0 0.0
      %4193 = vmatpush1.msra.mxu0 0.0
      %4194 = vmatprep.subr.mxu0 0.0
      %4195 = vmatpush1.msra.mxu0 0.0
      %4196 = vmatprep.subr.mxu0 0.0
      %4197 = vmatpush1.msra.mxu0 0.0
      %4198 = vmatprep.subr.mxu0 0.0
      %4199 = vmatpush1.msra.mxu0 0.0
      %4200 = vmatprep.subr.mxu0 0.0
      %4201 = vmatpush1.msra.mxu0 0.0
      %4202 = vmatprep.subr.mxu0 0.0
      %4203 = vmatpush1.msra.mxu0 0.0
      %4204 = vmatprep.subr.mxu0 0.0
      %4205 = vmatpush1.msra.mxu0 0.0
      %4206 = vmatprep.subr.mxu0 0.0
      %4207 = vmatpush1.msra.mxu0 0.0
      %4208 = vmatprep.subr.mxu0 0.0
      %4209 = vmatpush1.msra.mxu0 0.0
      %4210 = vmatprep.subr.mxu0 0.0
      %4211 = vmatpush1.msra.mxu0 0.0
      %4212 = vmatprep.subr.mxu0 0.0
      %4213 = vmatpush1.msra.mxu0 0.0
      %4214 = vmatprep.mubr.f32.mxu0 0.0
      %4215 = vmatmul.mubr.f32.gmra.mrb[0].mxu0 %v4148
      %v4216 = vpop.f32.mrb[0].mxu0
      %v4217 = vadd.f32 %v4144, %v4216
      %v4218 = vpop.f32.mrb[0].mxu0
      %4219 = vdwg.mxu0
      %vm4220 = vcmask 1044480
      %v4221 = vsel %vm4220, %v4217, -inf
      %v4222 = vrot.slane %v4221, 4
      %v4223 = vmax.f32 %v4221, %v4222
      %v4224 = vrot.slane %v4223, 2
      %v4225 = vmax.f32 %v4223, %v4224
      %v4226 = vrot.slane %v4225, 1
      %v4227 = vmax.f32 %v4225, %v4226
      %v4228 = vsub.f32 %v4217, %v4227
      %v4229 = vmul.f32 %v4228, 1.442695
      %v4230 = vpow.pop %v4229
      %v4231 = vsel %vm4220, %v4230, 0.0
      %v4232 = vrot.slane %v4231, 4
      %v4233 = vadd.f32 %v4231, %v4232
      %v4234 = vrot.slane %v4233, 2
      %v4235 = vadd.f32 %v4233, %v4234
      %v4236 = vrot.slane %v4235, 1
      %v4237 = vadd.f32 %v4235, %v4236
      %v4238 = vrcp.pop %v4237
      %v4239 = vmul.f32 %v4230, %v4238
      %4240 = vrot.lane.b32.xlu0 %v4239, 127
      %v4241 = vpop.permute.xlu0 %4240
      %v4242 = vmax.f32 %v4239, %v4241
      %4243 = vrot.lane.b32.xlu0 %v4242, 112
      %v4244 = vpop.permute.xlu0 %4243
      %v4245 = vmax.f32 %v4242, %v4244
      %v4246 = vld [vmem:[%s7] sm:$0xff]
      %v4247 = vld [vmem:[%s7 + $0x8] sm:$0xff]
      %v4248 = vld [vmem:[%s7 + $0x10] sm:$0xff]
      %v4249 = vld [vmem:[%s7 + $0x18] sm:$0xff]
      %v4250 = vld [vmem:[%s7 + $0x20] sm:$0xff]
      %v4251 = vld [vmem:[%s7 + $0x28] sm:$0xff]
      %v4252 = vld [vmem:[%s7 + $0x30] sm:$0xff]
      %v4253 = vld [vmem:[%s7 + $0x38] sm:$0xff]
      %v4254 = vld [vmem:[%s7 + $0x40] sm:$0xff]
      %v4255 = vld [vmem:[%s7 + $0x48] sm:$0xff]
      %v4256 = vld [vmem:[%s7 + $0x50] sm:$0xff]
      %v4257 = vld [vmem:[%s7 + $0x58] sm:$0xff]
      %v4258 = vld [vmem:[%s7 + $0x60] sm:$0xff]
      %v4259 = vld [vmem:[%s7 + $0x68] sm:$0xff]
      %v4260 = vld [vmem:[%s7 + $0x70] sm:$0xff]
      %v4261 = vld [vmem:[%s7 + $0x78] sm:$0xff]
      %v4262 = vld [vmem:[%s7 + $0x80] sm:$0xff]
      %v4263 = vld [vmem:[%s7 + $0x88] sm:$0xff]
      %v4264 = vld [vmem:[%s7 + $0x90] sm:$0xff]
      %v4265 = vld [vmem:[%s7 + $0x98] sm:$0xff]
      %v4266 = vld [vmem:[%s7 + $0xa0] sm:$0xff]
      %v4267 = vld [vmem:[%s7 + $0xa8] sm:$0xff]
      %v4268 = vld [vmem:[%s7 + $0xb0] sm:$0xff]
      %v4269 = vld [vmem:[%s7 + $0xb8] sm:$0xff]
      %v4270 = vld [vmem:[%s7 + $0xc0] sm:$0xff]
      %v4271 = vld [vmem:[%s7 + $0xc8] sm:$0xff]
      %v4272 = vld [vmem:[%s7 + $0xd0] sm:$0xff]
      %v4273 = vld [vmem:[%s7 + $0xd8] sm:$0xff]
      %v4274 = vld [vmem:[%s7 + $0xe0] sm:$0xff]
      %v4275 = vld [vmem:[%s7 + $0xe8] sm:$0xff]
      %v4276 = vld [vmem:[%s7 + $0xf0] sm:$0xff]
      %v4277 = vld [vmem:[%s7 + $0xf8] sm:$0xff]
      %v4278 = vld [vmem:[%s7 + $0x100] sm:$0xff]
      %v4279 = vld [vmem:[%s7 + $0x108] sm:$0xff]
      %v4280 = vld [vmem:[%s7 + $0x110] sm:$0xff]
      %v4281 = vld [vmem:[%s7 + $0x118] sm:$0xff]
      %v4282 = vld [vmem:[%s7 + $0x120] sm:$0xff]
      %v4283 = vld [vmem:[%s7 + $0x128] sm:$0xff]
      %v4284 = vld [vmem:[%s7 + $0x130] sm:$0xff]
      %v4285 = vld [vmem:[%s7 + $0x138] sm:$0xff]
      %v4286 = vld [vmem:[%s7 + $0x140] sm:$0xff]
      %v4287 = vld [vmem:[%s7 + $0x148] sm:$0xff]
      %v4288 = vld [vmem:[%s7 + $0x150] sm:$0xff]
      %v4289 = vld [vmem:[%s7 + $0x158] sm:$0xff]
      %v4290 = vld [vmem:[%s7 + $0x160] sm:$0xff]
      %v4291 = vld [vmem:[%s7 + $0x168] sm:$0xff]
      %v4292 = vld [vmem:[%s7 + $0x170] sm:$0xff]
      %v4293 = vld [vmem:[%s7 + $0x178] sm:$0xff]
      %v4294 = vld [vmem:[%s7 + $0x180] sm:$0xff]
      %v4295 = vld [vmem:[%s7 + $0x188] sm:$0xff]
      %v4296 = vld [vmem:[%s7 + $0x190] sm:$0xff]
      %v4297 = vld [vmem:[%s7 + $0x198] sm:$0xff]
      %v4298 = vld [vmem:[%s7 + $0x1a0] sm:$0xff]
      %v4299 = vld [vmem:[%s7 + $0x1a8] sm:$0xff]
      %v4300 = vld [vmem:[%s7 + $0x1b0] sm:$0xff]
      %v4301 = vld [vmem:[%s7 + $0x1b8] sm:$0xff]
      %v4302 = vld [vmem:[%s7 + $0x1c0] sm:$0xff]
      %v4303 = vld [vmem:[%s7 + $0x1c8] sm:$0xff]
      %v4304 = vld [vmem:[%s7 + $0x1d0] sm:$0xff]
      %v4305 = vld [vmem:[%s7 + $0x1d8] sm:$0xff]
      %v4306 = vld [vmem:[%s7 + $0x1e0] sm:$0xff]
      %v4307 = vld [vmem:[%s7 + $0x1e8] sm:$0xff]
      %v4308 = vld [vmem:[%s7 + $0x1f0] sm:$0xff]
      %v4309 = vld [vmem:[%s7 + $0x1f8] sm:$0xff]
      %v4310 = vld [vmem:[%s7 + $0x200] sm:$0xff]
      %v4311 = vld [vmem:[%s7 + $0x208] sm:$0xff]
      %v4312 = vld [vmem:[%s7 + $0x210] sm:$0xff]
      %v4313 = vld [vmem:[%s7 + $0x218] sm:$0xff]
      %v4314 = vld [vmem:[%s7 + $0x220] sm:$0xff]
      %v4315 = vld [vmem:[%s7 + $0x228] sm:$0xff]
      %v4316 = vld [vmem:[%s7 + $0x230] sm:$0xff]
      %v4317 = vld [vmem:[%s7 + $0x238] sm:$0xff]
      %v4318 = vld [vmem:[%s7 + $0x240] sm:$0xff]
      %v4319 = vld [vmem:[%s7 + $0x248] sm:$0xff]
      %v4320 = vld [vmem:[%s7 + $0x250] sm:$0xff]
      %v4321 = vld [vmem:[%s7 + $0x258] sm:$0xff]
      %v4322 = vld [vmem:[%s7 + $0x260] sm:$0xff]
      %v4323 = vld [vmem:[%s7 + $0x268] sm:$0xff]
      %v4324 = vld [vmem:[%s7 + $0x270] sm:$0xff]
      %v4325 = vld [vmem:[%s7 + $0x278] sm:$0xff]
      %4326 = vmatprep.subr.mxu0 %v4247
      %4327 = vmatpush1.msra.mxu0 %v4246
      %4328 = vmatprep.subr.mxu0 %v4252
      %4329 = vmatpush1.msra.mxu0 %v4251
      %4330 = vmatprep.subr.mxu0 %v4257
      %4331 = vmatpush1.msra.mxu0 %v4256
      %4332 = vmatprep.subr.mxu0 %v4262
      %4333 = vmatpush1.msra.mxu0 %v4261
      %4334 = vmatprep.subr.mxu0 %v4267
      %4335 = vmatpush1.msra.mxu0 %v4266
      %4336 = vmatprep.subr.mxu0 %v4272
      %4337 = vmatpush1.msra.mxu0 %v4271
      %4338 = vmatprep.subr.mxu0 %v4277
      %4339 = vmatpush1.msra.mxu0 %v4276
      %4340 = vmatprep.subr.mxu0 %v4282
      %4341 = vmatpush1.msra.mxu0 %v4281
      %4342 = vmatprep.subr.mxu0 %v4287
      %4343 = vmatpush1.msra.mxu0 %v4286
      %4344 = vmatprep.subr.mxu0 %v4292
      %4345 = vmatpush1.msra.mxu0 %v4291
      %4346 = vmatprep.subr.mxu0 %v4297
      %4347 = vmatpush1.msra.mxu0 %v4296
      %4348 = vmatprep.subr.mxu0 %v4302
      %4349 = vmatpush1.msra.mxu0 %v4301
      %4350 = vmatprep.subr.mxu0 %v4307
      %4351 = vmatpush1.msra.mxu0 %v4306
      %4352 = vmatprep.subr.mxu0 %v4312
      %4353 = vmatpush1.msra.mxu0 %v4311
      %4354 = vmatprep.subr.mxu0 %v4317
      %4355 = vmatpush1.msra.mxu0 %v4316
      %4356 = vmatprep.subr.mxu0 %v4322
      %4357 = vmatpush1.msra.mxu0 %v4321
      %4358 = vmatprep.subr.mxu0 0.0
      %4359 = vmatpush1.msra.mxu0 0.0
      %4360 = vmatprep.subr.mxu0 0.0
      %4361 = vmatpush1.msra.mxu0 0.0
      %4362 = vmatprep.subr.mxu0 0.0
      %4363 = vmatpush1.msra.mxu0 0.0
      %4364 = vmatprep.subr.mxu0 0.0
      %4365 = vmatpush1.msra.mxu0 0.0
      %4366 = vmatprep.subr.mxu0 0.0
      %4367 = vmatpush1.msra.mxu0 0.0
      %4368 = vmatprep.subr.mxu0 0.0
      %4369 = vmatpush1.msra.mxu0 0.0
      %4370 = vmatprep.subr.mxu0 0.0
      %4371 = vmatpush1.msra.mxu0 0.0
      %4372 = vmatprep.subr.mxu0 0.0
      %4373 = vmatpush1.msra.mxu0 0.0
      %4374 = vmatprep.subr.mxu0 0.0
      %4375 = vmatpush1.msra.mxu0 0.0
      %4376 = vmatprep.subr.mxu0 0.0
      %4377 = vmatpush1.msra.mxu0 0.0
      %4378 = vmatprep.subr.mxu0 0.0
      %4379 = vmatpush1.msra.mxu0 0.0
      %4380 = vmatprep.subr.mxu0 0.0
      %4381 = vmatpush1.msra.mxu0 0.0
      %4382 = vmatprep.subr.mxu0 0.0
      %4383 = vmatpush1.msra.mxu0 0.0
      %4384 = vmatprep.subr.mxu0 0.0
      %4385 = vmatpush1.msra.mxu0 0.0
      %4386 = vmatprep.subr.mxu0 0.0
      %4387 = vmatpush1.msra.mxu0 0.0
      %4388 = vmatprep.subr.mxu0 0.0
      %4389 = vmatpush1.msra.mxu0 0.0
      %4390 = vmatprep.mubr.f32.mxu0 0.0
      %4391 = vmatmul.mubr.f32.gmra.mrb[0].mxu0 %v4245
      %v4392 = vpop.f32.mrb[0].mxu0
      %v4393 = vadd.f32 0.0, %v4392
      %v4394 = vpop.f32.mrb[0].mxu0
      %v4395 = vadd.f32 0.0, %v4394
      %4396 = vdwg.mxu0
      %4397 = vmatprep.subr.mxu0 %v4249
      %4398 = vmatpush1.msra.mxu0 %v4248
      %4399 = vmatprep.subr.mxu0 %v4254
      %4400 = vmatpush1.msra.mxu0 %v4253
      %4401 = vmatprep.subr.mxu0 %v4259
      %4402 = vmatpush1.msra.mxu0 %v4258
      %4403 = vmatprep.subr.mxu0 %v4264
      %4404 = vmatpush1.msra.mxu0 %v4263
      %4405 = vmatprep.subr.mxu0 %v4269
      %4406 = vmatpush1.msra.mxu0 %v4268
      %4407 = vmatprep.subr.mxu0 %v4274
      %4408 = vmatpush1.msra.mxu0 %v4273
      %4409 = vmatprep.subr.mxu0 %v4279
      %4410 = vmatpush1.msra.mxu0 %v4278
      %4411 = vmatprep.subr.mxu0 %v4284
      %4412 = vmatpush1.msra.mxu0 %v4283
      %4413 = vmatprep.subr.mxu0 %v4289
      %4414 = vmatpush1.msra.mxu0 %v4288
      %4415 = vmatprep.subr.mxu0 %v4294
      %4416 = vmatpush1.msra.mxu0 %v4293
      %4417 = vmatprep.subr.mxu0 %v4299
      %4418 = vmatpush1.msra.mxu0 %v4298
      %4419 = vmatprep.subr.mxu0 %v4304
      %4420 = vmatpush1.msra.mxu0 %v4303
      %4421 = vmatprep.subr.mxu0 %v4309
      %4422 = vmatpush1.msra.mxu0 %v4308
      %4423 = vmatprep.subr.mxu0 %v4314
      %4424 = vmatpush1.msra.mxu0 %v4313
      %4425 = vmatprep.subr.mxu0 %v4319
      %4426 = vmatpush1.msra.mxu0 %v4318
      %4427 = vmatprep.subr.mxu0 %v4324
      %4428 = vmatpush1.msra.mxu0 %v4323
      %4429 = vmatprep.subr.mxu0 0.0
      %4430 = vmatpush1.msra.mxu0 0.0
      %4431 = vmatprep.subr.mxu0 0.0
      %4432 = vmatpush1.msra.mxu0 0.0
      %4433 = vmatprep.subr.mxu0 0.0
      %4434 = vmatpush1.msra.mxu0 0.0
      %4435 = vmatprep.subr.mxu0 0.0
      %4436 = vmatpush1.msra.mxu0 0.0
      %4437 = vmatprep.subr.mxu0 0.0
      %4438 = vmatpush1.msra.mxu0 0.0
      %4439 = vmatprep.subr.mxu0 0.0
      %4440 = vmatpush1.msra.mxu0 0.0
      %4441 = vmatprep.subr.mxu0 0.0
      %4442 = vmatpush1.msra.mxu0 0.0
      %4443 = vmatprep.subr.mxu0 0.0
      %4444 = vmatpush1.msra.mxu0 0.0
      %4445 = vmatprep.subr.mxu0 0.0
      %4446 = vmatpush1.msra.mxu0 0.0
      %4447 = vmatprep.subr.mxu0 0.0
      %4448 = vmatpush1.msra.mxu0 0.0
      %4449 = vmatprep.subr.mxu0 0.0
      %4450 = vmatpush1.msra.mxu0 0.0
      %4451 = vmatprep.subr.mxu0 0.0
      %4452 = vmatpush1.msra.mxu0 0.0
      %4453 = vmatprep.subr.mxu0 0.0
      %4454 = vmatpush1.msra.mxu0 0.0
      %4455 = vmatprep.subr.mxu0 0.0
      %4456 = vmatpush1.msra.mxu0 0.0
      %4457 = vmatprep.subr.mxu0 0.0
      %4458 = vmatpush1.msra.mxu0 0.0
      %4459 = vmatprep.subr.mxu0 0.0
      %4460 = vmatpush1.msra.mxu0 0.0
      %4461 = vmatprep.mubr.f32.mxu0 0.0
      %4462 = vmatmul.mubr.f32.gmra.mrb[0].mxu0 %v4245
      %v4463 = vpop.f32.mrb[0].mxu0
      %v4464 = vadd.f32 0.0, %v4463
      %v4465 = vpop.f32.mrb[0].mxu0
      %v4466 = vadd.f32 0.0, %v4465
      %4467 = vdwg.mxu0
      %4468 = vmatprep.subr.mxu0 0.0
      %4469 = vmatpush1.msra.mxu0 %v4250
      %4470 = vmatprep.subr.mxu0 0.0
      %4471 = vmatpush1.msra.mxu0 %v4255
      %4472 = vmatprep.subr.mxu0 0.0
      %4473 = vmatpush1.msra.mxu0 %v4260
      %4474 = vmatprep.subr.mxu0 0.0
      %4475 = vmatpush1.msra.mxu0 %v4265
      %4476 = vmatprep.subr.mxu0 0.0
      %4477 = vmatpush1.msra.mxu0 %v4270
      %4478 = vmatprep.subr.mxu0 0.0
      %4479 = vmatpush1.msra.mxu0 %v4275
      %4480 = vmatprep.subr.mxu0 0.0
      %4481 = vmatpush1.msra.mxu0 %v4280
      %4482 = vmatprep.subr.mxu0 0.0
      %4483 = vmatpush1.msra.mxu0 %v4285
      %4484 = vmatprep.subr.mxu0 0.0
      %4485 = vmatpush1.msra.mxu0 %v4290
      %4486 = vmatprep.subr.mxu0 0.0
      %4487 = vmatpush1.msra.mxu0 %v4295
      %4488 = vmatprep.subr.mxu0 0.0
      %4489 = vmatpush1.msra.mxu0 %v4300
      %4490 = vmatprep.subr.mxu0 0.0
      %4491 = vmatpush1.msra.mxu0 %v4305
      %4492 = vmatprep.subr.mxu0 0.0
      %4493 = vmatpush1.msra.mxu0 %v4310
      %4494 = vmatprep.subr.mxu0 0.0
      %4495 = vmatpush1.msra.mxu0 %v4315
      %4496 = vmatprep.subr.mxu0 0.0
      %4497 = vmatpush1.msra.mxu0 %v4320
      %4498 = vmatprep.subr.mxu0 0.0
      %4499 = vmatpush1.msra.mxu0 %v4325
      %4500 = vmatprep.subr.mxu0 0.0
      %4501 = vmatpush1.msra.mxu0 0.0
      %4502 = vmatprep.subr.mxu0 0.0
      %4503 = vmatpush1.msra.mxu0 0.0
      %4504 = vmatprep.subr.mxu0 0.0
      %4505 = vmatpush1.msra.mxu0 0.0
      %4506 = vmatprep.subr.mxu0 0.0
      %4507 = vmatpush1.msra.mxu0 0.0
      %4508 = vmatprep.subr.mxu0 0.0
      %4509 = vmatpush1.msra.mxu0 0.0
      %4510 = vmatprep.subr.mxu0 0.0
      %4511 = vmatpush1.msra.mxu0 0.0
      %4512 = vmatprep.subr.mxu0 0.0
      %4513 = vmatpush1.msra.mxu0 0.0
      %4514 = vmatprep.subr.mxu0 0.0
      %4515 = vmatpush1.msra.mxu0 0.0
      %4516 = vmatprep.subr.mxu0 0.0
      %4517 = vmatpush1.msra.mxu0 0.0
      %4518 = vmatprep.subr.mxu0 0.0
      %4519 = vmatpush1.msra.mxu0 0.0
      %4520 = vmatprep.subr.mxu0 0.0
      %4521 = vmatpush1.msra.mxu0 0.0
      %4522 = vmatprep.subr.mxu0 0.0
      %4523 = vmatpush1.msra.mxu0 0.0
      %4524 = vmatprep.subr.mxu0 0.0
      %4525 = vmatpush1.msra.mxu0 0.0
      %4526 = vmatprep.subr.mxu0 0.0
      %4527 = vmatpush1.msra.mxu0 0.0
      %4528 = vmatprep.subr.mxu0 0.0
      %4529 = vmatpush1.msra.mxu0 0.0
      %4530 = vmatprep.subr.mxu0 0.0
      %4531 = vmatpush1.msra.mxu0 0.0
      %4532 = vmatprep.mubr.f32.mxu0 0.0
      %4533 = vmatmul.mubr.f32.gmra.mrb[0].mxu0 %v4245
      %v4534 = vpop.f32.mrb[0].mxu0
      %v4535 = vadd.f32 0.0, %v4534
      %v4536 = vpop.f32.mrb[0].mxu0
      %4537 = vdwg.mxu0
      %v4538 = vld [vmem:[%s8] sm:$0x1]
      %v4539 = vadd.f32 %v4538, %v4393
      %v4542 = vunpack.c.l.s4 1966171168
      %v4543 = vunpack.c.0.s8 %v4542
      %v4544 = vlaneseq
      %v4545 = vshrl.u32 %v4544, 7
      %v4546 = vsub.s32 %v4543, %v4545
      %v4547 = vrot.slane %v4395, %v4546
      %v4548 = vcombine.high %v4547, %v4547
      %v4550 = vunpack.c.l.s4 1966171168
      %v4551 = vunpack.c.0.s8 %v4550
      %v4552 = vlaneseq
      %v4553 = vshrl.u32 %v4552, 7
      %v4554 = vsub.s32 %v4551, %v4553
      %v4555 = vrot.slane %v4548, %v4554
      %v4557 = vadd.f32 %v4539, %v4555
      %v4560 = vunpack.c.l.s4 1966171168
      %v4561 = vunpack.c.0.s8 %v4560
      %v4562 = vlaneseq
      %v4563 = vshrl.u32 %v4562, 7
      %v4564 = vsub.s32 %v4561, %v4563
      %v4565 = vrot.slane %v4464, %v4564
      %v4567 = vunpack.c.l.s4 1966171168
      %v4568 = vunpack.c.0.s8 %v4567
      %v4569 = vlaneseq
      %v4570 = vshrl.u32 %v4569, 7
      %v4571 = vsub.s32 %v4568, %v4570
      %v4572 = vrot.slane %v4565, %v4571
      %v4573 = vcombine.high %v4572, %v4572
      %v4575 = vadd.f32 %v4557, %v4573
      %v4578 = vunpack.c.l.s4 1966171168
      %v4579 = vunpack.c.0.s8 %v4578
      %v4580 = vlaneseq
      %v4581 = vshrl.u32 %v4580, 7
      %v4582 = vsub.s32 %v4579, %v4581
      %v4583 = vrot.slane %v4466, %v4582
      %v4584 = vcombine.high %v4583, %v4583
      %v4586 = vunpack.c.l.s4 1966171168
      %v4587 = vunpack.c.0.s8 %v4586
      %v4588 = vlaneseq
      %v4589 = vshrl.u32 %v4588, 7
      %v4590 = vsub.s32 %v4587, %v4589
      %v4591 = vrot.slane %v4584, %v4590
      %v4592 = vcombine.high %v4591, %v4591
      %v4594 = vadd.f32 %v4575, %v4592
      %v4596 = vcombine.high %v4535, %v4535
      %v4598 = vunpack.c.l.s4 1966171168
      %v4599 = vunpack.c.0.s8 %v4598
      %v4600 = vlaneseq
      %v4601 = vshrl.u32 %v4600, 7
      %v4602 = vsub.s32 %v4599, %v4601
      %v4603 = vrot.slane %v4596, %v4602
      %v4605 = vunpack.c.l.s4 1966171168
      %v4606 = vunpack.c.0.s8 %v4605
      %v4607 = vlaneseq
      %v4608 = vshrl.u32 %v4607, 7
      %v4609 = vsub.s32 %v4606, %v4608
      %v4610 = vrot.slane %v4603, %v4609
      %v4612 = vadd.f32 %v4594, %v4610
      %v4613 = vmax.f32 %v4612, 0.0
      %v4614 = vld [vmem:[%s9] sm:$0xff]
      %v4615 = vld [vmem:[%s9 + $0x8] sm:$0xff]
      %v4616 = vld [vmem:[%s9 + $0x10] sm:$0xff]
      %v4617 = vld [vmem:[%s9 + $0x18] sm:$0xff]
      %v4618 = vld [vmem:[%s9 + $0x20] sm:$0xff]
      %v4619 = vld [vmem:[%s9 + $0x28] sm:$0xff]
      %v4620 = vld [vmem:[%s9 + $0x30] sm:$0xff]
      %v4621 = vld [vmem:[%s9 + $0x38] sm:$0xff]
      %v4622 = vld [vmem:[%s9 + $0x40] sm:$0xff]
      %v4623 = vld [vmem:[%s9 + $0x48] sm:$0xff]
      %v4624 = vld [vmem:[%s9 + $0x50] sm:$0xff]
      %v4625 = vld [vmem:[%s9 + $0x58] sm:$0xff]
      %v4626 = vld [vmem:[%s9 + $0x60] sm:$0xff]
      %v4627 = vld [vmem:[%s9 + $0x68] sm:$0xff]
      %v4628 = vld [vmem:[%s9 + $0x70] sm:$0xff]
      %v4629 = vld [vmem:[%s9 + $0x78] sm:$0xff]
      %v4630 = vld [vmem:[%s10] sm:$0x1]
      %4631 = vmatprep.subr.mxu0 0.0
      %4632 = vmatpush1.msra.mxu0 %v4614
      %4633 = vmatprep.subr.mxu0 0.0
      %4634 = vmatpush1.msra.mxu0 %v4615
      %4635 = vmatprep.subr.mxu0 0.0
      %4636 = vmatpush1.msra.mxu0 %v4616
      %4637 = vmatprep.subr.mxu0 0.0
      %4638 = vmatpush1.msra.mxu0 %v4617
      %4639 = vmatprep.subr.mxu0 0.0
      %4640 = vmatpush1.msra.mxu0 %v4618
      %4641 = vmatprep.subr.mxu0 0.0
      %4642 = vmatpush1.msra.mxu0 %v4619
      %4643 = vmatprep.subr.mxu0 0.0
      %4644 = vmatpush1.msra.mxu0 %v4620
      %4645 = vmatprep.subr.mxu0 0.0
      %4646 = vmatpush1.msra.mxu0 %v4621
      %4647 = vmatprep.subr.mxu0 0.0
      %4648 = vmatpush1.msra.mxu0 %v4622
      %4649 = vmatprep.subr.mxu0 0.0
      %4650 = vmatpush1.msra.mxu0 %v4623
      %4651 = vmatprep.subr.mxu0 0.0
      %4652 = vmatpush1.msra.mxu0 %v4624
      %4653 = vmatprep.subr.mxu0 0.0
      %4654 = vmatpush1.msra.mxu0 %v4625
      %4655 = vmatprep.subr.mxu0 0.0
      %4656 = vmatpush1.msra.mxu0 %v4626
      %4657 = vmatprep.subr.mxu0 0.0
      %4658 = vmatpush1.msra.mxu0 %v4627
      %4659 = vmatprep.subr.mxu0 0.0
      %4660 = vmatpush1.msra.mxu0 %v4628
      %4661 = vmatprep.subr.mxu0 0.0
      %4662 = vmatpush1.msra.mxu0 %v4629
      %4663 = vmatprep.subr.mxu0 0.0
      %4664 = vmatpush1.msra.mxu0 0.0
      %4665 = vmatprep.subr.mxu0 0.0
      %4666 = vmatpush1.msra.mxu0 0.0
      %4667 = vmatprep.subr.mxu0 0.0
      %4668 = vmatpush1.msra.mxu0 0.0
      %4669 = vmatprep.subr.mxu0 0.0
      %4670 = vmatpush1.msra.mxu0 0.0
      %4671 = vmatprep.subr.mxu0 0.0
      %4672 = vmatpush1.msra.mxu0 0.0
      %4673 = vmatprep.subr.mxu0 0.0
      %4674 = vmatpush1.msra.mxu0 0.0
      %4675 = vmatprep.subr.mxu0 0.0
      %4676 = vmatpush1.msra.mxu0 0.0
      %4677 = vmatprep.subr.mxu0 0.0
      %4678 = vmatpush1.msra.mxu0 0.0
      %4679 = vmatprep.subr.mxu0 0.0
      %4680 = vmatpush1.msra.mxu0 0.0
      %4681 = vmatprep.subr.mxu0 0.0
      %4682 = vmatpush1.msra.mxu0 0.0
      %4683 = vmatprep.subr.mxu0 0.0
      %4684 = vmatpush1.msra.mxu0 0.0
      %4685 = vmatprep.subr.mxu0 0.0
      %4686 = vmatpush1.msra.mxu0 0.0
      %4687 = vmatprep.subr.mxu0 0.0
      %4688 = vmatpush1.msra.mxu0 0.0
      %4689 = vmatprep.subr.mxu0 0.0
      %4690 = vmatpush1.msra.mxu0 0.0
      %4691 = vmatprep.subr.mxu0 0.0
      %4692 = vmatpush1.msra.mxu0 0.0
      %4693 = vmatprep.subr.mxu0 0.0
      %4694 = vmatpush1.msra.mxu0 0.0
      %4695 = vmatprep.mubr.f32.mxu0 0.0
      %4696 = vmatmul.mubr.f32.gmra.mrb[0].mxu0 %v4613
      %v4697 = vpop.f32.mrb[0].mxu0
      %v4698 = vadd.f32 %v4630, %v4697
      %v4699 = vpop.f32.mrb[0].mxu0
      %4700 = vdwg.mxu0
      %vm4701 = vcmask 155648
      %4702 = vst.msk [vmem:[%s382] sm:$0x1] %vm4701, %v4698
      %p4703 = scmp.lt.s32.totalorder %s22, 1
      %s4704 = scalar_select %p4703, %s22, 1
      %s4705 = scalar_lea.vmem %s11, %s4704
      // Predicated region
      $region65: #{lane_classifier_forward.1} parent=63 // pred_check
        %p4706 = pneg %p276
      $region66: #{lane_classifier_forward.1} parent=63 // pred_check_branch
        %4708 = sbr.rel (%p4706) target = $region68
      $region67: #{lane_classifier_forward.1} parent=63 // pred_region
        _
      $region68: #{lane_classifier_forward.1} parent=63 // pred_fallthru
        _
    $region64: #{lane_classifier_forward.1} parent=5 // pred_fallthru
      _
    %p4709 = scmp.le.s32.totalorder 2, %s17
    // Predicated region
    $region69: #{lane_classifier_forward.1} parent=5 // pred_check
      %p4710 = pneg %p4709
    $region70: #{lane_classifier_forward.1} parent=5 // pred_check_branch
      %4712 = sbr.rel (%p4710) target = $region72
    $region71: #{lane_classifier_forward.1} parent=5 // pred_region
      %s4713 = ssub.s32 %s17, 2
      // Predicated region
      $region73: #{lane_classifier_forward.1} parent=71 // pred_check
        %p4714 = pneg %p282
      $region74: #{lane_classifier_forward.1} parent=71 // pred_check_branch
        %4716 = sbr.rel (%p4714) target = $region76
      $region75: #{lane_classifier_forward.1} parent=71 // pred_region
        %p4717 = scmp.lt.s32.totalorder %s23, 1
        %s4718 = scalar_select %p4717, %s23, 1
        %s4719 = scalar_lea.vmem %s11, %s4718
      $region76: #{lane_classifier_forward.1} parent=71 // pred_fallthru
        _
    $region72: #{lane_classifier_forward.1} parent=5 // pred_fallthru
      _
  $region6: #{lane_classifier_forward.1} parent=0 // loop_footer
    %s21 = sadd.s32 1, %s17
  $region7: #{lane_classifier_forward.1} parent=0 // loop_footer_branch
    %16 = sbr.rel target = $region3
  $region8: #{lane_classifier_forward.1} parent=0 // loop_exit
    _

</llo_original>
